<compile_context>
chip_gen: v6e
topology: v6e:2x2x1
jax: 0.10.0
libtpu: 0.0.40
codegen_flags: <defaults>
</compile_context>

<pallas_src>
import numpy as np

import jax
import jax.numpy as jnp
from jax.experimental import pallas as pl
from jax.experimental.pallas import tpu as pltpu


def _round_up(x, m):
    return ((x + m - 1) // m) * m


def _pick_batch_tile(b_pad, cap):
    """Largest 128-multiple divisor of b_pad that is <= cap, and that leaves
    at least 2 tiles whenever b_pad >= 256 (so v7x's second TC gets work)."""
    m = b_pad // 128
    best = 128
    for d in range(1, m + 1):
        if m % d:
            continue
        tb = 128 * d
        if tb > cap:
            break
        if m >= 2 and d > m // 2:
            continue  # would give a single tile; keep >= 2 for megacore sharding
        best = tb
    return best


def _discriminator_kernel(x_ref,
                          w1_ref, b1_ref,
                          w2_ref, b2_ref,
                          w3_ref, b3_ref,
                          w4t_ref, b4_ref,
                          o_ref):
    """One batch tile of the fused 4-layer MLP + sigmoid.

    x_ref  : (TB, D)  f32   -- pipelined over the batch grid; cast to bf16 here
    wN_ref : bf16 weights, (in, out) layout, VMEM-resident across all tiles
    bN_ref : f32 biases, (1, out)
    w4t_ref: (1, 128) f32   -- final layer done as a VPU lane reduction
    o_ref  : (TB, 1)  f32
    """
    # In-kernel bf16 cast: avoids a second HBM copy of x in the wrapper.
    x = x_ref[...].astype(jnp.bfloat16)

    # Linear 1 + ReLU : (TB, D) @ (D, 512), f32 accumulation on the MXU.
    h = jnp.dot(x, w1_ref[...], preferred_element_type=jnp.float32) + b1_ref[...]
    h = jnp.maximum(h, 0.0).astype(jnp.bfloat16)

    # Linear 2 + ReLU : (TB, 512) @ (512, 256)
    h = jnp.dot(h, w2_ref[...], preferred_element_type=jnp.float32) + b2_ref[...]
    h = jnp.maximum(h, 0.0).astype(jnp.bfloat16)

    # Linear 3 + ReLU : (TB, 256) @ (256, 128)
    h = jnp.dot(h, w3_ref[...], preferred_element_type=jnp.float32) + b3_ref[...]
    h = jnp.maximum(h, 0.0)  # keep f32 for the final reduction

    # Linear 4 + Sigmoid, as a lane reduction instead of an N=1 MXU matmul.
    logits = jnp.sum(h * w4t_ref[...], axis=-1, keepdims=True) + b4_ref[...]
    o_ref[...] = jax.nn.sigmoid(logits)


def discriminator_forward(img, params, *, tile_b=1024):
    """img: (B, C, H, W) float32. Returns (B, 1) probabilities."""
    B = img.shape[0]
    D = int(np.prod(img.shape[1:]))
    x = img.reshape(B, D).astype(jnp.float32)  # same as torch .view(B, -1)

    (w1, b1), (w2, b2), (w3, b3), (w4, b4) = params

    # Pad only to the next multiple of 128 (not of the batch tile); skip the
    # copy entirely when B is already aligned.
    b_pad = _round_up(max(B, 1), 128)
    if b_pad != B:
        x = jnp.pad(x, ((0, b_pad - B), (0, 0)))

    cap = max(128, _round_up(int(tile_b), 128))
    tb = _pick_batch_tile(b_pad, cap)
    n_tiles = b_pad // tb

    # bf16 matmul operands for the (small, one-off) weights; biases and the
    # final-layer row vector stay f32. Activations stay f32 until in-kernel.
    w1_bf = w1.astype(jnp.bfloat16)
    w2_bf = w2.astype(jnp.bfloat16)
    w3_bf = w3.astype(jnp.bfloat16)
    w4t = w4.reshape(1, -1).astype(jnp.float32)  # (1, 128)

    resident = lambda i: (0, 0)  # weights/biases: same block every grid step

    flops = 2 * b_pad * (D * 512 + 512 * 256 + 256 * 128 + 128)
    bytes_accessed = (
        b_pad * D * 4                                     # f32 x read once
        + (w1_bf.size + w2_bf.size + w3_bf.size) * 2      # resident bf16 weights
        + w4t.size * 4
        + (b1.size + b2.size + b3.size + b4.size) * 4
        + b_pad * 4                                       # f32 output
    )

    # VMEM budget for the chosen tile: double-buffered f32 x tile, resident
    # (double-counted for safety) weights/biases, padded output column, plus
    # headroom for live f32/bf16 intermediates. Clamped to fit every chip
    # generation (v5e default 16 MiB scoped, v7x 64 MiB physical).
    weights_bytes = (w1_bf.size + w2_bf.size + w3_bf.size) * 2 + (
        w4t.size + b1.size + b2.size + b3.size + b4.size) * 4
    vmem_est = (
        2 * tb * D * 4           # x tile, double-buffered
        + 2 * tb * 128 * 4       # (tb,1) output, lane-padded, double-buffered
        + 2 * weights_bytes      # resident operands (conservatively x2)
        + tb * 8 * 1024          # live intermediates headroom
    )
    vmem_limit = int(min(max(vmem_est, 32 << 20), 48 << 20))

    out = pl.pallas_call(
        _discriminator_kernel,
        out_shape=jax.ShapeDtypeStruct((b_pad, 1), jnp.float32),
        grid_spec=pltpu.PrefetchScalarGridSpec(
            num_scalar_prefetch=0,
            grid=(n_tiles,),
            in_specs=[
                pl.BlockSpec((tb, D), lambda i: (i, 0)),      # x tile (pipelined)
                pl.BlockSpec(w1_bf.shape, resident),
                pl.BlockSpec(b1.shape, resident),
                pl.BlockSpec(w2_bf.shape, resident),
                pl.BlockSpec(b2.shape, resident),
                pl.BlockSpec(w3_bf.shape, resident),
                pl.BlockSpec(b3.shape, resident),
                pl.BlockSpec(w4t.shape, resident),
                pl.BlockSpec(b4.shape, resident),
            ],
            out_specs=pl.BlockSpec((tb, 1), lambda i: (i, 0)),
        ),
        compiler_params=pltpu.CompilerParams(
            dimension_semantics=("parallel",),  # v7x: batch tiles across both TCs
            vmem_limit_bytes=vmem_limit,
        ),
        cost_estimate=pl.CostEstimate(
            flops=int(flops),
            transcendentals=int(b_pad),
            bytes_accessed=int(bytes_accessed),
        ),
    )(x, w1_bf, b1, w2_bf, b2, w3_bf, b3, w4t, b4)

    return out[:B]


def init_linear(key, in_features, out_features):
    """PyTorch nn.Linear default init (uniform +-1/sqrt(in)); weight stored as
    (in, out) so the kernel computes x @ W + b (== x @ W_torch.T + b)."""
    kw, kb = jax.random.split(key)
    bound = 1.0 / jnp.sqrt(jnp.float32(in_features))
    w = jax.random.uniform(kw, (in_features, out_features), jnp.float32,
                           minval=-bound, maxval=bound)
    b = jax.random.uniform(kb, (1, out_features), jnp.float32,
                           minval=-bound, maxval=bound)
    return w, b


def make_discriminator_params(key, img_shape):
    in_dim = int(np.prod(img_shape))
    dims = [in_dim, 512, 256, 128, 1]
    keys = jax.random.split(key, 4)
    return [init_linear(k, dims[i], dims[i + 1]) for i, k in enumerate(keys)]


def reference_forward(img, params):
    """Pure-JAX f32 reference for correctness checking."""
    x = img.reshape(img.shape[0], -1).astype(jnp.float32)
    (w1, b1), (w2, b2), (w3, b3), (w4, b4) = params
    h = jnp.maximum(x @ w1 + b1, 0.0)
    h = jnp.maximum(h @ w2 + b2, 0.0)
    h = jnp.maximum(h @ w3 + b3, 0.0)
    return jax.nn.sigmoid(h @ w4 + b4)


if __name__ == "__main__":
    key = jax.random.PRNGKey(0)
    k_param, k_img = jax.random.split(key)

    # Small shapes consistent with the module: img_shape = (C, H, W) = (4, 16, 16)
    img_shape = (4, 16, 16)
    batch = 2

    params = make_discriminator_params(k_param, img_shape)
    img = jax.random.normal(k_img, (batch,) + img_shape, dtype=jnp.float32)

    out = discriminator_forward(img, params)
    out = jax.block_until_ready(out)

    ref = reference_forward(img, params)
    assert out.shape == (batch, 1), out.shape
    # bf16 matmul operands (f32 accumulation) => loosened tolerance vs f32 ref.
    assert jnp.allclose(out, ref, atol=2e-2, rtol=2e-2), (out, ref)

    print("KERNEL_OK")
</pallas_src>

<mosaic_0001>
module attributes {stable_mosaic.version = 11 : i64} {
  func.func @_discriminator_kernel(%arg0: i32, %arg1: memref<128x1024xf32, #tpu.memory_space<vmem>>, %arg2: memref<1024x512xbf16, #tpu.memory_space<vmem>>, %arg3: memref<1x512xf32, #tpu.memory_space<vmem>>, %arg4: memref<512x256xbf16, #tpu.memory_space<vmem>>, %arg5: memref<1x256xf32, #tpu.memory_space<vmem>>, %arg6: memref<256x128xbf16, #tpu.memory_space<vmem>>, %arg7: memref<1x128xf32, #tpu.memory_space<vmem>>, %arg8: memref<1x128xf32, #tpu.memory_space<vmem>>, %arg9: memref<1x1xf32, #tpu.memory_space<vmem>>, %arg10: memref<128x1xf32, #tpu.memory_space<vmem>>) attributes {dimension_semantics = [#tpu.dimension_semantics<parallel>], iteration_bounds = array<i64: 1>, scalar_prefetch = 0 : i64, scratch_operands = 0 : i64, tpu.core_type = #tpu.core_type<tc>, window_params = [{transform_indices = @transform_0, window_bounds = array<i64: 128, 1024>}, {pipeline_mode = #tpu.pipeline_mode<synchronous>, transform_indices = @transform_1, window_bounds = array<i64: 1024, 512>}, {pipeline_mode = #tpu.pipeline_mode<synchronous>, transform_indices = @transform_2, window_bounds = array<i64: 1, 512>}, {pipeline_mode = #tpu.pipeline_mode<synchronous>, transform_indices = @transform_3, window_bounds = array<i64: 512, 256>}, {pipeline_mode = #tpu.pipeline_mode<synchronous>, transform_indices = @transform_4, window_bounds = array<i64: 1, 256>}, {pipeline_mode = #tpu.pipeline_mode<synchronous>, transform_indices = @transform_5, window_bounds = array<i64: 256, 128>}, {pipeline_mode = #tpu.pipeline_mode<synchronous>, transform_indices = @transform_6, window_bounds = array<i64: 1, 128>}, {pipeline_mode = #tpu.pipeline_mode<synchronous>, transform_indices = @transform_7, window_bounds = array<i64: 1, 128>}, {pipeline_mode = #tpu.pipeline_mode<synchronous>, transform_indices = @transform_8, window_bounds = array<i64: 1, 1>}, {transform_indices = @transform_9, window_bounds = array<i64: 128, 1>}]} {
    %c0 = arith.constant 0 : index
    %c0_0 = arith.constant 0 : index
    %0 = vector.load %arg1[%c0, %c0_0] : memref<128x1024xf32, #tpu.memory_space<vmem>>, vector<128x1024xf32>
    %1 = arith.truncf %0 : vector<128x1024xf32> to vector<128x1024xbf16>
    %c0_1 = arith.constant 0 : index
    %c0_2 = arith.constant 0 : index
    %2 = vector.load %arg2[%c0_1, %c0_2] : memref<1024x512xbf16, #tpu.memory_space<vmem>>, vector<1024x512xbf16>
    %cst = arith.constant dense<0.000000e+00> : vector<128x512xf32>
    %3 = tpu.matmul %1, %2, %cst {dimension_numbers = #tpu.dot_dimension_numbers<[1], [0], [0], [1], [0, 0, 1, 1], [], []>} : vector<128x1024xbf16>, vector<1024x512xbf16>, vector<128x512xf32> -> vector<128x512xf32>
    %c0_3 = arith.constant 0 : index
    %c0_4 = arith.constant 0 : index
    %4 = vector.load %arg3[%c0_3, %c0_4] : memref<1x512xf32, #tpu.memory_space<vmem>>, vector<1x512xf32>
    %5 = vector.broadcast %4 : vector<1x512xf32> to vector<128x512xf32>
    %6 = arith.addf %3, %5 : vector<128x512xf32>
    %cst_5 = arith.constant 0.000000e+00 : f32
    %7 = vector.broadcast %cst_5 : f32 to vector<128x512xf32>
    %8 = arith.maximumf %6, %7 : vector<128x512xf32>
    %9 = arith.truncf %8 : vector<128x512xf32> to vector<128x512xbf16>
    %c0_6 = arith.constant 0 : index
    %c0_7 = arith.constant 0 : index
    %10 = vector.load %arg4[%c0_6, %c0_7] : memref<512x256xbf16, #tpu.memory_space<vmem>>, vector<512x256xbf16>
    %cst_8 = arith.constant dense<0.000000e+00> : vector<128x256xf32>
    %11 = tpu.matmul %9, %10, %cst_8 {dimension_numbers = #tpu.dot_dimension_numbers<[1], [0], [0], [1], [0, 0, 1, 1], [], []>} : vector<128x512xbf16>, vector<512x256xbf16>, vector<128x256xf32> -> vector<128x256xf32>
    %c0_9 = arith.constant 0 : index
    %c0_10 = arith.constant 0 : index
    %12 = vector.load %arg5[%c0_9, %c0_10] : memref<1x256xf32, #tpu.memory_space<vmem>>, vector<1x256xf32>
    %13 = vector.broadcast %12 : vector<1x256xf32> to vector<128x256xf32>
    %14 = arith.addf %11, %13 : vector<128x256xf32>
    %cst_11 = arith.constant 0.000000e+00 : f32
    %15 = vector.broadcast %cst_11 : f32 to vector<128x256xf32>
    %16 = arith.maximumf %14, %15 : vector<128x256xf32>
    %17 = arith.truncf %16 : vector<128x256xf32> to vector<128x256xbf16>
    %c0_12 = arith.constant 0 : index
    %c0_13 = arith.constant 0 : index
    %18 = vector.load %arg6[%c0_12, %c0_13] : memref<256x128xbf16, #tpu.memory_space<vmem>>, vector<256x128xbf16>
    %cst_14 = arith.constant dense<0.000000e+00> : vector<128x128xf32>
    %19 = tpu.matmul %17, %18, %cst_14 {dimension_numbers = #tpu.dot_dimension_numbers<[1], [0], [0], [1], [0, 0, 1, 1], [], []>} : vector<128x256xbf16>, vector<256x128xbf16>, vector<128x128xf32> -> vector<128x128xf32>
    %c0_15 = arith.constant 0 : index
    %c0_16 = arith.constant 0 : index
    %20 = vector.load %arg7[%c0_15, %c0_16] : memref<1x128xf32, #tpu.memory_space<vmem>>, vector<1x128xf32>
    %21 = vector.broadcast %20 : vector<1x128xf32> to vector<128x128xf32>
    %22 = arith.addf %19, %21 : vector<128x128xf32>
    %cst_17 = arith.constant 0.000000e+00 : f32
    %23 = vector.broadcast %cst_17 : f32 to vector<128x128xf32>
    %24 = arith.maximumf %22, %23 : vector<128x128xf32>
    %c0_18 = arith.constant 0 : index
    %c0_19 = arith.constant 0 : index
    %25 = vector.load %arg8[%c0_18, %c0_19] : memref<1x128xf32, #tpu.memory_space<vmem>>, vector<1x128xf32>
    %26 = vector.broadcast %25 : vector<1x128xf32> to vector<128x128xf32>
    %27 = arith.mulf %24, %26 : vector<128x128xf32>
    %cst_20 = arith.constant dense<0.000000e+00> : vector<128xf32>
    %28 = vector.multi_reduction <add>, %27, %cst_20 [1] : vector<128x128xf32> to vector<128xf32>
    %29 = vector.shape_cast %28 : vector<128xf32> to vector<128x1xf32>
    %c0_21 = arith.constant 0 : index
    %c0_22 = arith.constant 0 : index
    %30 = vector.load %arg9[%c0_21, %c0_22] : memref<1x1xf32, #tpu.memory_space<vmem>>, vector<1x1xf32>
    %31 = vector.broadcast %30 : vector<1x1xf32> to vector<128x1xf32>
    %32 = arith.addf %29, %31 : vector<128x1xf32>
    %33 = arith.negf %32 : vector<128x1xf32>
    %34 = math.exp %33 : vector<128x1xf32>
    %cst_23 = arith.constant 1.000000e+00 : f32
    %35 = vector.broadcast %cst_23 : f32 to vector<128x1xf32>
    %36 = arith.addf %35, %34 : vector<128x1xf32>
    %37 = arith.divf %35, %36 : vector<128x1xf32>
    %c0_24 = arith.constant 0 : index
    %c0_25 = arith.constant 0 : index
    %38 = vector.load %arg10[%c0_24, %c0_25] : memref<128x1xf32, #tpu.memory_space<vmem>>, vector<128x1xf32>
    tpu.vector_store %arg10[%c0_24, %c0_25], %37 {strides = array<i32>} : memref<128x1xf32, #tpu.memory_space<vmem>>, vector<128x1xf32>,
    return
  }
  func.func @transform_0(%arg0: i32) -> (i32, i32) {
    %c0_i32 = arith.constant 0 : i32
    %c0_i32_0 = arith.constant 0 : i32
    return %arg0, %c0_i32 : i32, i32
  }
  func.func @transform_1(%arg0: i32) -> (i32, i32) {
    %c0_i32 = arith.constant 0 : i32
    %c0_i32_0 = arith.constant 0 : i32
    %c0_i32_1 = arith.constant 0 : i32
    return %c0_i32, %c0_i32_0 : i32, i32
  }
  func.func @transform_2(%arg0: i32) -> (i32, i32) {
    %c0_i32 = arith.constant 0 : i32
    %c0_i32_0 = arith.constant 0 : i32
    %c0_i32_1 = arith.constant 0 : i32
    return %c0_i32, %c0_i32_0 : i32, i32
  }
  func.func @transform_3(%arg0: i32) -> (i32, i32) {
    %c0_i32 = arith.constant 0 : i32
    %c0_i32_0 = arith.constant 0 : i32
    %c0_i32_1 = arith.constant 0 : i32
    return %c0_i32, %c0_i32_0 : i32, i32
  }
  func.func @transform_4(%arg0: i32) -> (i32, i32) {
    %c0_i32 = arith.constant 0 : i32
    %c0_i32_0 = arith.constant 0 : i32
    %c0_i32_1 = arith.constant 0 : i32
    return %c0_i32, %c0_i32_0 : i32, i32
  }
  func.func @transform_5(%arg0: i32) -> (i32, i32) {
    %c0_i32 = arith.constant 0 : i32
    %c0_i32_0 = arith.constant 0 : i32
    %c0_i32_1 = arith.constant 0 : i32
    return %c0_i32, %c0_i32_0 : i32, i32
  }
  func.func @transform_6(%arg0: i32) -> (i32, i32) {
    %c0_i32 = arith.constant 0 : i32
    %c0_i32_0 = arith.constant 0 : i32
    %c0_i32_1 = arith.constant 0 : i32
    return %c0_i32, %c0_i32_0 : i32, i32
  }
  func.func @transform_7(%arg0: i32) -> (i32, i32) {
    %c0_i32 = arith.constant 0 : i32
    %c0_i32_0 = arith.constant 0 : i32
    %c0_i32_1 = arith.constant 0 : i32
    return %c0_i32, %c0_i32_0 : i32, i32
  }
  func.func @transform_8(%arg0: i32) -> (i32, i32) {
    %c0_i32 = arith.constant 0 : i32
    %c0_i32_0 = arith.constant 0 : i32
    %c0_i32_1 = arith.constant 0 : i32
    return %c0_i32, %c0_i32_0 : i32, i32
  }
  func.func @transform_9(%arg0: i32) -> (i32, i32) {
    %c0_i32 = arith.constant 0 : i32
    %c0_i32_0 = arith.constant 0 : i32
    return %arg0, %c0_i32 : i32, i32
  }
}

</mosaic_0001>

<llo_original>
// kernel: tpu_custom_call.1
$region0: #{tpu_custom_call.1}
  #allocation0 [shape = 'u32[]', space=smem, size = 0x4, offset = 0x4, fixed_abs, tag = 'smem constant byte address 0x4 - core index']
  #allocation1 [shape = 'u32[144,128]{1,0:T(1,128)}', space=vmem, size = 0x12000, scoped, tag = 'internal scratch']
  #allocation2 [shape = 'f32[1,1]{1,0:T(1,128)S(1)}', space=vmem, size = 0x200, scoped, tag = 'scoped memory for tpu_custom_call.1']
  %s0 = inlined_call_operand.hbm [shape: f32[128,1024], index: 0, kind: input, shape index: {}]
  %s1 = inlined_call_operand.hbm [shape: bf16[1024,512], index: 1, kind: input, shape index: {}]
  %s2 = inlined_call_operand.vmem [shape: f32[1,512], index: 2, kind: input, shape index: {}]
  %s3 = inlined_call_operand.hbm [shape: bf16[512,256], index: 3, kind: input, shape index: {}]
  %s4 = inlined_call_operand.vmem [shape: f32[1,256], index: 4, kind: input, shape index: {}]
  %s5 = inlined_call_operand.hbm [shape: bf16[256,128], index: 5, kind: input, shape index: {}]
  %s6 = inlined_call_operand.vmem [shape: f32[1,128], index: 6, kind: input, shape index: {}]
  %s7 = inlined_call_operand.vmem [shape: f32[1,128], index: 7, kind: input, shape index: {}]
  %s8 = inlined_call_operand.<no memory space> [shape: f32[1,1], index: 8, kind: input, shape index: {}]
  %s9 = inlined_call_operand.vmem [shape: f32[128,1], index: 9, kind: output, shape index: {}]
  %s10 = sld [smem:[#allocation0]]
  $region62: #{tpu_custom_call.1} parent=0
    _
  %s12 = ssub.s32 1, %s10
  %s13 = scalar_select 0, %s12, %s10
  %v14 = vstv %s8
  %15 = vst [vmem:[#allocation2] sm:$0x1] %v14
  $region1: #{tpu_custom_call.1} parent=0
    #allocation3 [shape = 'u8[524288]{0}', space=vmem, size = 0x80000, scoped, tag = 'input window, operand 0, single buffered']
    #allocation4 [shape = 's32[1]{0}', space=sflag, size = 0x4, scoped, tag = 'scoped memory for tpu_custom_call.1']
    #allocation5 [shape = 'u8[1048576]{0}', space=vmem, size = 0x100000, scoped, tag = 'input window, operand 1, single buffered']
    #allocation6 [shape = 's32[1]{0}', space=sflag, size = 0x4, scoped, tag = 'scoped memory for tpu_custom_call.1']
    #allocation7 [shape = 'u8[262144]{0}', space=vmem, size = 0x40000, scoped, tag = 'input window, operand 3, single buffered']
    #allocation8 [shape = 'u8[65536]{0}', space=vmem, size = 0x10000, scoped, tag = 'input window, operand 5, single buffered']
    #allocation9 [shape = 's32[1]{0}', space=sflag, size = 0x4, scoped, tag = 'scoped memory for tpu_custom_call.1']
    %16 = vsyncpa [#allocation4], 0
    %17 = vsyncpa [#allocation6], 0
    %18 = vsyncpa [#allocation9], 0
    // Predicated region
    $region2: #{tpu_custom_call.1} parent=1 // pred_check
      _
    $region3: #{tpu_custom_call.1} parent=1 // pred_check_branch
      %20 = sbr.rel (0) target = $region5
    $region4: #{tpu_custom_call.1} parent=1 // pred_region
      %s22 = ssub.s32 16384, 16384
      %23 = vsyncadd [#allocation4], %s22
      %s24 = sshll.u32 [#allocation3], 4
      %s25 = int_to_ptr.vmem [resolvable:$true] %s24
      %30 = dma.hbm_to_vmem [thread:$0]  %s0, 16384, %s25, [#allocation4], 1024, 1024, 64
    $region5: #{tpu_custom_call.1} parent=1 // pred_fallthru
      _
    // Predicated region
    $region6: #{tpu_custom_call.1} parent=1 // pred_check
      _
    $region7: #{tpu_custom_call.1} parent=1 // pred_check_branch
      %32 = sbr.rel (0) target = $region9
    $region8: #{tpu_custom_call.1} parent=1 // pred_region
      %s34 = ssub.s32 32768, 32768
      %35 = vsyncadd [#allocation6], %s34
      %s36 = sshll.u32 [#allocation5], 4
      %s37 = int_to_ptr.vmem [resolvable:$true] %s36
      %42 = dma.hbm_to_vmem [thread:$0]  %s1, 32768, %s37, [#allocation6], 256, 256, 16
    $region9: #{tpu_custom_call.1} parent=1 // pred_fallthru
      _
    // Predicated region
    $region10: #{tpu_custom_call.1} parent=1 // pred_check
      _
    $region11: #{tpu_custom_call.1} parent=1 // pred_check_branch
      %44 = sbr.rel (0) target = $region13
    $region12: #{tpu_custom_call.1} parent=1 // pred_region
      _
    $region13: #{tpu_custom_call.1} parent=1 // pred_fallthru
      _
    // Predicated region
    $region14: #{tpu_custom_call.1} parent=1 // pred_check
      _
    $region15: #{tpu_custom_call.1} parent=1 // pred_check_branch
      %46 = sbr.rel (0) target = $region17
    $region16: #{tpu_custom_call.1} parent=1 // pred_region
      %s48 = ssub.s32 8192, 8192
      %49 = vsyncadd [#allocation6], %s48
      %s50 = sshll.u32 [#allocation7], 4
      %s51 = int_to_ptr.vmem [resolvable:$true] %s50
      %56 = dma.hbm_to_vmem [thread:$0]  %s3, 8192, %s51, [#allocation6], 128, 128, 8
    $region17: #{tpu_custom_call.1} parent=1 // pred_fallthru
      _
    // Predicated region
    $region18: #{tpu_custom_call.1} parent=1 // pred_check
      _
    $region19: #{tpu_custom_call.1} parent=1 // pred_check_branch
      %58 = sbr.rel (0) target = $region21
    $region20: #{tpu_custom_call.1} parent=1 // pred_region
      _
    $region21: #{tpu_custom_call.1} parent=1 // pred_fallthru
      _
    // Predicated region
    $region22: #{tpu_custom_call.1} parent=1 // pred_check
      _
    $region23: #{tpu_custom_call.1} parent=1 // pred_check_branch
      %60 = sbr.rel (0) target = $region25
    $region24: #{tpu_custom_call.1} parent=1 // pred_region
      %s62 = ssub.s32 2048, 2048
      %63 = vsyncadd [#allocation9], %s62
      %s64 = sshll.u32 [#allocation8], 4
      %s65 = int_to_ptr.vmem [resolvable:$true] %s64
      %70 = dma.hbm_to_vmem [thread:$0]  %s5, 2048, %s65, [#allocation9], 64, 64, 4
    $region25: #{tpu_custom_call.1} parent=1 // pred_fallthru
      _
    // Predicated region
    $region26: #{tpu_custom_call.1} parent=1 // pred_check
      _
    $region27: #{tpu_custom_call.1} parent=1 // pred_check_branch
      %72 = sbr.rel (0) target = $region29
    $region28: #{tpu_custom_call.1} parent=1 // pred_region
      _
    $region29: #{tpu_custom_call.1} parent=1 // pred_fallthru
      _
    // Predicated region
    $region30: #{tpu_custom_call.1} parent=1 // pred_check
      _
    $region31: #{tpu_custom_call.1} parent=1 // pred_check_branch
      %74 = sbr.rel (0) target = $region33
    $region32: #{tpu_custom_call.1} parent=1 // pred_region
      _
    $region33: #{tpu_custom_call.1} parent=1 // pred_fallthru
      _
    // Predicated region
    $region34: #{tpu_custom_call.1} parent=1 // pred_check
      _
    $region35: #{tpu_custom_call.1} parent=1 // pred_check_branch
      %76 = sbr.rel (0) target = $region37
    $region36: #{tpu_custom_call.1} parent=1 // pred_region
      _
    $region37: #{tpu_custom_call.1} parent=1 // pred_fallthru
      _
    // Predicated region
    $region38: #{tpu_custom_call.1} parent=1 // pred_check
      _
    $region39: #{tpu_custom_call.1} parent=1 // pred_check_branch
      %78 = sbr.rel (0) target = $region41
    $region40: #{tpu_custom_call.1} parent=1 // pred_region
      %79 = dma.done [#allocation4], 16384
    $region41: #{tpu_custom_call.1} parent=1 // pred_fallthru
      _
    // Predicated region
    $region42: #{tpu_custom_call.1} parent=1 // pred_check
      _
    $region43: #{tpu_custom_call.1} parent=1 // pred_check_branch
      %81 = sbr.rel (0) target = $region45
    $region44: #{tpu_custom_call.1} parent=1 // pred_region
      %82 = dma.done [#allocation6], 32768
    $region45: #{tpu_custom_call.1} parent=1 // pred_fallthru
      _
    // Predicated region
    $region46: #{tpu_custom_call.1} parent=1 // pred_check
      _
    $region47: #{tpu_custom_call.1} parent=1 // pred_check_branch
      %84 = sbr.rel (0) target = $region49
    $region48: #{tpu_custom_call.1} parent=1 // pred_region
      %85 = dma.done [#allocation6], 8192
    $region49: #{tpu_custom_call.1} parent=1 // pred_fallthru
      _
    // Predicated region
    $region50: #{tpu_custom_call.1} parent=1 // pred_check
      _
    $region51: #{tpu_custom_call.1} parent=1 // pred_check_branch
      %87 = sbr.rel (0) target = $region53
    $region52: #{tpu_custom_call.1} parent=1 // pred_region
      %88 = dma.done [#allocation9], 2048
    $region53: #{tpu_custom_call.1} parent=1 // pred_fallthru
      _
    %v90 = vld [vmem:[#allocation3] sm:$0xff]
    %v91 = vld [vmem:[#allocation3 + $0x8] sm:$0xff]
    %v92 = vld [vmem:[#allocation3 + $0x10] sm:$0xff]
    %v93 = vld [vmem:[#allocation3 + $0x18] sm:$0xff]
    %v94 = vld [vmem:[#allocation3 + $0x20] sm:$0xff]
    %v95 = vld [vmem:[#allocation3 + $0x28] sm:$0xff]
    %v96 = vld [vmem:[#allocation3 + $0x30] sm:$0xff]
    %v97 = vld [vmem:[#allocation3 + $0x38] sm:$0xff]
    %v98 = vld [vmem:[#allocation3 + $0x40] sm:$0xff]
    %v99 = vld [vmem:[#allocation3 + $0x48] sm:$0xff]
    %v100 = vld [vmem:[#allocation3 + $0x50] sm:$0xff]
    %v101 = vld [vmem:[#allocation3 + $0x58] sm:$0xff]
    %v102 = vld [vmem:[#allocation3 + $0x60] sm:$0xff]
    %v103 = vld [vmem:[#allocation3 + $0x68] sm:$0xff]
    %v104 = vld [vmem:[#allocation3 + $0x70] sm:$0xff]
    %v105 = vld [vmem:[#allocation3 + $0x78] sm:$0xff]
    %v106 = vld [vmem:[#allocation3 + $0x80] sm:$0xff]
    %v107 = vld [vmem:[#allocation3 + $0x88] sm:$0xff]
    %v108 = vld [vmem:[#allocation3 + $0x90] sm:$0xff]
    %v109 = vld [vmem:[#allocation3 + $0x98] sm:$0xff]
    %v110 = vld [vmem:[#allocation3 + $0xa0] sm:$0xff]
    %v111 = vld [vmem:[#allocation3 + $0xa8] sm:$0xff]
    %v112 = vld [vmem:[#allocation3 + $0xb0] sm:$0xff]
    %v113 = vld [vmem:[#allocation3 + $0xb8] sm:$0xff]
    %v114 = vld [vmem:[#allocation3 + $0xc0] sm:$0xff]
    %v115 = vld [vmem:[#allocation3 + $0xc8] sm:$0xff]
    %v116 = vld [vmem:[#allocation3 + $0xd0] sm:$0xff]
    %v117 = vld [vmem:[#allocation3 + $0xd8] sm:$0xff]
    %v118 = vld [vmem:[#allocation3 + $0xe0] sm:$0xff]
    %v119 = vld [vmem:[#allocation3 + $0xe8] sm:$0xff]
    %v120 = vld [vmem:[#allocation3 + $0xf0] sm:$0xff]
    %v121 = vld [vmem:[#allocation3 + $0xf8] sm:$0xff]
    %v122 = vld [vmem:[#allocation3 + $0x100] sm:$0xff]
    %v123 = vld [vmem:[#allocation3 + $0x108] sm:$0xff]
    %v124 = vld [vmem:[#allocation3 + $0x110] sm:$0xff]
    %v125 = vld [vmem:[#allocation3 + $0x118] sm:$0xff]
    %v126 = vld [vmem:[#allocation3 + $0x120] sm:$0xff]
    %v127 = vld [vmem:[#allocation3 + $0x128] sm:$0xff]
    %v128 = vld [vmem:[#allocation3 + $0x130] sm:$0xff]
    %v129 = vld [vmem:[#allocation3 + $0x138] sm:$0xff]
    %v130 = vld [vmem:[#allocation3 + $0x140] sm:$0xff]
    %v131 = vld [vmem:[#allocation3 + $0x148] sm:$0xff]
    %v132 = vld [vmem:[#allocation3 + $0x150] sm:$0xff]
    %v133 = vld [vmem:[#allocation3 + $0x158] sm:$0xff]
    %v134 = vld [vmem:[#allocation3 + $0x160] sm:$0xff]
    %v135 = vld [vmem:[#allocation3 + $0x168] sm:$0xff]
    %v136 = vld [vmem:[#allocation3 + $0x170] sm:$0xff]
    %v137 = vld [vmem:[#allocation3 + $0x178] sm:$0xff]
    %v138 = vld [vmem:[#allocation3 + $0x180] sm:$0xff]
    %v139 = vld [vmem:[#allocation3 + $0x188] sm:$0xff]
    %v140 = vld [vmem:[#allocation3 + $0x190] sm:$0xff]
    %v141 = vld [vmem:[#allocation3 + $0x198] sm:$0xff]
    %v142 = vld [vmem:[#allocation3 + $0x1a0] sm:$0xff]
    %v143 = vld [vmem:[#allocation3 + $0x1a8] sm:$0xff]
    %v144 = vld [vmem:[#allocation3 + $0x1b0] sm:$0xff]
    %v145 = vld [vmem:[#allocation3 + $0x1b8] sm:$0xff]
    %v146 = vld [vmem:[#allocation3 + $0x1c0] sm:$0xff]
    %v147 = vld [vmem:[#allocation3 + $0x1c8] sm:$0xff]
    %v148 = vld [vmem:[#allocation3 + $0x1d0] sm:$0xff]
    %v149 = vld [vmem:[#allocation3 + $0x1d8] sm:$0xff]
    %v150 = vld [vmem:[#allocation3 + $0x1e0] sm:$0xff]
    %v151 = vld [vmem:[#allocation3 + $0x1e8] sm:$0xff]
    %v152 = vld [vmem:[#allocation3 + $0x1f0] sm:$0xff]
    %v153 = vld [vmem:[#allocation3 + $0x1f8] sm:$0xff]
    %v154 = vld [vmem:[#allocation3 + $0x200] sm:$0xff]
    %v155 = vld [vmem:[#allocation3 + $0x208] sm:$0xff]
    %v156 = vld [vmem:[#allocation3 + $0x210] sm:$0xff]
    %v157 = vld [vmem:[#allocation3 + $0x218] sm:$0xff]
    %v158 = vld [vmem:[#allocation3 + $0x220] sm:$0xff]
    %v159 = vld [vmem:[#allocation3 + $0x228] sm:$0xff]
    %v160 = vld [vmem:[#allocation3 + $0x230] sm:$0xff]
    %v161 = vld [vmem:[#allocation3 + $0x238] sm:$0xff]
    %v162 = vld [vmem:[#allocation3 + $0x240] sm:$0xff]
    %v163 = vld [vmem:[#allocation3 + $0x248] sm:$0xff]
    %v164 = vld [vmem:[#allocation3 + $0x250] sm:$0xff]
    %v165 = vld [vmem:[#allocation3 + $0x258] sm:$0xff]
    %v166 = vld [vmem:[#allocation3 + $0x260] sm:$0xff]
    %v167 = vld [vmem:[#allocation3 + $0x268] sm:$0xff]
    %v168 = vld [vmem:[#allocation3 + $0x270] sm:$0xff]
    %v169 = vld [vmem:[#allocation3 + $0x278] sm:$0xff]
    %v170 = vld [vmem:[#allocation3 + $0x280] sm:$0xff]
    %v171 = vld [vmem:[#allocation3 + $0x288] sm:$0xff]
    %v172 = vld [vmem:[#allocation3 + $0x290] sm:$0xff]
    %v173 = vld [vmem:[#allocation3 + $0x298] sm:$0xff]
    %v174 = vld [vmem:[#allocation3 + $0x2a0] sm:$0xff]
    %v175 = vld [vmem:[#allocation3 + $0x2a8] sm:$0xff]
    %v176 = vld [vmem:[#allocation3 + $0x2b0] sm:$0xff]
    %v177 = vld [vmem:[#allocation3 + $0x2b8] sm:$0xff]
    %v178 = vld [vmem:[#allocation3 + $0x2c0] sm:$0xff]
    %v179 = vld [vmem:[#allocation3 + $0x2c8] sm:$0xff]
    %v180 = vld [vmem:[#allocation3 + $0x2d0] sm:$0xff]
    %v181 = vld [vmem:[#allocation3 + $0x2d8] sm:$0xff]
    %v182 = vld [vmem:[#allocation3 + $0x2e0] sm:$0xff]
    %v183 = vld [vmem:[#allocation3 + $0x2e8] sm:$0xff]
    %v184 = vld [vmem:[#allocation3 + $0x2f0] sm:$0xff]
    %v185 = vld [vmem:[#allocation3 + $0x2f8] sm:$0xff]
    %v186 = vld [vmem:[#allocation3 + $0x300] sm:$0xff]
    %v187 = vld [vmem:[#allocation3 + $0x308] sm:$0xff]
    %v188 = vld [vmem:[#allocation3 + $0x310] sm:$0xff]
    %v189 = vld [vmem:[#allocation3 + $0x318] sm:$0xff]
    %v190 = vld [vmem:[#allocation3 + $0x320] sm:$0xff]
    %v191 = vld [vmem:[#allocation3 + $0x328] sm:$0xff]
    %v192 = vld [vmem:[#allocation3 + $0x330] sm:$0xff]
    %v193 = vld [vmem:[#allocation3 + $0x338] sm:$0xff]
    %v194 = vld [vmem:[#allocation3 + $0x340] sm:$0xff]
    %v195 = vld [vmem:[#allocation3 + $0x348] sm:$0xff]
    %v196 = vld [vmem:[#allocation3 + $0x350] sm:$0xff]
    %v197 = vld [vmem:[#allocation3 + $0x358] sm:$0xff]
    %v198 = vld [vmem:[#allocation3 + $0x360] sm:$0xff]
    %v199 = vld [vmem:[#allocation3 + $0x368] sm:$0xff]
    %v200 = vld [vmem:[#allocation3 + $0x370] sm:$0xff]
    %v201 = vld [vmem:[#allocation3 + $0x378] sm:$0xff]
    %v202 = vld [vmem:[#allocation3 + $0x380] sm:$0xff]
    %v203 = vld [vmem:[#allocation3 + $0x388] sm:$0xff]
    %v204 = vld [vmem:[#allocation3 + $0x390] sm:$0xff]
    %v205 = vld [vmem:[#allocation3 + $0x398] sm:$0xff]
    %v206 = vld [vmem:[#allocation3 + $0x3a0] sm:$0xff]
    %v207 = vld [vmem:[#allocation3 + $0x3a8] sm:$0xff]
    %v208 = vld [vmem:[#allocation3 + $0x3b0] sm:$0xff]
    %v209 = vld [vmem:[#allocation3 + $0x3b8] sm:$0xff]
    %v210 = vld [vmem:[#allocation3 + $0x3c0] sm:$0xff]
    %v211 = vld [vmem:[#allocation3 + $0x3c8] sm:$0xff]
    %v212 = vld [vmem:[#allocation3 + $0x3d0] sm:$0xff]
    %v213 = vld [vmem:[#allocation3 + $0x3d8] sm:$0xff]
    %v214 = vld [vmem:[#allocation3 + $0x3e0] sm:$0xff]
    %v215 = vld [vmem:[#allocation3 + $0x3e8] sm:$0xff]
    %v216 = vld [vmem:[#allocation3 + $0x3f0] sm:$0xff]
    %v217 = vld [vmem:[#allocation3 + $0x3f8] sm:$0xff]
    %v218 = vpack.c.bf16 %v98, %v90
    %v219 = vpack.c.bf16 %v99, %v91
    %v220 = vpack.c.bf16 %v100, %v92
    %v221 = vpack.c.bf16 %v101, %v93
    %v222 = vpack.c.bf16 %v102, %v94
    %v223 = vpack.c.bf16 %v103, %v95
    %v224 = vpack.c.bf16 %v104, %v96
    %v225 = vpack.c.bf16 %v105, %v97
    %v226 = vpack.c.bf16 %v114, %v106
    %v227 = vpack.c.bf16 %v115, %v107
    %v228 = vpack.c.bf16 %v116, %v108
    %v229 = vpack.c.bf16 %v117, %v109
    %v230 = vpack.c.bf16 %v118, %v110
    %v231 = vpack.c.bf16 %v119, %v111
    %v232 = vpack.c.bf16 %v120, %v112
    %v233 = vpack.c.bf16 %v121, %v113
    %v234 = vpack.c.bf16 %v130, %v122
    %v235 = vpack.c.bf16 %v131, %v123
    %v236 = vpack.c.bf16 %v132, %v124
    %v237 = vpack.c.bf16 %v133, %v125
    %v238 = vpack.c.bf16 %v134, %v126
    %v239 = vpack.c.bf16 %v135, %v127
    %v240 = vpack.c.bf16 %v136, %v128
    %v241 = vpack.c.bf16 %v137, %v129
    %v242 = vpack.c.bf16 %v146, %v138
    %v243 = vpack.c.bf16 %v147, %v139
    %v244 = vpack.c.bf16 %v148, %v140
    %v245 = vpack.c.bf16 %v149, %v141
    %v246 = vpack.c.bf16 %v150, %v142
    %v247 = vpack.c.bf16 %v151, %v143
    %v248 = vpack.c.bf16 %v152, %v144
    %v249 = vpack.c.bf16 %v153, %v145
    %v250 = vpack.c.bf16 %v162, %v154
    %v251 = vpack.c.bf16 %v163, %v155
    %v252 = vpack.c.bf16 %v164, %v156
    %v253 = vpack.c.bf16 %v165, %v157
    %v254 = vpack.c.bf16 %v166, %v158
    %v255 = vpack.c.bf16 %v167, %v159
    %v256 = vpack.c.bf16 %v168, %v160
    %v257 = vpack.c.bf16 %v169, %v161
    %v258 = vpack.c.bf16 %v178, %v170
    %v259 = vpack.c.bf16 %v179, %v171
    %v260 = vpack.c.bf16 %v180, %v172
    %v261 = vpack.c.bf16 %v181, %v173
    %v262 = vpack.c.bf16 %v182, %v174
    %v263 = vpack.c.bf16 %v183, %v175
    %v264 = vpack.c.bf16 %v184, %v176
    %v265 = vpack.c.bf16 %v185, %v177
    %v266 = vpack.c.bf16 %v194, %v186
    %v267 = vpack.c.bf16 %v195, %v187
    %v268 = vpack.c.bf16 %v196, %v188
    %v269 = vpack.c.bf16 %v197, %v189
    %v270 = vpack.c.bf16 %v198, %v190
    %v271 = vpack.c.bf16 %v199, %v191
    %v272 = vpack.c.bf16 %v200, %v192
    %v273 = vpack.c.bf16 %v201, %v193
    %v274 = vpack.c.bf16 %v210, %v202
    %v275 = vpack.c.bf16 %v211, %v203
    %v276 = vpack.c.bf16 %v212, %v204
    %v277 = vpack.c.bf16 %v213, %v205
    %v278 = vpack.c.bf16 %v214, %v206
    %v279 = vpack.c.bf16 %v215, %v207
    %v280 = vpack.c.bf16 %v216, %v208
    %v281 = vpack.c.bf16 %v217, %v209
    %v282 = vld [vmem:[#allocation5] sm:$0xff]
    %v283 = vld [vmem:[#allocation5 + $0x8] sm:$0xff]
    %v284 = vld [vmem:[#allocation5 + $0x10] sm:$0xff]
    %v285 = vld [vmem:[#allocation5 + $0x18] sm:$0xff]
    %v286 = vld [vmem:[#allocation5 + $0x20] sm:$0xff]
    %v287 = vld [vmem:[#allocation5 + $0x28] sm:$0xff]
    %v288 = vld [vmem:[#allocation5 + $0x30] sm:$0xff]
    %v289 = vld [vmem:[#allocation5 + $0x38] sm:$0xff]
    %v290 = vld [vmem:[#allocation5 + $0x40] sm:$0xff]
    %v291 = vld [vmem:[#allocation5 + $0x48] sm:$0xff]
    %v292 = vld [vmem:[#allocation5 + $0x50] sm:$0xff]
    %v293 = vld [vmem:[#allocation5 + $0x58] sm:$0xff]
    %v294 = vld [vmem:[#allocation5 + $0x60] sm:$0xff]
    %v295 = vld [vmem:[#allocation5 + $0x68] sm:$0xff]
    %v296 = vld [vmem:[#allocation5 + $0x70] sm:$0xff]
    %v297 = vld [vmem:[#allocation5 + $0x78] sm:$0xff]
    %v298 = vld [vmem:[#allocation5 + $0x80] sm:$0xff]
    %v299 = vld [vmem:[#allocation5 + $0x88] sm:$0xff]
    %v300 = vld [vmem:[#allocation5 + $0x90] sm:$0xff]
    %v301 = vld [vmem:[#allocation5 + $0x98] sm:$0xff]
    %v302 = vld [vmem:[#allocation5 + $0xa0] sm:$0xff]
    %v303 = vld [vmem:[#allocation5 + $0xa8] sm:$0xff]
    %v304 = vld [vmem:[#allocation5 + $0xb0] sm:$0xff]
    %v305 = vld [vmem:[#allocation5 + $0xb8] sm:$0xff]
    %v306 = vld [vmem:[#allocation5 + $0xc0] sm:$0xff]
    %v307 = vld [vmem:[#allocation5 + $0xc8] sm:$0xff]
    %v308 = vld [vmem:[#allocation5 + $0xd0] sm:$0xff]
    %v309 = vld [vmem:[#allocation5 + $0xd8] sm:$0xff]
    %v310 = vld [vmem:[#allocation5 + $0xe0] sm:$0xff]
    %v311 = vld [vmem:[#allocation5 + $0xe8] sm:$0xff]
    %v312 = vld [vmem:[#allocation5 + $0xf0] sm:$0xff]
    %v313 = vld [vmem:[#allocation5 + $0xf8] sm:$0xff]
    %v314 = vld [vmem:[#allocation5 + $0x100] sm:$0xff]
    %v315 = vld [vmem:[#allocation5 + $0x108] sm:$0xff]
    %v316 = vld [vmem:[#allocation5 + $0x110] sm:$0xff]
    %v317 = vld [vmem:[#allocation5 + $0x118] sm:$0xff]
    %v318 = vld [vmem:[#allocation5 + $0x120] sm:$0xff]
    %v319 = vld [vmem:[#allocation5 + $0x128] sm:$0xff]
    %v320 = vld [vmem:[#allocation5 + $0x130] sm:$0xff]
    %v321 = vld [vmem:[#allocation5 + $0x138] sm:$0xff]
    %v322 = vld [vmem:[#allocation5 + $0x140] sm:$0xff]
    %v323 = vld [vmem:[#allocation5 + $0x148] sm:$0xff]
    %v324 = vld [vmem:[#allocation5 + $0x150] sm:$0xff]
    %v325 = vld [vmem:[#allocation5 + $0x158] sm:$0xff]
    %v326 = vld [vmem:[#allocation5 + $0x160] sm:$0xff]
    %v327 = vld [vmem:[#allocation5 + $0x168] sm:$0xff]
    %v328 = vld [vmem:[#allocation5 + $0x170] sm:$0xff]
    %v329 = vld [vmem:[#allocation5 + $0x178] sm:$0xff]
    %v330 = vld [vmem:[#allocation5 + $0x180] sm:$0xff]
    %v331 = vld [vmem:[#allocation5 + $0x188] sm:$0xff]
    %v332 = vld [vmem:[#allocation5 + $0x190] sm:$0xff]
    %v333 = vld [vmem:[#allocation5 + $0x198] sm:$0xff]
    %v334 = vld [vmem:[#allocation5 + $0x1a0] sm:$0xff]
    %v335 = vld [vmem:[#allocation5 + $0x1a8] sm:$0xff]
    %v336 = vld [vmem:[#allocation5 + $0x1b0] sm:$0xff]
    %v337 = vld [vmem:[#allocation5 + $0x1b8] sm:$0xff]
    %v338 = vld [vmem:[#allocation5 + $0x1c0] sm:$0xff]
    %v339 = vld [vmem:[#allocation5 + $0x1c8] sm:$0xff]
    %v340 = vld [vmem:[#allocation5 + $0x1d0] sm:$0xff]
    %v341 = vld [vmem:[#allocation5 + $0x1d8] sm:$0xff]
    %v342 = vld [vmem:[#allocation5 + $0x1e0] sm:$0xff]
    %v343 = vld [vmem:[#allocation5 + $0x1e8] sm:$0xff]
    %v344 = vld [vmem:[#allocation5 + $0x1f0] sm:$0xff]
    %v345 = vld [vmem:[#allocation5 + $0x1f8] sm:$0xff]
    %v346 = vld [vmem:[#allocation5 + $0x200] sm:$0xff]
    %v347 = vld [vmem:[#allocation5 + $0x208] sm:$0xff]
    %v348 = vld [vmem:[#allocation5 + $0x210] sm:$0xff]
    %v349 = vld [vmem:[#allocation5 + $0x218] sm:$0xff]
    %v350 = vld [vmem:[#allocation5 + $0x220] sm:$0xff]
    %v351 = vld [vmem:[#allocation5 + $0x228] sm:$0xff]
    %v352 = vld [vmem:[#allocation5 + $0x230] sm:$0xff]
    %v353 = vld [vmem:[#allocation5 + $0x238] sm:$0xff]
    %v354 = vld [vmem:[#allocation5 + $0x240] sm:$0xff]
    %v355 = vld [vmem:[#allocation5 + $0x248] sm:$0xff]
    %v356 = vld [vmem:[#allocation5 + $0x250] sm:$0xff]
    %v357 = vld [vmem:[#allocation5 + $0x258] sm:$0xff]
    %v358 = vld [vmem:[#allocation5 + $0x260] sm:$0xff]
    %v359 = vld [vmem:[#allocation5 + $0x268] sm:$0xff]
    %v360 = vld [vmem:[#allocation5 + $0x270] sm:$0xff]
    %v361 = vld [vmem:[#allocation5 + $0x278] sm:$0xff]
    %v362 = vld [vmem:[#allocation5 + $0x280] sm:$0xff]
    %v363 = vld [vmem:[#allocation5 + $0x288] sm:$0xff]
    %v364 = vld [vmem:[#allocation5 + $0x290] sm:$0xff]
    %v365 = vld [vmem:[#allocation5 + $0x298] sm:$0xff]
    %v366 = vld [vmem:[#allocation5 + $0x2a0] sm:$0xff]
    %v367 = vld [vmem:[#allocation5 + $0x2a8] sm:$0xff]
    %v368 = vld [vmem:[#allocation5 + $0x2b0] sm:$0xff]
    %v369 = vld [vmem:[#allocation5 + $0x2b8] sm:$0xff]
    %v370 = vld [vmem:[#allocation5 + $0x2c0] sm:$0xff]
    %v371 = vld [vmem:[#allocation5 + $0x2c8] sm:$0xff]
    %v372 = vld [vmem:[#allocation5 + $0x2d0] sm:$0xff]
    %v373 = vld [vmem:[#allocation5 + $0x2d8] sm:$0xff]
    %v374 = vld [vmem:[#allocation5 + $0x2e0] sm:$0xff]
    %v375 = vld [vmem:[#allocation5 + $0x2e8] sm:$0xff]
    %v376 = vld [vmem:[#allocation5 + $0x2f0] sm:$0xff]
    %v377 = vld [vmem:[#allocation5 + $0x2f8] sm:$0xff]
    %v378 = vld [vmem:[#allocation5 + $0x300] sm:$0xff]
    %v379 = vld [vmem:[#allocation5 + $0x308] sm:$0xff]
    %v380 = vld [vmem:[#allocation5 + $0x310] sm:$0xff]
    %v381 = vld [vmem:[#allocation5 + $0x318] sm:$0xff]
    %v382 = vld [vmem:[#allocation5 + $0x320] sm:$0xff]
    %v383 = vld [vmem:[#allocation5 + $0x328] sm:$0xff]
    %v384 = vld [vmem:[#allocation5 + $0x330] sm:$0xff]
    %v385 = vld [vmem:[#allocation5 + $0x338] sm:$0xff]
    %v386 = vld [vmem:[#allocation5 + $0x340] sm:$0xff]
    %v387 = vld [vmem:[#allocation5 + $0x348] sm:$0xff]
    %v388 = vld [vmem:[#allocation5 + $0x350] sm:$0xff]
    %v389 = vld [vmem:[#allocation5 + $0x358] sm:$0xff]
    %v390 = vld [vmem:[#allocation5 + $0x360] sm:$0xff]
    %v391 = vld [vmem:[#allocation5 + $0x368] sm:$0xff]
    %v392 = vld [vmem:[#allocation5 + $0x370] sm:$0xff]
    %v393 = vld [vmem:[#allocation5 + $0x378] sm:$0xff]
    %v394 = vld [vmem:[#allocation5 + $0x380] sm:$0xff]
    %v395 = vld [vmem:[#allocation5 + $0x388] sm:$0xff]
    %v396 = vld [vmem:[#allocation5 + $0x390] sm:$0xff]
    %v397 = vld [vmem:[#allocation5 + $0x398] sm:$0xff]
    %v398 = vld [vmem:[#allocation5 + $0x3a0] sm:$0xff]
    %v399 = vld [vmem:[#allocation5 + $0x3a8] sm:$0xff]
    %v400 = vld [vmem:[#allocation5 + $0x3b0] sm:$0xff]
    %v401 = vld [vmem:[#allocation5 + $0x3b8] sm:$0xff]
    %v402 = vld [vmem:[#allocation5 + $0x3c0] sm:$0xff]
    %v403 = vld [vmem:[#allocation5 + $0x3c8] sm:$0xff]
    %v404 = vld [vmem:[#allocation5 + $0x3d0] sm:$0xff]
    %v405 = vld [vmem:[#allocation5 + $0x3d8] sm:$0xff]
    %v406 = vld [vmem:[#allocation5 + $0x3e0] sm:$0xff]
    %v407 = vld [vmem:[#allocation5 + $0x3e8] sm:$0xff]
    %v408 = vld [vmem:[#allocation5 + $0x3f0] sm:$0xff]
    %v409 = vld [vmem:[#allocation5 + $0x3f8] sm:$0xff]
    %v410 = vld [vmem:[#allocation5 + $0x400] sm:$0xff]
    %v411 = vld [vmem:[#allocation5 + $0x408] sm:$0xff]
    %v412 = vld [vmem:[#allocation5 + $0x410] sm:$0xff]
    %v413 = vld [vmem:[#allocation5 + $0x418] sm:$0xff]
    %v414 = vld [vmem:[#allocation5 + $0x420] sm:$0xff]
    %v415 = vld [vmem:[#allocation5 + $0x428] sm:$0xff]
    %v416 = vld [vmem:[#allocation5 + $0x430] sm:$0xff]
    %v417 = vld [vmem:[#allocation5 + $0x438] sm:$0xff]
    %v418 = vld [vmem:[#allocation5 + $0x440] sm:$0xff]
    %v419 = vld [vmem:[#allocation5 + $0x448] sm:$0xff]
    %v420 = vld [vmem:[#allocation5 + $0x450] sm:$0xff]
    %v421 = vld [vmem:[#allocation5 + $0x458] sm:$0xff]
    %v422 = vld [vmem:[#allocation5 + $0x460] sm:$0xff]
    %v423 = vld [vmem:[#allocation5 + $0x468] sm:$0xff]
    %v424 = vld [vmem:[#allocation5 + $0x470] sm:$0xff]
    %v425 = vld [vmem:[#allocation5 + $0x478] sm:$0xff]
    %v426 = vld [vmem:[#allocation5 + $0x480] sm:$0xff]
    %v427 = vld [vmem:[#allocation5 + $0x488] sm:$0xff]
    %v428 = vld [vmem:[#allocation5 + $0x490] sm:$0xff]
    %v429 = vld [vmem:[#allocation5 + $0x498] sm:$0xff]
    %v430 = vld [vmem:[#allocation5 + $0x4a0] sm:$0xff]
    %v431 = vld [vmem:[#allocation5 + $0x4a8] sm:$0xff]
    %v432 = vld [vmem:[#allocation5 + $0x4b0] sm:$0xff]
    %v433 = vld [vmem:[#allocation5 + $0x4b8] sm:$0xff]
    %v434 = vld [vmem:[#allocation5 + $0x4c0] sm:$0xff]
    %v435 = vld [vmem:[#allocation5 + $0x4c8] sm:$0xff]
    %v436 = vld [vmem:[#allocation5 + $0x4d0] sm:$0xff]
    %v437 = vld [vmem:[#allocation5 + $0x4d8] sm:$0xff]
    %v438 = vld [vmem:[#allocation5 + $0x4e0] sm:$0xff]
    %v439 = vld [vmem:[#allocation5 + $0x4e8] sm:$0xff]
    %v440 = vld [vmem:[#allocation5 + $0x4f0] sm:$0xff]
    %v441 = vld [vmem:[#allocation5 + $0x4f8] sm:$0xff]
    %v442 = vld [vmem:[#allocation5 + $0x500] sm:$0xff]
    %v443 = vld [vmem:[#allocation5 + $0x508] sm:$0xff]
    %v444 = vld [vmem:[#allocation5 + $0x510] sm:$0xff]
    %v445 = vld [vmem:[#allocation5 + $0x518] sm:$0xff]
    %v446 = vld [vmem:[#allocation5 + $0x520] sm:$0xff]
    %v447 = vld [vmem:[#allocation5 + $0x528] sm:$0xff]
    %v448 = vld [vmem:[#allocation5 + $0x530] sm:$0xff]
    %v449 = vld [vmem:[#allocation5 + $0x538] sm:$0xff]
    %v450 = vld [vmem:[#allocation5 + $0x540] sm:$0xff]
    %v451 = vld [vmem:[#allocation5 + $0x548] sm:$0xff]
    %v452 = vld [vmem:[#allocation5 + $0x550] sm:$0xff]
    %v453 = vld [vmem:[#allocation5 + $0x558] sm:$0xff]
    %v454 = vld [vmem:[#allocation5 + $0x560] sm:$0xff]
    %v455 = vld [vmem:[#allocation5 + $0x568] sm:$0xff]
    %v456 = vld [vmem:[#allocation5 + $0x570] sm:$0xff]
    %v457 = vld [vmem:[#allocation5 + $0x578] sm:$0xff]
    %v458 = vld [vmem:[#allocation5 + $0x580] sm:$0xff]
    %v459 = vld [vmem:[#allocation5 + $0x588] sm:$0xff]
    %v460 = vld [vmem:[#allocation5 + $0x590] sm:$0xff]
    %v461 = vld [vmem:[#allocation5 + $0x598] sm:$0xff]
    %v462 = vld [vmem:[#allocation5 + $0x5a0] sm:$0xff]
    %v463 = vld [vmem:[#allocation5 + $0x5a8] sm:$0xff]
    %v464 = vld [vmem:[#allocation5 + $0x5b0] sm:$0xff]
    %v465 = vld [vmem:[#allocation5 + $0x5b8] sm:$0xff]
    %v466 = vld [vmem:[#allocation5 + $0x5c0] sm:$0xff]
    %v467 = vld [vmem:[#allocation5 + $0x5c8] sm:$0xff]
    %v468 = vld [vmem:[#allocation5 + $0x5d0] sm:$0xff]
    %v469 = vld [vmem:[#allocation5 + $0x5d8] sm:$0xff]
    %v470 = vld [vmem:[#allocation5 + $0x5e0] sm:$0xff]
    %v471 = vld [vmem:[#allocation5 + $0x5e8] sm:$0xff]
    %v472 = vld [vmem:[#allocation5 + $0x5f0] sm:$0xff]
    %v473 = vld [vmem:[#allocation5 + $0x5f8] sm:$0xff]
    %v474 = vld [vmem:[#allocation5 + $0x600] sm:$0xff]
    %v475 = vld [vmem:[#allocation5 + $0x608] sm:$0xff]
    %v476 = vld [vmem:[#allocation5 + $0x610] sm:$0xff]
    %v477 = vld [vmem:[#allocation5 + $0x618] sm:$0xff]
    %v478 = vld [vmem:[#allocation5 + $0x620] sm:$0xff]
    %v479 = vld [vmem:[#allocation5 + $0x628] sm:$0xff]
    %v480 = vld [vmem:[#allocation5 + $0x630] sm:$0xff]
    %v481 = vld [vmem:[#allocation5 + $0x638] sm:$0xff]
    %v482 = vld [vmem:[#allocation5 + $0x640] sm:$0xff]
    %v483 = vld [vmem:[#allocation5 + $0x648] sm:$0xff]
    %v484 = vld [vmem:[#allocation5 + $0x650] sm:$0xff]
    %v485 = vld [vmem:[#allocation5 + $0x658] sm:$0xff]
    %v486 = vld [vmem:[#allocation5 + $0x660] sm:$0xff]
    %v487 = vld [vmem:[#allocation5 + $0x668] sm:$0xff]
    %v488 = vld [vmem:[#allocation5 + $0x670] sm:$0xff]
    %v489 = vld [vmem:[#allocation5 + $0x678] sm:$0xff]
    %v490 = vld [vmem:[#allocation5 + $0x680] sm:$0xff]
    %v491 = vld [vmem:[#allocation5 + $0x688] sm:$0xff]
    %v492 = vld [vmem:[#allocation5 + $0x690] sm:$0xff]
    %v493 = vld [vmem:[#allocation5 + $0x698] sm:$0xff]
    %v494 = vld [vmem:[#allocation5 + $0x6a0] sm:$0xff]
    %v495 = vld [vmem:[#allocation5 + $0x6a8] sm:$0xff]
    %v496 = vld [vmem:[#allocation5 + $0x6b0] sm:$0xff]
    %v497 = vld [vmem:[#allocation5 + $0x6b8] sm:$0xff]
    %v498 = vld [vmem:[#allocation5 + $0x6c0] sm:$0xff]
    %v499 = vld [vmem:[#allocation5 + $0x6c8] sm:$0xff]
    %v500 = vld [vmem:[#allocation5 + $0x6d0] sm:$0xff]
    %v501 = vld [vmem:[#allocation5 + $0x6d8] sm:$0xff]
    %v502 = vld [vmem:[#allocation5 + $0x6e0] sm:$0xff]
    %v503 = vld [vmem:[#allocation5 + $0x6e8] sm:$0xff]
    %v504 = vld [vmem:[#allocation5 + $0x6f0] sm:$0xff]
    %v505 = vld [vmem:[#allocation5 + $0x6f8] sm:$0xff]
    %v506 = vld [vmem:[#allocation5 + $0x700] sm:$0xff]
    %v507 = vld [vmem:[#allocation5 + $0x708] sm:$0xff]
    %v508 = vld [vmem:[#allocation5 + $0x710] sm:$0xff]
    %v509 = vld [vmem:[#allocation5 + $0x718] sm:$0xff]
    %v510 = vld [vmem:[#allocation5 + $0x720] sm:$0xff]
    %v511 = vld [vmem:[#allocation5 + $0x728] sm:$0xff]
    %v512 = vld [vmem:[#allocation5 + $0x730] sm:$0xff]
    %v513 = vld [vmem:[#allocation5 + $0x738] sm:$0xff]
    %v514 = vld [vmem:[#allocation5 + $0x740] sm:$0xff]
    %v515 = vld [vmem:[#allocation5 + $0x748] sm:$0xff]
    %v516 = vld [vmem:[#allocation5 + $0x750] sm:$0xff]
    %v517 = vld [vmem:[#allocation5 + $0x758] sm:$0xff]
    %v518 = vld [vmem:[#allocation5 + $0x760] sm:$0xff]
    %v519 = vld [vmem:[#allocation5 + $0x768] sm:$0xff]
    %v520 = vld [vmem:[#allocation5 + $0x770] sm:$0xff]
    %v521 = vld [vmem:[#allocation5 + $0x778] sm:$0xff]
    %v522 = vld [vmem:[#allocation5 + $0x780] sm:$0xff]
    %v523 = vld [vmem:[#allocation5 + $0x788] sm:$0xff]
    %v524 = vld [vmem:[#allocation5 + $0x790] sm:$0xff]
    %v525 = vld [vmem:[#allocation5 + $0x798] sm:$0xff]
    %v526 = vld [vmem:[#allocation5 + $0x7a0] sm:$0xff]
    %v527 = vld [vmem:[#allocation5 + $0x7a8] sm:$0xff]
    %v528 = vld [vmem:[#allocation5 + $0x7b0] sm:$0xff]
    %v529 = vld [vmem:[#allocation5 + $0x7b8] sm:$0xff]
    %v530 = vld [vmem:[#allocation5 + $0x7c0] sm:$0xff]
    %v531 = vld [vmem:[#allocation5 + $0x7c8] sm:$0xff]
    %v532 = vld [vmem:[#allocation5 + $0x7d0] sm:$0xff]
    %v533 = vld [vmem:[#allocation5 + $0x7d8] sm:$0xff]
    %v534 = vld [vmem:[#allocation5 + $0x7e0] sm:$0xff]
    %v535 = vld [vmem:[#allocation5 + $0x7e8] sm:$0xff]
    %v536 = vld [vmem:[#allocation5 + $0x7f0] sm:$0xff]
    %v537 = vld [vmem:[#allocation5 + $0x7f8] sm:$0xff]
    %v538 = vld [vmem:[%s2] sm:$0xf]
    %v540 = vlaneseq
    %v541 = vshrl.u32 %v540, 7
    %v542 = vsub.s32 0, %v541
    %v543 = vrot.slane %v538, %v542
    %v544 = vlaneseq
    %v545 = vshrl.u32 %v544, 7
    %v546 = vsub.s32 1, %v545
    %v547 = vrot.slane %v538, %v546
    %v548 = vlaneseq
    %v549 = vshrl.u32 %v548, 7
    %v550 = vsub.s32 2, %v549
    %v551 = vrot.slane %v538, %v550
    %v552 = vlaneseq
    %v553 = vshrl.u32 %v552, 7
    %v554 = vsub.s32 3, %v553
    %v555 = vrot.slane %v538, %v554
    %v816 = vunpack.c.l.b16 %v282
    %v817 = vunpack.c.h.b16 %v282
    %v818 = vunpack.c.l.b16 %v283
    %v819 = vunpack.c.h.b16 %v283
    %v820 = vunpack.c.l.b16 %v284
    %v821 = vunpack.c.h.b16 %v284
    %v822 = vunpack.c.l.b16 %v285
    %v823 = vunpack.c.h.b16 %v285
    %v824 = vunpack.c.l.b16 %v286
    %v825 = vunpack.c.h.b16 %v286
    %v826 = vunpack.c.l.b16 %v287
    %v827 = vunpack.c.h.b16 %v287
    %v828 = vunpack.c.l.b16 %v288
    %v829 = vunpack.c.h.b16 %v288
    %v830 = vunpack.c.l.b16 %v289
    %v831 = vunpack.c.h.b16 %v289
    %v832 = vunpack.c.l.b16 %v290
    %v833 = vunpack.c.h.b16 %v290
    %v834 = vunpack.c.l.b16 %v291
    %v835 = vunpack.c.h.b16 %v291
    %v836 = vunpack.c.l.b16 %v292
    %v837 = vunpack.c.h.b16 %v292
    %v838 = vunpack.c.l.b16 %v293
    %v839 = vunpack.c.h.b16 %v293
    %v840 = vunpack.c.l.b16 %v294
    %v841 = vunpack.c.h.b16 %v294
    %v842 = vunpack.c.l.b16 %v295
    %v843 = vunpack.c.h.b16 %v295
    %v844 = vunpack.c.l.b16 %v296
    %v845 = vunpack.c.h.b16 %v296
    %v846 = vunpack.c.l.b16 %v297
    %v847 = vunpack.c.h.b16 %v297
    %v848 = vunpack.c.l.b16 %v298
    %v849 = vunpack.c.h.b16 %v298
    %v850 = vunpack.c.l.b16 %v299
    %v851 = vunpack.c.h.b16 %v299
    %v852 = vunpack.c.l.b16 %v300
    %v853 = vunpack.c.h.b16 %v300
    %v854 = vunpack.c.l.b16 %v301
    %v855 = vunpack.c.h.b16 %v301
    %v856 = vunpack.c.l.b16 %v302
    %v857 = vunpack.c.h.b16 %v302
    %v858 = vunpack.c.l.b16 %v303
    %v859 = vunpack.c.h.b16 %v303
    %v860 = vunpack.c.l.b16 %v304
    %v861 = vunpack.c.h.b16 %v304
    %v862 = vunpack.c.l.b16 %v305
    %v863 = vunpack.c.h.b16 %v305
    %v864 = vunpack.c.l.b16 %v306
    %v865 = vunpack.c.h.b16 %v306
    %v866 = vunpack.c.l.b16 %v307
    %v867 = vunpack.c.h.b16 %v307
    %v868 = vunpack.c.l.b16 %v308
    %v869 = vunpack.c.h.b16 %v308
    %v870 = vunpack.c.l.b16 %v309
    %v871 = vunpack.c.h.b16 %v309
    %v872 = vunpack.c.l.b16 %v310
    %v873 = vunpack.c.h.b16 %v310
    %v874 = vunpack.c.l.b16 %v311
    %v875 = vunpack.c.h.b16 %v311
    %v876 = vunpack.c.l.b16 %v312
    %v877 = vunpack.c.h.b16 %v312
    %v878 = vunpack.c.l.b16 %v313
    %v879 = vunpack.c.h.b16 %v313
    %v880 = vunpack.c.l.b16 %v314
    %v881 = vunpack.c.h.b16 %v314
    %v882 = vunpack.c.l.b16 %v315
    %v883 = vunpack.c.h.b16 %v315
    %v884 = vunpack.c.l.b16 %v316
    %v885 = vunpack.c.h.b16 %v316
    %v886 = vunpack.c.l.b16 %v317
    %v887 = vunpack.c.h.b16 %v317
    %v888 = vunpack.c.l.b16 %v318
    %v889 = vunpack.c.h.b16 %v318
    %v890 = vunpack.c.l.b16 %v319
    %v891 = vunpack.c.h.b16 %v319
    %v892 = vunpack.c.l.b16 %v320
    %v893 = vunpack.c.h.b16 %v320
    %v894 = vunpack.c.l.b16 %v321
    %v895 = vunpack.c.h.b16 %v321
    %v896 = vunpack.c.l.b16 %v322
    %v897 = vunpack.c.h.b16 %v322
    %v898 = vunpack.c.l.b16 %v323
    %v899 = vunpack.c.h.b16 %v323
    %v900 = vunpack.c.l.b16 %v324
    %v901 = vunpack.c.h.b16 %v324
    %v902 = vunpack.c.l.b16 %v325
    %v903 = vunpack.c.h.b16 %v325
    %v904 = vunpack.c.l.b16 %v326
    %v905 = vunpack.c.h.b16 %v326
    %v906 = vunpack.c.l.b16 %v327
    %v907 = vunpack.c.h.b16 %v327
    %v908 = vunpack.c.l.b16 %v328
    %v909 = vunpack.c.h.b16 %v328
    %v910 = vunpack.c.l.b16 %v329
    %v911 = vunpack.c.h.b16 %v329
    %v912 = vunpack.c.l.b16 %v330
    %v913 = vunpack.c.h.b16 %v330
    %v914 = vunpack.c.l.b16 %v331
    %v915 = vunpack.c.h.b16 %v331
    %v916 = vunpack.c.l.b16 %v332
    %v917 = vunpack.c.h.b16 %v332
    %v918 = vunpack.c.l.b16 %v333
    %v919 = vunpack.c.h.b16 %v333
    %v920 = vunpack.c.l.b16 %v334
    %v921 = vunpack.c.h.b16 %v334
    %v922 = vunpack.c.l.b16 %v335
    %v923 = vunpack.c.h.b16 %v335
    %v924 = vunpack.c.l.b16 %v336
    %v925 = vunpack.c.h.b16 %v336
    %v926 = vunpack.c.l.b16 %v337
    %v927 = vunpack.c.h.b16 %v337
    %v928 = vunpack.c.l.b16 %v338
    %v929 = vunpack.c.h.b16 %v338
    %v930 = vunpack.c.l.b16 %v339
    %v931 = vunpack.c.h.b16 %v339
    %v932 = vunpack.c.l.b16 %v340
    %v933 = vunpack.c.h.b16 %v340
    %v934 = vunpack.c.l.b16 %v341
    %v935 = vunpack.c.h.b16 %v341
    %v936 = vunpack.c.l.b16 %v342
    %v937 = vunpack.c.h.b16 %v342
    %v938 = vunpack.c.l.b16 %v343
    %v939 = vunpack.c.h.b16 %v343
    %v940 = vunpack.c.l.b16 %v344
    %v941 = vunpack.c.h.b16 %v344
    %v942 = vunpack.c.l.b16 %v345
    %v943 = vunpack.c.h.b16 %v345
    %v944 = vunpack.c.l.b16 %v346
    %v945 = vunpack.c.h.b16 %v346
    %v946 = vunpack.c.l.b16 %v347
    %v947 = vunpack.c.h.b16 %v347
    %v948 = vunpack.c.l.b16 %v348
    %v949 = vunpack.c.h.b16 %v348
    %v950 = vunpack.c.l.b16 %v349
    %v951 = vunpack.c.h.b16 %v349
    %v952 = vunpack.c.l.b16 %v350
    %v953 = vunpack.c.h.b16 %v350
    %v954 = vunpack.c.l.b16 %v351
    %v955 = vunpack.c.h.b16 %v351
    %v956 = vunpack.c.l.b16 %v352
    %v957 = vunpack.c.h.b16 %v352
    %v958 = vunpack.c.l.b16 %v353
    %v959 = vunpack.c.h.b16 %v353
    %v960 = vunpack.c.l.b16 %v354
    %v961 = vunpack.c.h.b16 %v354
    %v962 = vunpack.c.l.b16 %v355
    %v963 = vunpack.c.h.b16 %v355
    %v964 = vunpack.c.l.b16 %v356
    %v965 = vunpack.c.h.b16 %v356
    %v966 = vunpack.c.l.b16 %v357
    %v967 = vunpack.c.h.b16 %v357
    %v968 = vunpack.c.l.b16 %v358
    %v969 = vunpack.c.h.b16 %v358
    %v970 = vunpack.c.l.b16 %v359
    %v971 = vunpack.c.h.b16 %v359
    %v972 = vunpack.c.l.b16 %v360
    %v973 = vunpack.c.h.b16 %v360
    %v974 = vunpack.c.l.b16 %v361
    %v975 = vunpack.c.h.b16 %v361
    %v976 = vunpack.c.l.b16 %v362
    %v977 = vunpack.c.h.b16 %v362
    %v978 = vunpack.c.l.b16 %v363
    %v979 = vunpack.c.h.b16 %v363
    %v980 = vunpack.c.l.b16 %v364
    %v981 = vunpack.c.h.b16 %v364
    %v982 = vunpack.c.l.b16 %v365
    %v983 = vunpack.c.h.b16 %v365
    %v984 = vunpack.c.l.b16 %v366
    %v985 = vunpack.c.h.b16 %v366
    %v986 = vunpack.c.l.b16 %v367
    %v987 = vunpack.c.h.b16 %v367
    %v988 = vunpack.c.l.b16 %v368
    %v989 = vunpack.c.h.b16 %v368
    %v990 = vunpack.c.l.b16 %v369
    %v991 = vunpack.c.h.b16 %v369
    %v992 = vunpack.c.l.b16 %v370
    %v993 = vunpack.c.h.b16 %v370
    %v994 = vunpack.c.l.b16 %v371
    %v995 = vunpack.c.h.b16 %v371
    %v996 = vunpack.c.l.b16 %v372
    %v997 = vunpack.c.h.b16 %v372
    %v998 = vunpack.c.l.b16 %v373
    %v999 = vunpack.c.h.b16 %v373
    %v1000 = vunpack.c.l.b16 %v374
    %v1001 = vunpack.c.h.b16 %v374
    %v1002 = vunpack.c.l.b16 %v375
    %v1003 = vunpack.c.h.b16 %v375
    %v1004 = vunpack.c.l.b16 %v376
    %v1005 = vunpack.c.h.b16 %v376
    %v1006 = vunpack.c.l.b16 %v377
    %v1007 = vunpack.c.h.b16 %v377
    %v1008 = vunpack.c.l.b16 %v378
    %v1009 = vunpack.c.h.b16 %v378
    %v1010 = vunpack.c.l.b16 %v379
    %v1011 = vunpack.c.h.b16 %v379
    %v1012 = vunpack.c.l.b16 %v380
    %v1013 = vunpack.c.h.b16 %v380
    %v1014 = vunpack.c.l.b16 %v381
    %v1015 = vunpack.c.h.b16 %v381
    %v1016 = vunpack.c.l.b16 %v382
    %v1017 = vunpack.c.h.b16 %v382
    %v1018 = vunpack.c.l.b16 %v383
    %v1019 = vunpack.c.h.b16 %v383
    %v1020 = vunpack.c.l.b16 %v384
    %v1021 = vunpack.c.h.b16 %v384
    %v1022 = vunpack.c.l.b16 %v385
    %v1023 = vunpack.c.h.b16 %v385
    %v1024 = vunpack.c.l.b16 %v386
    %v1025 = vunpack.c.h.b16 %v386
    %v1026 = vunpack.c.l.b16 %v387
    %v1027 = vunpack.c.h.b16 %v387
    %v1028 = vunpack.c.l.b16 %v388
    %v1029 = vunpack.c.h.b16 %v388
    %v1030 = vunpack.c.l.b16 %v389
    %v1031 = vunpack.c.h.b16 %v389
    %v1032 = vunpack.c.l.b16 %v390
    %v1033 = vunpack.c.h.b16 %v390
    %v1034 = vunpack.c.l.b16 %v391
    %v1035 = vunpack.c.h.b16 %v391
    %v1036 = vunpack.c.l.b16 %v392
    %v1037 = vunpack.c.h.b16 %v392
    %v1038 = vunpack.c.l.b16 %v393
    %v1039 = vunpack.c.h.b16 %v393
    %v1040 = vunpack.c.l.b16 %v394
    %v1041 = vunpack.c.h.b16 %v394
    %v1042 = vunpack.c.l.b16 %v395
    %v1043 = vunpack.c.h.b16 %v395
    %v1044 = vunpack.c.l.b16 %v396
    %v1045 = vunpack.c.h.b16 %v396
    %v1046 = vunpack.c.l.b16 %v397
    %v1047 = vunpack.c.h.b16 %v397
    %v1048 = vunpack.c.l.b16 %v398
    %v1049 = vunpack.c.h.b16 %v398
    %v1050 = vunpack.c.l.b16 %v399
    %v1051 = vunpack.c.h.b16 %v399
    %v1052 = vunpack.c.l.b16 %v400
    %v1053 = vunpack.c.h.b16 %v400
    %v1054 = vunpack.c.l.b16 %v401
    %v1055 = vunpack.c.h.b16 %v401
    %v1056 = vunpack.c.l.b16 %v402
    %v1057 = vunpack.c.h.b16 %v402
    %v1058 = vunpack.c.l.b16 %v403
    %v1059 = vunpack.c.h.b16 %v403
    %v1060 = vunpack.c.l.b16 %v404
    %v1061 = vunpack.c.h.b16 %v404
    %v1062 = vunpack.c.l.b16 %v405
    %v1063 = vunpack.c.h.b16 %v405
    %v1064 = vunpack.c.l.b16 %v406
    %v1065 = vunpack.c.h.b16 %v406
    %v1066 = vunpack.c.l.b16 %v407
    %v1067 = vunpack.c.h.b16 %v407
    %v1068 = vunpack.c.l.b16 %v408
    %v1069 = vunpack.c.h.b16 %v408
    %v1070 = vunpack.c.l.b16 %v409
    %v1071 = vunpack.c.h.b16 %v409
    %v1072 = vunpack.c.l.b16 %v410
    %v1073 = vunpack.c.h.b16 %v410
    %v1074 = vunpack.c.l.b16 %v411
    %v1075 = vunpack.c.h.b16 %v411
    %v1076 = vunpack.c.l.b16 %v412
    %v1077 = vunpack.c.h.b16 %v412
    %v1078 = vunpack.c.l.b16 %v413
    %v1079 = vunpack.c.h.b16 %v413
    %v1080 = vunpack.c.l.b16 %v414
    %v1081 = vunpack.c.h.b16 %v414
    %v1082 = vunpack.c.l.b16 %v415
    %v1083 = vunpack.c.h.b16 %v415
    %v1084 = vunpack.c.l.b16 %v416
    %v1085 = vunpack.c.h.b16 %v416
    %v1086 = vunpack.c.l.b16 %v417
    %v1087 = vunpack.c.h.b16 %v417
    %v1088 = vunpack.c.l.b16 %v418
    %v1089 = vunpack.c.h.b16 %v418
    %v1090 = vunpack.c.l.b16 %v419
    %v1091 = vunpack.c.h.b16 %v419
    %v1092 = vunpack.c.l.b16 %v420
    %v1093 = vunpack.c.h.b16 %v420
    %v1094 = vunpack.c.l.b16 %v421
    %v1095 = vunpack.c.h.b16 %v421
    %v1096 = vunpack.c.l.b16 %v422
    %v1097 = vunpack.c.h.b16 %v422
    %v1098 = vunpack.c.l.b16 %v423
    %v1099 = vunpack.c.h.b16 %v423
    %v1100 = vunpack.c.l.b16 %v424
    %v1101 = vunpack.c.h.b16 %v424
    %v1102 = vunpack.c.l.b16 %v425
    %v1103 = vunpack.c.h.b16 %v425
    %v1104 = vunpack.c.l.b16 %v426
    %v1105 = vunpack.c.h.b16 %v426
    %v1106 = vunpack.c.l.b16 %v427
    %v1107 = vunpack.c.h.b16 %v427
    %v1108 = vunpack.c.l.b16 %v428
    %v1109 = vunpack.c.h.b16 %v428
    %v1110 = vunpack.c.l.b16 %v429
    %v1111 = vunpack.c.h.b16 %v429
    %v1112 = vunpack.c.l.b16 %v430
    %v1113 = vunpack.c.h.b16 %v430
    %v1114 = vunpack.c.l.b16 %v431
    %v1115 = vunpack.c.h.b16 %v431
    %v1116 = vunpack.c.l.b16 %v432
    %v1117 = vunpack.c.h.b16 %v432
    %v1118 = vunpack.c.l.b16 %v433
    %v1119 = vunpack.c.h.b16 %v433
    %v1120 = vunpack.c.l.b16 %v434
    %v1121 = vunpack.c.h.b16 %v434
    %v1122 = vunpack.c.l.b16 %v435
    %v1123 = vunpack.c.h.b16 %v435
    %v1124 = vunpack.c.l.b16 %v436
    %v1125 = vunpack.c.h.b16 %v436
    %v1126 = vunpack.c.l.b16 %v437
    %v1127 = vunpack.c.h.b16 %v437
    %v1128 = vunpack.c.l.b16 %v438
    %v1129 = vunpack.c.h.b16 %v438
    %v1130 = vunpack.c.l.b16 %v439
    %v1131 = vunpack.c.h.b16 %v439
    %v1132 = vunpack.c.l.b16 %v440
    %v1133 = vunpack.c.h.b16 %v440
    %v1134 = vunpack.c.l.b16 %v441
    %v1135 = vunpack.c.h.b16 %v441
    %v1136 = vunpack.c.l.b16 %v442
    %v1137 = vunpack.c.h.b16 %v442
    %v1138 = vunpack.c.l.b16 %v443
    %v1139 = vunpack.c.h.b16 %v443
    %v1140 = vunpack.c.l.b16 %v444
    %v1141 = vunpack.c.h.b16 %v444
    %v1142 = vunpack.c.l.b16 %v445
    %v1143 = vunpack.c.h.b16 %v445
    %v1144 = vunpack.c.l.b16 %v446
    %v1145 = vunpack.c.h.b16 %v446
    %v1146 = vunpack.c.l.b16 %v447
    %v1147 = vunpack.c.h.b16 %v447
    %v1148 = vunpack.c.l.b16 %v448
    %v1149 = vunpack.c.h.b16 %v448
    %v1150 = vunpack.c.l.b16 %v449
    %v1151 = vunpack.c.h.b16 %v449
    %v1152 = vunpack.c.l.b16 %v450
    %v1153 = vunpack.c.h.b16 %v450
    %v1154 = vunpack.c.l.b16 %v451
    %v1155 = vunpack.c.h.b16 %v451
    %v1156 = vunpack.c.l.b16 %v452
    %v1157 = vunpack.c.h.b16 %v452
    %v1158 = vunpack.c.l.b16 %v453
    %v1159 = vunpack.c.h.b16 %v453
    %v1160 = vunpack.c.l.b16 %v454
    %v1161 = vunpack.c.h.b16 %v454
    %v1162 = vunpack.c.l.b16 %v455
    %v1163 = vunpack.c.h.b16 %v455
    %v1164 = vunpack.c.l.b16 %v456
    %v1165 = vunpack.c.h.b16 %v456
    %v1166 = vunpack.c.l.b16 %v457
    %v1167 = vunpack.c.h.b16 %v457
    %v1168 = vunpack.c.l.b16 %v458
    %v1169 = vunpack.c.h.b16 %v458
    %v1170 = vunpack.c.l.b16 %v459
    %v1171 = vunpack.c.h.b16 %v459
    %v1172 = vunpack.c.l.b16 %v460
    %v1173 = vunpack.c.h.b16 %v460
    %v1174 = vunpack.c.l.b16 %v461
    %v1175 = vunpack.c.h.b16 %v461
    %v1176 = vunpack.c.l.b16 %v462
    %v1177 = vunpack.c.h.b16 %v462
    %v1178 = vunpack.c.l.b16 %v463
    %v1179 = vunpack.c.h.b16 %v463
    %v1180 = vunpack.c.l.b16 %v464
    %v1181 = vunpack.c.h.b16 %v464
    %v1182 = vunpack.c.l.b16 %v465
    %v1183 = vunpack.c.h.b16 %v465
    %v1184 = vunpack.c.l.b16 %v466
    %v1185 = vunpack.c.h.b16 %v466
    %v1186 = vunpack.c.l.b16 %v467
    %v1187 = vunpack.c.h.b16 %v467
    %v1188 = vunpack.c.l.b16 %v468
    %v1189 = vunpack.c.h.b16 %v468
    %v1190 = vunpack.c.l.b16 %v469
    %v1191 = vunpack.c.h.b16 %v469
    %v1192 = vunpack.c.l.b16 %v470
    %v1193 = vunpack.c.h.b16 %v470
    %v1194 = vunpack.c.l.b16 %v471
    %v1195 = vunpack.c.h.b16 %v471
    %v1196 = vunpack.c.l.b16 %v472
    %v1197 = vunpack.c.h.b16 %v472
    %v1198 = vunpack.c.l.b16 %v473
    %v1199 = vunpack.c.h.b16 %v473
    %v1200 = vunpack.c.l.b16 %v474
    %v1201 = vunpack.c.h.b16 %v474
    %v1202 = vunpack.c.l.b16 %v475
    %v1203 = vunpack.c.h.b16 %v475
    %v1204 = vunpack.c.l.b16 %v476
    %v1205 = vunpack.c.h.b16 %v476
    %v1206 = vunpack.c.l.b16 %v477
    %v1207 = vunpack.c.h.b16 %v477
    %v1208 = vunpack.c.l.b16 %v478
    %v1209 = vunpack.c.h.b16 %v478
    %v1210 = vunpack.c.l.b16 %v479
    %v1211 = vunpack.c.h.b16 %v479
    %v1212 = vunpack.c.l.b16 %v480
    %v1213 = vunpack.c.h.b16 %v480
    %v1214 = vunpack.c.l.b16 %v481
    %v1215 = vunpack.c.h.b16 %v481
    %v1216 = vunpack.c.l.b16 %v482
    %v1217 = vunpack.c.h.b16 %v482
    %v1218 = vunpack.c.l.b16 %v483
    %v1219 = vunpack.c.h.b16 %v483
    %v1220 = vunpack.c.l.b16 %v484
    %v1221 = vunpack.c.h.b16 %v484
    %v1222 = vunpack.c.l.b16 %v485
    %v1223 = vunpack.c.h.b16 %v485
    %v1224 = vunpack.c.l.b16 %v486
    %v1225 = vunpack.c.h.b16 %v486
    %v1226 = vunpack.c.l.b16 %v487
    %v1227 = vunpack.c.h.b16 %v487
    %v1228 = vunpack.c.l.b16 %v488
    %v1229 = vunpack.c.h.b16 %v488
    %v1230 = vunpack.c.l.b16 %v489
    %v1231 = vunpack.c.h.b16 %v489
    %v1232 = vunpack.c.l.b16 %v490
    %v1233 = vunpack.c.h.b16 %v490
    %v1234 = vunpack.c.l.b16 %v491
    %v1235 = vunpack.c.h.b16 %v491
    %v1236 = vunpack.c.l.b16 %v492
    %v1237 = vunpack.c.h.b16 %v492
    %v1238 = vunpack.c.l.b16 %v493
    %v1239 = vunpack.c.h.b16 %v493
    %v1240 = vunpack.c.l.b16 %v494
    %v1241 = vunpack.c.h.b16 %v494
    %v1242 = vunpack.c.l.b16 %v495
    %v1243 = vunpack.c.h.b16 %v495
    %v1244 = vunpack.c.l.b16 %v496
    %v1245 = vunpack.c.h.b16 %v496
    %v1246 = vunpack.c.l.b16 %v497
    %v1247 = vunpack.c.h.b16 %v497
    %v1248 = vunpack.c.l.b16 %v498
    %v1249 = vunpack.c.h.b16 %v498
    %v1250 = vunpack.c.l.b16 %v499
    %v1251 = vunpack.c.h.b16 %v499
    %v1252 = vunpack.c.l.b16 %v500
    %v1253 = vunpack.c.h.b16 %v500
    %v1254 = vunpack.c.l.b16 %v501
    %v1255 = vunpack.c.h.b16 %v501
    %v1256 = vunpack.c.l.b16 %v502
    %v1257 = vunpack.c.h.b16 %v502
    %v1258 = vunpack.c.l.b16 %v503
    %v1259 = vunpack.c.h.b16 %v503
    %v1260 = vunpack.c.l.b16 %v504
    %v1261 = vunpack.c.h.b16 %v504
    %v1262 = vunpack.c.l.b16 %v505
    %v1263 = vunpack.c.h.b16 %v505
    %v1264 = vunpack.c.l.b16 %v506
    %v1265 = vunpack.c.h.b16 %v506
    %v1266 = vunpack.c.l.b16 %v507
    %v1267 = vunpack.c.h.b16 %v507
    %v1268 = vunpack.c.l.b16 %v508
    %v1269 = vunpack.c.h.b16 %v508
    %v1270 = vunpack.c.l.b16 %v509
    %v1271 = vunpack.c.h.b16 %v509
    %v1272 = vunpack.c.l.b16 %v510
    %v1273 = vunpack.c.h.b16 %v510
    %v1274 = vunpack.c.l.b16 %v511
    %v1275 = vunpack.c.h.b16 %v511
    %v1276 = vunpack.c.l.b16 %v512
    %v1277 = vunpack.c.h.b16 %v512
    %v1278 = vunpack.c.l.b16 %v513
    %v1279 = vunpack.c.h.b16 %v513
    %v1280 = vunpack.c.l.b16 %v514
    %v1281 = vunpack.c.h.b16 %v514
    %v1282 = vunpack.c.l.b16 %v515
    %v1283 = vunpack.c.h.b16 %v515
    %v1284 = vunpack.c.l.b16 %v516
    %v1285 = vunpack.c.h.b16 %v516
    %v1286 = vunpack.c.l.b16 %v517
    %v1287 = vunpack.c.h.b16 %v517
    %v1288 = vunpack.c.l.b16 %v518
    %v1289 = vunpack.c.h.b16 %v518
    %v1290 = vunpack.c.l.b16 %v519
    %v1291 = vunpack.c.h.b16 %v519
    %v1292 = vunpack.c.l.b16 %v520
    %v1293 = vunpack.c.h.b16 %v520
    %v1294 = vunpack.c.l.b16 %v521
    %v1295 = vunpack.c.h.b16 %v521
    %v1296 = vunpack.c.l.b16 %v522
    %v1297 = vunpack.c.h.b16 %v522
    %v1298 = vunpack.c.l.b16 %v523
    %v1299 = vunpack.c.h.b16 %v523
    %v1300 = vunpack.c.l.b16 %v524
    %v1301 = vunpack.c.h.b16 %v524
    %v1302 = vunpack.c.l.b16 %v525
    %v1303 = vunpack.c.h.b16 %v525
    %v1304 = vunpack.c.l.b16 %v526
    %v1305 = vunpack.c.h.b16 %v526
    %v1306 = vunpack.c.l.b16 %v527
    %v1307 = vunpack.c.h.b16 %v527
    %v1308 = vunpack.c.l.b16 %v528
    %v1309 = vunpack.c.h.b16 %v528
    %v1310 = vunpack.c.l.b16 %v529
    %v1311 = vunpack.c.h.b16 %v529
    %v1312 = vunpack.c.l.b16 %v530
    %v1313 = vunpack.c.h.b16 %v530
    %v1314 = vunpack.c.l.b16 %v531
    %v1315 = vunpack.c.h.b16 %v531
    %v1316 = vunpack.c.l.b16 %v532
    %v1317 = vunpack.c.h.b16 %v532
    %v1318 = vunpack.c.l.b16 %v533
    %v1319 = vunpack.c.h.b16 %v533
    %v1320 = vunpack.c.l.b16 %v534
    %v1321 = vunpack.c.h.b16 %v534
    %v1322 = vunpack.c.l.b16 %v535
    %v1323 = vunpack.c.h.b16 %v535
    %v1324 = vunpack.c.l.b16 %v536
    %v1325 = vunpack.c.h.b16 %v536
    %v1326 = vunpack.c.l.b16 %v537
    %v1327 = vunpack.c.h.b16 %v537
    %v1328 = vpack.c.b16 %v820, %v816
    %v1329 = vpack.c.b16 %v821, %v817
    %v1330 = vpack.c.b16 %v822, %v818
    %v1331 = vpack.c.b16 %v823, %v819
    %v1332 = vpack.c.b16 %v828, %v824
    %v1333 = vpack.c.b16 %v829, %v825
    %v1334 = vpack.c.b16 %v830, %v826
    %v1335 = vpack.c.b16 %v831, %v827
    %v1336 = vpack.c.b16 %v836, %v832
    %v1337 = vpack.c.b16 %v837, %v833
    %v1338 = vpack.c.b16 %v838, %v834
    %v1339 = vpack.c.b16 %v839, %v835
    %v1340 = vpack.c.b16 %v844, %v840
    %v1341 = vpack.c.b16 %v845, %v841
    %v1342 = vpack.c.b16 %v846, %v842
    %v1343 = vpack.c.b16 %v847, %v843
    %v1344 = vpack.c.b16 %v852, %v848
    %v1345 = vpack.c.b16 %v853, %v849
    %v1346 = vpack.c.b16 %v854, %v850
    %v1347 = vpack.c.b16 %v855, %v851
    %v1348 = vpack.c.b16 %v860, %v856
    %v1349 = vpack.c.b16 %v861, %v857
    %v1350 = vpack.c.b16 %v862, %v858
    %v1351 = vpack.c.b16 %v863, %v859
    %v1352 = vpack.c.b16 %v868, %v864
    %v1353 = vpack.c.b16 %v869, %v865
    %v1354 = vpack.c.b16 %v870, %v866
    %v1355 = vpack.c.b16 %v871, %v867
    %v1356 = vpack.c.b16 %v876, %v872
    %v1357 = vpack.c.b16 %v877, %v873
    %v1358 = vpack.c.b16 %v878, %v874
    %v1359 = vpack.c.b16 %v879, %v875
    %v1360 = vpack.c.b16 %v884, %v880
    %v1361 = vpack.c.b16 %v885, %v881
    %v1362 = vpack.c.b16 %v886, %v882
    %v1363 = vpack.c.b16 %v887, %v883
    %v1364 = vpack.c.b16 %v892, %v888
    %v1365 = vpack.c.b16 %v893, %v889
    %v1366 = vpack.c.b16 %v894, %v890
    %v1367 = vpack.c.b16 %v895, %v891
    %v1368 = vpack.c.b16 %v900, %v896
    %v1369 = vpack.c.b16 %v901, %v897
    %v1370 = vpack.c.b16 %v902, %v898
    %v1371 = vpack.c.b16 %v903, %v899
    %v1372 = vpack.c.b16 %v908, %v904
    %v1373 = vpack.c.b16 %v909, %v905
    %v1374 = vpack.c.b16 %v910, %v906
    %v1375 = vpack.c.b16 %v911, %v907
    %v1376 = vpack.c.b16 %v916, %v912
    %v1377 = vpack.c.b16 %v917, %v913
    %v1378 = vpack.c.b16 %v918, %v914
    %v1379 = vpack.c.b16 %v919, %v915
    %v1380 = vpack.c.b16 %v924, %v920
    %v1381 = vpack.c.b16 %v925, %v921
    %v1382 = vpack.c.b16 %v926, %v922
    %v1383 = vpack.c.b16 %v927, %v923
    %v1384 = vpack.c.b16 %v932, %v928
    %v1385 = vpack.c.b16 %v933, %v929
    %v1386 = vpack.c.b16 %v934, %v930
    %v1387 = vpack.c.b16 %v935, %v931
    %v1388 = vpack.c.b16 %v940, %v936
    %v1389 = vpack.c.b16 %v941, %v937
    %v1390 = vpack.c.b16 %v942, %v938
    %v1391 = vpack.c.b16 %v943, %v939
    %v1392 = vpack.c.b16 %v948, %v944
    %v1393 = vpack.c.b16 %v949, %v945
    %v1394 = vpack.c.b16 %v950, %v946
    %v1395 = vpack.c.b16 %v951, %v947
    %v1396 = vpack.c.b16 %v956, %v952
    %v1397 = vpack.c.b16 %v957, %v953
    %v1398 = vpack.c.b16 %v958, %v954
    %v1399 = vpack.c.b16 %v959, %v955
    %v1400 = vpack.c.b16 %v964, %v960
    %v1401 = vpack.c.b16 %v965, %v961
    %v1402 = vpack.c.b16 %v966, %v962
    %v1403 = vpack.c.b16 %v967, %v963
    %v1404 = vpack.c.b16 %v972, %v968
    %v1405 = vpack.c.b16 %v973, %v969
    %v1406 = vpack.c.b16 %v974, %v970
    %v1407 = vpack.c.b16 %v975, %v971
    %v1408 = vpack.c.b16 %v980, %v976
    %v1409 = vpack.c.b16 %v981, %v977
    %v1410 = vpack.c.b16 %v982, %v978
    %v1411 = vpack.c.b16 %v983, %v979
    %v1412 = vpack.c.b16 %v988, %v984
    %v1413 = vpack.c.b16 %v989, %v985
    %v1414 = vpack.c.b16 %v990, %v986
    %v1415 = vpack.c.b16 %v991, %v987
    %v1416 = vpack.c.b16 %v996, %v992
    %v1417 = vpack.c.b16 %v997, %v993
    %v1418 = vpack.c.b16 %v998, %v994
    %v1419 = vpack.c.b16 %v999, %v995
    %v1420 = vpack.c.b16 %v1004, %v1000
    %v1421 = vpack.c.b16 %v1005, %v1001
    %v1422 = vpack.c.b16 %v1006, %v1002
    %v1423 = vpack.c.b16 %v1007, %v1003
    %v1424 = vpack.c.b16 %v1012, %v1008
    %v1425 = vpack.c.b16 %v1013, %v1009
    %v1426 = vpack.c.b16 %v1014, %v1010
    %v1427 = vpack.c.b16 %v1015, %v1011
    %v1428 = vpack.c.b16 %v1020, %v1016
    %v1429 = vpack.c.b16 %v1021, %v1017
    %v1430 = vpack.c.b16 %v1022, %v1018
    %v1431 = vpack.c.b16 %v1023, %v1019
    %v1432 = vpack.c.b16 %v1028, %v1024
    %v1433 = vpack.c.b16 %v1029, %v1025
    %v1434 = vpack.c.b16 %v1030, %v1026
    %v1435 = vpack.c.b16 %v1031, %v1027
    %v1436 = vpack.c.b16 %v1036, %v1032
    %v1437 = vpack.c.b16 %v1037, %v1033
    %v1438 = vpack.c.b16 %v1038, %v1034
    %v1439 = vpack.c.b16 %v1039, %v1035
    %v1440 = vpack.c.b16 %v1044, %v1040
    %v1441 = vpack.c.b16 %v1045, %v1041
    %v1442 = vpack.c.b16 %v1046, %v1042
    %v1443 = vpack.c.b16 %v1047, %v1043
    %v1444 = vpack.c.b16 %v1052, %v1048
    %v1445 = vpack.c.b16 %v1053, %v1049
    %v1446 = vpack.c.b16 %v1054, %v1050
    %v1447 = vpack.c.b16 %v1055, %v1051
    %v1448 = vpack.c.b16 %v1060, %v1056
    %v1449 = vpack.c.b16 %v1061, %v1057
    %v1450 = vpack.c.b16 %v1062, %v1058
    %v1451 = vpack.c.b16 %v1063, %v1059
    %v1452 = vpack.c.b16 %v1068, %v1064
    %v1453 = vpack.c.b16 %v1069, %v1065
    %v1454 = vpack.c.b16 %v1070, %v1066
    %v1455 = vpack.c.b16 %v1071, %v1067
    %v1456 = vpack.c.b16 %v1076, %v1072
    %v1457 = vpack.c.b16 %v1077, %v1073
    %v1458 = vpack.c.b16 %v1078, %v1074
    %v1459 = vpack.c.b16 %v1079, %v1075
    %v1460 = vpack.c.b16 %v1084, %v1080
    %v1461 = vpack.c.b16 %v1085, %v1081
    %v1462 = vpack.c.b16 %v1086, %v1082
    %v1463 = vpack.c.b16 %v1087, %v1083
    %v1464 = vpack.c.b16 %v1092, %v1088
    %v1465 = vpack.c.b16 %v1093, %v1089
    %v1466 = vpack.c.b16 %v1094, %v1090
    %v1467 = vpack.c.b16 %v1095, %v1091
    %v1468 = vpack.c.b16 %v1100, %v1096
    %v1469 = vpack.c.b16 %v1101, %v1097
    %v1470 = vpack.c.b16 %v1102, %v1098
    %v1471 = vpack.c.b16 %v1103, %v1099
    %v1472 = vpack.c.b16 %v1108, %v1104
    %v1473 = vpack.c.b16 %v1109, %v1105
    %v1474 = vpack.c.b16 %v1110, %v1106
    %v1475 = vpack.c.b16 %v1111, %v1107
    %v1476 = vpack.c.b16 %v1116, %v1112
    %v1477 = vpack.c.b16 %v1117, %v1113
    %v1478 = vpack.c.b16 %v1118, %v1114
    %v1479 = vpack.c.b16 %v1119, %v1115
    %v1480 = vpack.c.b16 %v1124, %v1120
    %v1481 = vpack.c.b16 %v1125, %v1121
    %v1482 = vpack.c.b16 %v1126, %v1122
    %v1483 = vpack.c.b16 %v1127, %v1123
    %v1484 = vpack.c.b16 %v1132, %v1128
    %v1485 = vpack.c.b16 %v1133, %v1129
    %v1486 = vpack.c.b16 %v1134, %v1130
    %v1487 = vpack.c.b16 %v1135, %v1131
    %v1488 = vpack.c.b16 %v1140, %v1136
    %v1489 = vpack.c.b16 %v1141, %v1137
    %v1490 = vpack.c.b16 %v1142, %v1138
    %v1491 = vpack.c.b16 %v1143, %v1139
    %v1492 = vpack.c.b16 %v1148, %v1144
    %v1493 = vpack.c.b16 %v1149, %v1145
    %v1494 = vpack.c.b16 %v1150, %v1146
    %v1495 = vpack.c.b16 %v1151, %v1147
    %v1496 = vpack.c.b16 %v1156, %v1152
    %v1497 = vpack.c.b16 %v1157, %v1153
    %v1498 = vpack.c.b16 %v1158, %v1154
    %v1499 = vpack.c.b16 %v1159, %v1155
    %v1500 = vpack.c.b16 %v1164, %v1160
    %v1501 = vpack.c.b16 %v1165, %v1161
    %v1502 = vpack.c.b16 %v1166, %v1162
    %v1503 = vpack.c.b16 %v1167, %v1163
    %v1504 = vpack.c.b16 %v1172, %v1168
    %v1505 = vpack.c.b16 %v1173, %v1169
    %v1506 = vpack.c.b16 %v1174, %v1170
    %v1507 = vpack.c.b16 %v1175, %v1171
    %v1508 = vpack.c.b16 %v1180, %v1176
    %v1509 = vpack.c.b16 %v1181, %v1177
    %v1510 = vpack.c.b16 %v1182, %v1178
    %v1511 = vpack.c.b16 %v1183, %v1179
    %v1512 = vpack.c.b16 %v1188, %v1184
    %v1513 = vpack.c.b16 %v1189, %v1185
    %v1514 = vpack.c.b16 %v1190, %v1186
    %v1515 = vpack.c.b16 %v1191, %v1187
    %v1516 = vpack.c.b16 %v1196, %v1192
    %v1517 = vpack.c.b16 %v1197, %v1193
    %v1518 = vpack.c.b16 %v1198, %v1194
    %v1519 = vpack.c.b16 %v1199, %v1195
    %v1520 = vpack.c.b16 %v1204, %v1200
    %v1521 = vpack.c.b16 %v1205, %v1201
    %v1522 = vpack.c.b16 %v1206, %v1202
    %v1523 = vpack.c.b16 %v1207, %v1203
    %v1524 = vpack.c.b16 %v1212, %v1208
    %v1525 = vpack.c.b16 %v1213, %v1209
    %v1526 = vpack.c.b16 %v1214, %v1210
    %v1527 = vpack.c.b16 %v1215, %v1211
    %v1528 = vpack.c.b16 %v1220, %v1216
    %v1529 = vpack.c.b16 %v1221, %v1217
    %v1530 = vpack.c.b16 %v1222, %v1218
    %v1531 = vpack.c.b16 %v1223, %v1219
    %v1532 = vpack.c.b16 %v1228, %v1224
    %v1533 = vpack.c.b16 %v1229, %v1225
    %v1534 = vpack.c.b16 %v1230, %v1226
    %v1535 = vpack.c.b16 %v1231, %v1227
    %v1536 = vpack.c.b16 %v1236, %v1232
    %v1537 = vpack.c.b16 %v1237, %v1233
    %v1538 = vpack.c.b16 %v1238, %v1234
    %v1539 = vpack.c.b16 %v1239, %v1235
    %v1540 = vpack.c.b16 %v1244, %v1240
    %v1541 = vpack.c.b16 %v1245, %v1241
    %v1542 = vpack.c.b16 %v1246, %v1242
    %v1543 = vpack.c.b16 %v1247, %v1243
    %v1544 = vpack.c.b16 %v1252, %v1248
    %v1545 = vpack.c.b16 %v1253, %v1249
    %v1546 = vpack.c.b16 %v1254, %v1250
    %v1547 = vpack.c.b16 %v1255, %v1251
    %v1548 = vpack.c.b16 %v1260, %v1256
    %v1549 = vpack.c.b16 %v1261, %v1257
    %v1550 = vpack.c.b16 %v1262, %v1258
    %v1551 = vpack.c.b16 %v1263, %v1259
    %v1552 = vpack.c.b16 %v1268, %v1264
    %v1553 = vpack.c.b16 %v1269, %v1265
    %v1554 = vpack.c.b16 %v1270, %v1266
    %v1555 = vpack.c.b16 %v1271, %v1267
    %v1556 = vpack.c.b16 %v1276, %v1272
    %v1557 = vpack.c.b16 %v1277, %v1273
    %v1558 = vpack.c.b16 %v1278, %v1274
    %v1559 = vpack.c.b16 %v1279, %v1275
    %v1560 = vpack.c.b16 %v1284, %v1280
    %v1561 = vpack.c.b16 %v1285, %v1281
    %v1562 = vpack.c.b16 %v1286, %v1282
    %v1563 = vpack.c.b16 %v1287, %v1283
    %v1564 = vpack.c.b16 %v1292, %v1288
    %v1565 = vpack.c.b16 %v1293, %v1289
    %v1566 = vpack.c.b16 %v1294, %v1290
    %v1567 = vpack.c.b16 %v1295, %v1291
    %v1568 = vpack.c.b16 %v1300, %v1296
    %v1569 = vpack.c.b16 %v1301, %v1297
    %v1570 = vpack.c.b16 %v1302, %v1298
    %v1571 = vpack.c.b16 %v1303, %v1299
    %v1572 = vpack.c.b16 %v1308, %v1304
    %v1573 = vpack.c.b16 %v1309, %v1305
    %v1574 = vpack.c.b16 %v1310, %v1306
    %v1575 = vpack.c.b16 %v1311, %v1307
    %v1576 = vpack.c.b16 %v1316, %v1312
    %v1577 = vpack.c.b16 %v1317, %v1313
    %v1578 = vpack.c.b16 %v1318, %v1314
    %v1579 = vpack.c.b16 %v1319, %v1315
    %v1580 = vpack.c.b16 %v1324, %v1320
    %v1581 = vpack.c.b16 %v1325, %v1321
    %v1582 = vpack.c.b16 %v1326, %v1322
    %v1583 = vpack.c.b16 %v1327, %v1323
    %1840 = vmatprep.subr.bf16.mxu0 %v1357
    %1841 = vmatpush1.bf16.msra.mxu0 %v1356
    %1842 = vmatprep.subr.bf16.mxu0 %v1353
    %1843 = vmatpush1.bf16.msra.mxu0 %v1352
    %1844 = vmatprep.subr.bf16.mxu0 %v1349
    %1845 = vmatpush1.bf16.msra.mxu0 %v1348
    %1846 = vmatprep.subr.bf16.mxu0 %v1345
    %1847 = vmatpush1.bf16.msra.mxu0 %v1344
    %1848 = vmatprep.subr.bf16.mxu0 %v1341
    %1849 = vmatpush1.bf16.msra.mxu0 %v1340
    %1850 = vmatprep.subr.bf16.mxu0 %v1337
    %1851 = vmatpush1.bf16.msra.mxu0 %v1336
    %1852 = vmatprep.subr.bf16.mxu0 %v1333
    %1853 = vmatpush1.bf16.msra.mxu0 %v1332
    %1854 = vmatprep.subr.bf16.mxu0 %v1329
    %1855 = vmatpush1.bf16.msra.mxu0 %v1328
    %1856 = vmatprep.subr.bf16.mxu0 %v1389
    %1857 = vmatpush2.bf16.msra.mxu0 %v1388
    %1858 = vmatprep.subr.bf16.mxu0 %v1385
    %1859 = vmatpush2.bf16.msra.mxu0 %v1384
    %1860 = vmatprep.subr.bf16.mxu0 %v1381
    %1861 = vmatpush2.bf16.msra.mxu0 %v1380
    %1862 = vmatprep.subr.bf16.mxu0 %v1377
    %1863 = vmatpush2.bf16.msra.mxu0 %v1376
    %1864 = vmatprep.subr.bf16.mxu0 %v1373
    %1865 = vmatpush2.bf16.msra.mxu0 %v1372
    %1866 = vmatprep.subr.bf16.mxu0 %v1369
    %1867 = vmatpush2.bf16.msra.mxu0 %v1368
    %1868 = vmatprep.subr.bf16.mxu0 %v1365
    %1869 = vmatpush2.bf16.msra.mxu0 %v1364
    %1870 = vmatprep.subr.bf16.mxu0 %v1361
    %1871 = vmatpush2.bf16.msra.mxu0 %v1360
    %1872 = vmatprep.mubr.bf16.mxu0 %v219
    %1873 = vmatmul.mubr.bf16.gmra.mxu0 %v218
    %v1874 = vpop.f32.mrf.mxu0
    %v1875 = vadd.f32 %v543, %v1874
    %v1876 = vpop.f32.mrf.mxu0
    %v1877 = vadd.f32 %v547, %v1876
    %v1878 = vpop.f32.mrf.mxu0
    %v1879 = vadd.f32 %v543, %v1878
    %v1880 = vpop.f32.mrf.mxu0
    %v1881 = vadd.f32 %v547, %v1880
    %1882 = vmatprep.mubr.bf16.mxu0 %v227
    %1883 = vmatmul.mubr.bf16.gmra.mxu0 %v226
    %v1884 = vpop.f32.mrf.mxu0
    %v1885 = vadd.f32 %v543, %v1884
    %v1886 = vpop.f32.mrf.mxu0
    %v1887 = vadd.f32 %v547, %v1886
    %v1888 = vpop.f32.mrf.mxu0
    %v1889 = vadd.f32 %v543, %v1888
    %v1890 = vpop.f32.mrf.mxu0
    %v1891 = vadd.f32 %v547, %v1890
    %1892 = vmatprep.mubr.bf16.mxu0 %v235
    %1893 = vmatmul.mubr.bf16.gmra.mxu0 %v234
    %v1894 = vpop.f32.mrf.mxu0
    %v1895 = vadd.f32 %v543, %v1894
    %v1896 = vpop.f32.mrf.mxu0
    %v1897 = vadd.f32 %v547, %v1896
    %v1898 = vpop.f32.mrf.mxu0
    %v1899 = vadd.f32 %v543, %v1898
    %v1900 = vpop.f32.mrf.mxu0
    %v1901 = vadd.f32 %v547, %v1900
    %1902 = vmatprep.mubr.bf16.mxu0 %v243
    %1903 = vmatmul.mubr.bf16.gmra.mxu0 %v242
    %v1904 = vpop.f32.mrf.mxu0
    %v1905 = vadd.f32 %v543, %v1904
    %v1906 = vpop.f32.mrf.mxu0
    %v1907 = vadd.f32 %v547, %v1906
    %v1908 = vpop.f32.mrf.mxu0
    %v1909 = vadd.f32 %v543, %v1908
    %v1910 = vpop.f32.mrf.mxu0
    %v1911 = vadd.f32 %v547, %v1910
    %1912 = vmatprep.mubr.bf16.mxu0 %v251
    %1913 = vmatmul.mubr.bf16.gmra.mxu0 %v250
    %v1914 = vpop.f32.mrf.mxu0
    %v1915 = vadd.f32 %v543, %v1914
    %v1916 = vpop.f32.mrf.mxu0
    %v1917 = vadd.f32 %v547, %v1916
    %v1918 = vpop.f32.mrf.mxu0
    %v1919 = vadd.f32 %v543, %v1918
    %v1920 = vpop.f32.mrf.mxu0
    %v1921 = vadd.f32 %v547, %v1920
    %1922 = vmatprep.mubr.bf16.mxu0 %v259
    %1923 = vmatmul.mubr.bf16.gmra.mxu0 %v258
    %v1924 = vpop.f32.mrf.mxu0
    %v1925 = vadd.f32 %v543, %v1924
    %v1926 = vpop.f32.mrf.mxu0
    %v1927 = vadd.f32 %v547, %v1926
    %v1928 = vpop.f32.mrf.mxu0
    %v1929 = vadd.f32 %v543, %v1928
    %v1930 = vpop.f32.mrf.mxu0
    %v1931 = vadd.f32 %v547, %v1930
    %1932 = vmatprep.mubr.bf16.mxu0 %v267
    %1933 = vmatmul.mubr.bf16.gmra.mxu0 %v266
    %v1934 = vpop.f32.mrf.mxu0
    %v1935 = vadd.f32 %v543, %v1934
    %v1936 = vpop.f32.mrf.mxu0
    %v1937 = vadd.f32 %v547, %v1936
    %v1938 = vpop.f32.mrf.mxu0
    %v1939 = vadd.f32 %v543, %v1938
    %v1940 = vpop.f32.mrf.mxu0
    %v1941 = vadd.f32 %v547, %v1940
    %1942 = vmatprep.mubr.bf16.mxu0 %v275
    %1943 = vmatmul.mubr.bf16.gmra.mxu0 %v274
    %v1944 = vpop.f32.mrf.mxu0
    %v1945 = vadd.f32 %v543, %v1944
    %v1946 = vpop.f32.mrf.mxu0
    %v1947 = vadd.f32 %v547, %v1946
    %v1948 = vpop.f32.mrf.mxu0
    %v1949 = vadd.f32 %v543, %v1948
    %v1950 = vpop.f32.mrf.mxu0
    %v1951 = vadd.f32 %v547, %v1950
    %1952 = vdwg.mxu0
    %1953 = vmatprep.subr.bf16.mxu0 %v1421
    %1954 = vmatpush1.bf16.msra.mxu0 %v1420
    %1955 = vmatprep.subr.bf16.mxu0 %v1417
    %1956 = vmatpush1.bf16.msra.mxu0 %v1416
    %1957 = vmatprep.subr.bf16.mxu0 %v1413
    %1958 = vmatpush1.bf16.msra.mxu0 %v1412
    %1959 = vmatprep.subr.bf16.mxu0 %v1409
    %1960 = vmatpush1.bf16.msra.mxu0 %v1408
    %1961 = vmatprep.subr.bf16.mxu0 %v1405
    %1962 = vmatpush1.bf16.msra.mxu0 %v1404
    %1963 = vmatprep.subr.bf16.mxu0 %v1401
    %1964 = vmatpush1.bf16.msra.mxu0 %v1400
    %1965 = vmatprep.subr.bf16.mxu0 %v1397
    %1966 = vmatpush1.bf16.msra.mxu0 %v1396
    %1967 = vmatprep.subr.bf16.mxu0 %v1393
    %1968 = vmatpush1.bf16.msra.mxu0 %v1392
    %1969 = vmatprep.subr.bf16.mxu0 %v1453
    %1970 = vmatpush2.bf16.msra.mxu0 %v1452
    %1971 = vmatprep.subr.bf16.mxu0 %v1449
    %1972 = vmatpush2.bf16.msra.mxu0 %v1448
    %1973 = vmatprep.subr.bf16.mxu0 %v1445
    %1974 = vmatpush2.bf16.msra.mxu0 %v1444
    %1975 = vmatprep.subr.bf16.mxu0 %v1441
    %1976 = vmatpush2.bf16.msra.mxu0 %v1440
    %1977 = vmatprep.subr.bf16.mxu0 %v1437
    %1978 = vmatpush2.bf16.msra.mxu0 %v1436
    %1979 = vmatprep.subr.bf16.mxu0 %v1433
    %1980 = vmatpush2.bf16.msra.mxu0 %v1432
    %1981 = vmatprep.subr.bf16.mxu0 %v1429
    %1982 = vmatpush2.bf16.msra.mxu0 %v1428
    %1983 = vmatprep.subr.bf16.mxu0 %v1425
    %1984 = vmatpush2.bf16.msra.mxu0 %v1424
    %1985 = vmatprep.mubr.bf16.mxu0 %v221
    %1986 = vmatmul.mubr.bf16.gmra.mxu0 %v220
    %v1987 = vpop.f32.mrf.mxu0
    %v1988 = vadd.f32 %v1875, %v1987
    %v1989 = vpop.f32.mrf.mxu0
    %v1990 = vadd.f32 %v1877, %v1989
    %v1991 = vpop.f32.mrf.mxu0
    %v1992 = vadd.f32 %v1879, %v1991
    %v1993 = vpop.f32.mrf.mxu0
    %v1994 = vadd.f32 %v1881, %v1993
    %1995 = vmatprep.mubr.bf16.mxu0 %v229
    %1996 = vmatmul.mubr.bf16.gmra.mxu0 %v228
    %v1997 = vpop.f32.mrf.mxu0
    %v1998 = vadd.f32 %v1885, %v1997
    %v1999 = vpop.f32.mrf.mxu0
    %v2000 = vadd.f32 %v1887, %v1999
    %v2001 = vpop.f32.mrf.mxu0
    %v2002 = vadd.f32 %v1889, %v2001
    %v2003 = vpop.f32.mrf.mxu0
    %v2004 = vadd.f32 %v1891, %v2003
    %2005 = vmatprep.mubr.bf16.mxu0 %v237
    %2006 = vmatmul.mubr.bf16.gmra.mxu0 %v236
    %v2007 = vpop.f32.mrf.mxu0
    %v2008 = vadd.f32 %v1895, %v2007
    %v2009 = vpop.f32.mrf.mxu0
    %v2010 = vadd.f32 %v1897, %v2009
    %v2011 = vpop.f32.mrf.mxu0
    %v2012 = vadd.f32 %v1899, %v2011
    %v2013 = vpop.f32.mrf.mxu0
    %v2014 = vadd.f32 %v1901, %v2013
    %2015 = vmatprep.mubr.bf16.mxu0 %v245
    %2016 = vmatmul.mubr.bf16.gmra.mxu0 %v244
    %v2017 = vpop.f32.mrf.mxu0
    %v2018 = vadd.f32 %v1905, %v2017
    %v2019 = vpop.f32.mrf.mxu0
    %v2020 = vadd.f32 %v1907, %v2019
    %v2021 = vpop.f32.mrf.mxu0
    %v2022 = vadd.f32 %v1909, %v2021
    %v2023 = vpop.f32.mrf.mxu0
    %v2024 = vadd.f32 %v1911, %v2023
    %2025 = vmatprep.mubr.bf16.mxu0 %v253
    %2026 = vmatmul.mubr.bf16.gmra.mxu0 %v252
    %v2027 = vpop.f32.mrf.mxu0
    %v2028 = vadd.f32 %v1915, %v2027
    %v2029 = vpop.f32.mrf.mxu0
    %v2030 = vadd.f32 %v1917, %v2029
    %v2031 = vpop.f32.mrf.mxu0
    %v2032 = vadd.f32 %v1919, %v2031
    %v2033 = vpop.f32.mrf.mxu0
    %v2034 = vadd.f32 %v1921, %v2033
    %2035 = vmatprep.mubr.bf16.mxu0 %v261
    %2036 = vmatmul.mubr.bf16.gmra.mxu0 %v260
    %v2037 = vpop.f32.mrf.mxu0
    %v2038 = vadd.f32 %v1925, %v2037
    %v2039 = vpop.f32.mrf.mxu0
    %v2040 = vadd.f32 %v1927, %v2039
    %v2041 = vpop.f32.mrf.mxu0
    %v2042 = vadd.f32 %v1929, %v2041
    %v2043 = vpop.f32.mrf.mxu0
    %v2044 = vadd.f32 %v1931, %v2043
    %2045 = vmatprep.mubr.bf16.mxu0 %v269
    %2046 = vmatmul.mubr.bf16.gmra.mxu0 %v268
    %v2047 = vpop.f32.mrf.mxu0
    %v2048 = vadd.f32 %v1935, %v2047
    %v2049 = vpop.f32.mrf.mxu0
    %v2050 = vadd.f32 %v1937, %v2049
    %v2051 = vpop.f32.mrf.mxu0
    %v2052 = vadd.f32 %v1939, %v2051
    %v2053 = vpop.f32.mrf.mxu0
    %v2054 = vadd.f32 %v1941, %v2053
    %2055 = vmatprep.mubr.bf16.mxu0 %v277
    %2056 = vmatmul.mubr.bf16.gmra.mxu0 %v276
    %v2057 = vpop.f32.mrf.mxu0
    %v2058 = vadd.f32 %v1945, %v2057
    %v2059 = vpop.f32.mrf.mxu0
    %v2060 = vadd.f32 %v1947, %v2059
    %v2061 = vpop.f32.mrf.mxu0
    %v2062 = vadd.f32 %v1949, %v2061
    %v2063 = vpop.f32.mrf.mxu0
    %v2064 = vadd.f32 %v1951, %v2063
    %2065 = vdwg.mxu0
    %2066 = vmatprep.subr.bf16.mxu0 %v1485
    %2067 = vmatpush1.bf16.msra.mxu0 %v1484
    %2068 = vmatprep.subr.bf16.mxu0 %v1481
    %2069 = vmatpush1.bf16.msra.mxu0 %v1480
    %2070 = vmatprep.subr.bf16.mxu0 %v1477
    %2071 = vmatpush1.bf16.msra.mxu0 %v1476
    %2072 = vmatprep.subr.bf16.mxu0 %v1473
    %2073 = vmatpush1.bf16.msra.mxu0 %v1472
    %2074 = vmatprep.subr.bf16.mxu0 %v1469
    %2075 = vmatpush1.bf16.msra.mxu0 %v1468
    %2076 = vmatprep.subr.bf16.mxu0 %v1465
    %2077 = vmatpush1.bf16.msra.mxu0 %v1464
    %2078 = vmatprep.subr.bf16.mxu0 %v1461
    %2079 = vmatpush1.bf16.msra.mxu0 %v1460
    %2080 = vmatprep.subr.bf16.mxu0 %v1457
    %2081 = vmatpush1.bf16.msra.mxu0 %v1456
    %2082 = vmatprep.subr.bf16.mxu0 %v1517
    %2083 = vmatpush2.bf16.msra.mxu0 %v1516
    %2084 = vmatprep.subr.bf16.mxu0 %v1513
    %2085 = vmatpush2.bf16.msra.mxu0 %v1512
    %2086 = vmatprep.subr.bf16.mxu0 %v1509
    %2087 = vmatpush2.bf16.msra.mxu0 %v1508
    %2088 = vmatprep.subr.bf16.mxu0 %v1505
    %2089 = vmatpush2.bf16.msra.mxu0 %v1504
    %2090 = vmatprep.subr.bf16.mxu0 %v1501
    %2091 = vmatpush2.bf16.msra.mxu0 %v1500
    %2092 = vmatprep.subr.bf16.mxu0 %v1497
    %2093 = vmatpush2.bf16.msra.mxu0 %v1496
    %2094 = vmatprep.subr.bf16.mxu0 %v1493
    %2095 = vmatpush2.bf16.msra.mxu0 %v1492
    %2096 = vmatprep.subr.bf16.mxu0 %v1489
    %2097 = vmatpush2.bf16.msra.mxu0 %v1488
    %2098 = vmatprep.mubr.bf16.mxu0 %v223
    %2099 = vmatmul.mubr.bf16.gmra.mxu0 %v222
    %v2100 = vpop.f32.mrf.mxu0
    %v2101 = vadd.f32 %v1988, %v2100
    %v2102 = vpop.f32.mrf.mxu0
    %v2103 = vadd.f32 %v1990, %v2102
    %v2104 = vpop.f32.mrf.mxu0
    %v2105 = vadd.f32 %v1992, %v2104
    %v2106 = vpop.f32.mrf.mxu0
    %v2107 = vadd.f32 %v1994, %v2106
    %2108 = vmatprep.mubr.bf16.mxu0 %v231
    %2109 = vmatmul.mubr.bf16.gmra.mxu0 %v230
    %v2110 = vpop.f32.mrf.mxu0
    %v2111 = vadd.f32 %v1998, %v2110
    %v2112 = vpop.f32.mrf.mxu0
    %v2113 = vadd.f32 %v2000, %v2112
    %v2114 = vpop.f32.mrf.mxu0
    %v2115 = vadd.f32 %v2002, %v2114
    %v2116 = vpop.f32.mrf.mxu0
    %v2117 = vadd.f32 %v2004, %v2116
    %2118 = vmatprep.mubr.bf16.mxu0 %v239
    %2119 = vmatmul.mubr.bf16.gmra.mxu0 %v238
    %v2120 = vpop.f32.mrf.mxu0
    %v2121 = vadd.f32 %v2008, %v2120
    %v2122 = vpop.f32.mrf.mxu0
    %v2123 = vadd.f32 %v2010, %v2122
    %v2124 = vpop.f32.mrf.mxu0
    %v2125 = vadd.f32 %v2012, %v2124
    %v2126 = vpop.f32.mrf.mxu0
    %v2127 = vadd.f32 %v2014, %v2126
    %2128 = vmatprep.mubr.bf16.mxu0 %v247
    %2129 = vmatmul.mubr.bf16.gmra.mxu0 %v246
    %v2130 = vpop.f32.mrf.mxu0
    %v2131 = vadd.f32 %v2018, %v2130
    %v2132 = vpop.f32.mrf.mxu0
    %v2133 = vadd.f32 %v2020, %v2132
    %v2134 = vpop.f32.mrf.mxu0
    %v2135 = vadd.f32 %v2022, %v2134
    %v2136 = vpop.f32.mrf.mxu0
    %v2137 = vadd.f32 %v2024, %v2136
    %2138 = vmatprep.mubr.bf16.mxu0 %v255
    %2139 = vmatmul.mubr.bf16.gmra.mxu0 %v254
    %v2140 = vpop.f32.mrf.mxu0
    %v2141 = vadd.f32 %v2028, %v2140
    %v2142 = vpop.f32.mrf.mxu0
    %v2143 = vadd.f32 %v2030, %v2142
    %v2144 = vpop.f32.mrf.mxu0
    %v2145 = vadd.f32 %v2032, %v2144
    %v2146 = vpop.f32.mrf.mxu0
    %v2147 = vadd.f32 %v2034, %v2146
    %2148 = vmatprep.mubr.bf16.mxu0 %v263
    %2149 = vmatmul.mubr.bf16.gmra.mxu0 %v262
    %v2150 = vpop.f32.mrf.mxu0
    %v2151 = vadd.f32 %v2038, %v2150
    %v2152 = vpop.f32.mrf.mxu0
    %v2153 = vadd.f32 %v2040, %v2152
    %v2154 = vpop.f32.mrf.mxu0
    %v2155 = vadd.f32 %v2042, %v2154
    %v2156 = vpop.f32.mrf.mxu0
    %v2157 = vadd.f32 %v2044, %v2156
    %2158 = vmatprep.mubr.bf16.mxu0 %v271
    %2159 = vmatmul.mubr.bf16.gmra.mxu0 %v270
    %v2160 = vpop.f32.mrf.mxu0
    %v2161 = vadd.f32 %v2048, %v2160
    %v2162 = vpop.f32.mrf.mxu0
    %v2163 = vadd.f32 %v2050, %v2162
    %v2164 = vpop.f32.mrf.mxu0
    %v2165 = vadd.f32 %v2052, %v2164
    %v2166 = vpop.f32.mrf.mxu0
    %v2167 = vadd.f32 %v2054, %v2166
    %2168 = vmatprep.mubr.bf16.mxu0 %v279
    %2169 = vmatmul.mubr.bf16.gmra.mxu0 %v278
    %v2170 = vpop.f32.mrf.mxu0
    %v2171 = vadd.f32 %v2058, %v2170
    %v2172 = vpop.f32.mrf.mxu0
    %v2173 = vadd.f32 %v2060, %v2172
    %v2174 = vpop.f32.mrf.mxu0
    %v2175 = vadd.f32 %v2062, %v2174
    %v2176 = vpop.f32.mrf.mxu0
    %v2177 = vadd.f32 %v2064, %v2176
    %2178 = vdwg.mxu0
    %2179 = vmatprep.subr.bf16.mxu0 %v1549
    %2180 = vmatpush1.bf16.msra.mxu0 %v1548
    %2181 = vmatprep.subr.bf16.mxu0 %v1545
    %2182 = vmatpush1.bf16.msra.mxu0 %v1544
    %2183 = vmatprep.subr.bf16.mxu0 %v1541
    %2184 = vmatpush1.bf16.msra.mxu0 %v1540
    %2185 = vmatprep.subr.bf16.mxu0 %v1537
    %2186 = vmatpush1.bf16.msra.mxu0 %v1536
    %2187 = vmatprep.subr.bf16.mxu0 %v1533
    %2188 = vmatpush1.bf16.msra.mxu0 %v1532
    %2189 = vmatprep.subr.bf16.mxu0 %v1529
    %2190 = vmatpush1.bf16.msra.mxu0 %v1528
    %2191 = vmatprep.subr.bf16.mxu0 %v1525
    %2192 = vmatpush1.bf16.msra.mxu0 %v1524
    %2193 = vmatprep.subr.bf16.mxu0 %v1521
    %2194 = vmatpush1.bf16.msra.mxu0 %v1520
    %2195 = vmatprep.subr.bf16.mxu0 %v1581
    %2196 = vmatpush2.bf16.msra.mxu0 %v1580
    %2197 = vmatprep.subr.bf16.mxu0 %v1577
    %2198 = vmatpush2.bf16.msra.mxu0 %v1576
    %2199 = vmatprep.subr.bf16.mxu0 %v1573
    %2200 = vmatpush2.bf16.msra.mxu0 %v1572
    %2201 = vmatprep.subr.bf16.mxu0 %v1569
    %2202 = vmatpush2.bf16.msra.mxu0 %v1568
    %2203 = vmatprep.subr.bf16.mxu0 %v1565
    %2204 = vmatpush2.bf16.msra.mxu0 %v1564
    %2205 = vmatprep.subr.bf16.mxu0 %v1561
    %2206 = vmatpush2.bf16.msra.mxu0 %v1560
    %2207 = vmatprep.subr.bf16.mxu0 %v1557
    %2208 = vmatpush2.bf16.msra.mxu0 %v1556
    %2209 = vmatprep.subr.bf16.mxu0 %v1553
    %2210 = vmatpush2.bf16.msra.mxu0 %v1552
    %2211 = vmatprep.mubr.bf16.mxu0 %v225
    %2212 = vmatmul.mubr.bf16.gmra.mxu0 %v224
    %v2213 = vpop.f32.mrf.mxu0
    %v2214 = vadd.f32 %v2101, %v2213
    %v2215 = vpop.f32.mrf.mxu0
    %v2216 = vadd.f32 %v2103, %v2215
    %v2217 = vpop.f32.mrf.mxu0
    %v2218 = vadd.f32 %v2105, %v2217
    %v2219 = vpop.f32.mrf.mxu0
    %v2220 = vadd.f32 %v2107, %v2219
    %2221 = vmatprep.mubr.bf16.mxu0 %v233
    %2222 = vmatmul.mubr.bf16.gmra.mxu0 %v232
    %v2223 = vpop.f32.mrf.mxu0
    %v2224 = vadd.f32 %v2111, %v2223
    %v2225 = vpop.f32.mrf.mxu0
    %v2226 = vadd.f32 %v2113, %v2225
    %v2227 = vpop.f32.mrf.mxu0
    %v2228 = vadd.f32 %v2115, %v2227
    %v2229 = vpop.f32.mrf.mxu0
    %v2230 = vadd.f32 %v2117, %v2229
    %2231 = vmatprep.mubr.bf16.mxu0 %v241
    %2232 = vmatmul.mubr.bf16.gmra.mxu0 %v240
    %v2233 = vpop.f32.mrf.mxu0
    %v2234 = vadd.f32 %v2121, %v2233
    %v2235 = vpop.f32.mrf.mxu0
    %v2236 = vadd.f32 %v2123, %v2235
    %v2237 = vpop.f32.mrf.mxu0
    %v2238 = vadd.f32 %v2125, %v2237
    %v2239 = vpop.f32.mrf.mxu0
    %v2240 = vadd.f32 %v2127, %v2239
    %2241 = vmatprep.mubr.bf16.mxu0 %v249
    %2242 = vmatmul.mubr.bf16.gmra.mxu0 %v248
    %v2243 = vpop.f32.mrf.mxu0
    %v2244 = vadd.f32 %v2131, %v2243
    %v2245 = vpop.f32.mrf.mxu0
    %v2246 = vadd.f32 %v2133, %v2245
    %v2247 = vpop.f32.mrf.mxu0
    %v2248 = vadd.f32 %v2135, %v2247
    %v2249 = vpop.f32.mrf.mxu0
    %v2250 = vadd.f32 %v2137, %v2249
    %2251 = vmatprep.mubr.bf16.mxu0 %v257
    %2252 = vmatmul.mubr.bf16.gmra.mxu0 %v256
    %v2253 = vpop.f32.mrf.mxu0
    %v2254 = vadd.f32 %v2141, %v2253
    %v2255 = vpop.f32.mrf.mxu0
    %v2256 = vadd.f32 %v2143, %v2255
    %v2257 = vpop.f32.mrf.mxu0
    %v2258 = vadd.f32 %v2145, %v2257
    %v2259 = vpop.f32.mrf.mxu0
    %v2260 = vadd.f32 %v2147, %v2259
    %2261 = vmatprep.mubr.bf16.mxu0 %v265
    %2262 = vmatmul.mubr.bf16.gmra.mxu0 %v264
    %v2263 = vpop.f32.mrf.mxu0
    %v2264 = vadd.f32 %v2151, %v2263
    %v2265 = vpop.f32.mrf.mxu0
    %v2266 = vadd.f32 %v2153, %v2265
    %v2267 = vpop.f32.mrf.mxu0
    %v2268 = vadd.f32 %v2155, %v2267
    %v2269 = vpop.f32.mrf.mxu0
    %v2270 = vadd.f32 %v2157, %v2269
    %2271 = vmatprep.mubr.bf16.mxu0 %v273
    %2272 = vmatmul.mubr.bf16.gmra.mxu0 %v272
    %v2273 = vpop.f32.mrf.mxu0
    %v2274 = vadd.f32 %v2161, %v2273
    %v2275 = vpop.f32.mrf.mxu0
    %v2276 = vadd.f32 %v2163, %v2275
    %v2277 = vpop.f32.mrf.mxu0
    %v2278 = vadd.f32 %v2165, %v2277
    %v2279 = vpop.f32.mrf.mxu0
    %v2280 = vadd.f32 %v2167, %v2279
    %2281 = vmatprep.mubr.bf16.mxu0 %v281
    %2282 = vmatmul.mubr.bf16.gmra.mxu0 %v280
    %v2283 = vpop.f32.mrf.mxu0
    %v2284 = vadd.f32 %v2171, %v2283
    %v2285 = vpop.f32.mrf.mxu0
    %v2286 = vadd.f32 %v2173, %v2285
    %v2287 = vpop.f32.mrf.mxu0
    %v2288 = vadd.f32 %v2175, %v2287
    %v2289 = vpop.f32.mrf.mxu0
    %v2290 = vadd.f32 %v2177, %v2289
    %2291 = vdwg.mxu0
    %2292 = vmatprep.subr.bf16.mxu0 %v1359
    %2293 = vmatpush1.bf16.msra.mxu0 %v1358
    %2294 = vmatprep.subr.bf16.mxu0 %v1355
    %2295 = vmatpush1.bf16.msra.mxu0 %v1354
    %2296 = vmatprep.subr.bf16.mxu0 %v1351
    %2297 = vmatpush1.bf16.msra.mxu0 %v1350
    %2298 = vmatprep.subr.bf16.mxu0 %v1347
    %2299 = vmatpush1.bf16.msra.mxu0 %v1346
    %2300 = vmatprep.subr.bf16.mxu0 %v1343
    %2301 = vmatpush1.bf16.msra.mxu0 %v1342
    %2302 = vmatprep.subr.bf16.mxu0 %v1339
    %2303 = vmatpush1.bf16.msra.mxu0 %v1338
    %2304 = vmatprep.subr.bf16.mxu0 %v1335
    %2305 = vmatpush1.bf16.msra.mxu0 %v1334
    %2306 = vmatprep.subr.bf16.mxu0 %v1331
    %2307 = vmatpush1.bf16.msra.mxu0 %v1330
    %2308 = vmatprep.subr.bf16.mxu0 %v1391
    %2309 = vmatpush2.bf16.msra.mxu0 %v1390
    %2310 = vmatprep.subr.bf16.mxu0 %v1387
    %2311 = vmatpush2.bf16.msra.mxu0 %v1386
    %2312 = vmatprep.subr.bf16.mxu0 %v1383
    %2313 = vmatpush2.bf16.msra.mxu0 %v1382
    %2314 = vmatprep.subr.bf16.mxu0 %v1379
    %2315 = vmatpush2.bf16.msra.mxu0 %v1378
    %2316 = vmatprep.subr.bf16.mxu0 %v1375
    %2317 = vmatpush2.bf16.msra.mxu0 %v1374
    %2318 = vmatprep.subr.bf16.mxu0 %v1371
    %2319 = vmatpush2.bf16.msra.mxu0 %v1370
    %2320 = vmatprep.subr.bf16.mxu0 %v1367
    %2321 = vmatpush2.bf16.msra.mxu0 %v1366
    %2322 = vmatprep.subr.bf16.mxu0 %v1363
    %2323 = vmatpush2.bf16.msra.mxu0 %v1362
    %2324 = vmatprep.mubr.bf16.mxu0 %v219
    %2325 = vmatmul.mubr.bf16.gmra.mxu0 %v218
    %v2326 = vpop.f32.mrf.mxu0
    %v2327 = vadd.f32 %v551, %v2326
    %v2328 = vpop.f32.mrf.mxu0
    %v2329 = vadd.f32 %v555, %v2328
    %v2330 = vpop.f32.mrf.mxu0
    %v2331 = vadd.f32 %v551, %v2330
    %v2332 = vpop.f32.mrf.mxu0
    %v2333 = vadd.f32 %v555, %v2332
    %2334 = vmatprep.mubr.bf16.mxu0 %v227
    %2335 = vmatmul.mubr.bf16.gmra.mxu0 %v226
    %v2336 = vpop.f32.mrf.mxu0
    %v2337 = vadd.f32 %v551, %v2336
    %v2338 = vpop.f32.mrf.mxu0
    %v2339 = vadd.f32 %v555, %v2338
    %v2340 = vpop.f32.mrf.mxu0
    %v2341 = vadd.f32 %v551, %v2340
    %v2342 = vpop.f32.mrf.mxu0
    %v2343 = vadd.f32 %v555, %v2342
    %2344 = vmatprep.mubr.bf16.mxu0 %v235
    %2345 = vmatmul.mubr.bf16.gmra.mxu0 %v234
    %v2346 = vpop.f32.mrf.mxu0
    %v2347 = vadd.f32 %v551, %v2346
    %v2348 = vpop.f32.mrf.mxu0
    %v2349 = vadd.f32 %v555, %v2348
    %v2350 = vpop.f32.mrf.mxu0
    %v2351 = vadd.f32 %v551, %v2350
    %v2352 = vpop.f32.mrf.mxu0
    %v2353 = vadd.f32 %v555, %v2352
    %2354 = vmatprep.mubr.bf16.mxu0 %v243
    %2355 = vmatmul.mubr.bf16.gmra.mxu0 %v242
    %v2356 = vpop.f32.mrf.mxu0
    %v2357 = vadd.f32 %v551, %v2356
    %v2358 = vpop.f32.mrf.mxu0
    %v2359 = vadd.f32 %v555, %v2358
    %v2360 = vpop.f32.mrf.mxu0
    %v2361 = vadd.f32 %v551, %v2360
    %v2362 = vpop.f32.mrf.mxu0
    %v2363 = vadd.f32 %v555, %v2362
    %2364 = vmatprep.mubr.bf16.mxu0 %v251
    %2365 = vmatmul.mubr.bf16.gmra.mxu0 %v250
    %v2366 = vpop.f32.mrf.mxu0
    %v2367 = vadd.f32 %v551, %v2366
    %v2368 = vpop.f32.mrf.mxu0
    %v2369 = vadd.f32 %v555, %v2368
    %v2370 = vpop.f32.mrf.mxu0
    %v2371 = vadd.f32 %v551, %v2370
    %v2372 = vpop.f32.mrf.mxu0
    %v2373 = vadd.f32 %v555, %v2372
    %2374 = vmatprep.mubr.bf16.mxu0 %v259
    %2375 = vmatmul.mubr.bf16.gmra.mxu0 %v258
    %v2376 = vpop.f32.mrf.mxu0
    %v2377 = vadd.f32 %v551, %v2376
    %v2378 = vpop.f32.mrf.mxu0
    %v2379 = vadd.f32 %v555, %v2378
    %v2380 = vpop.f32.mrf.mxu0
    %v2381 = vadd.f32 %v551, %v2380
    %v2382 = vpop.f32.mrf.mxu0
    %v2383 = vadd.f32 %v555, %v2382
    %2384 = vmatprep.mubr.bf16.mxu0 %v267
    %2385 = vmatmul.mubr.bf16.gmra.mxu0 %v266
    %v2386 = vpop.f32.mrf.mxu0
    %v2387 = vadd.f32 %v551, %v2386
    %v2388 = vpop.f32.mrf.mxu0
    %v2389 = vadd.f32 %v555, %v2388
    %v2390 = vpop.f32.mrf.mxu0
    %v2391 = vadd.f32 %v551, %v2390
    %v2392 = vpop.f32.mrf.mxu0
    %v2393 = vadd.f32 %v555, %v2392
    %2394 = vmatprep.mubr.bf16.mxu0 %v275
    %2395 = vmatmul.mubr.bf16.gmra.mxu0 %v274
    %v2396 = vpop.f32.mrf.mxu0
    %v2397 = vadd.f32 %v551, %v2396
    %v2398 = vpop.f32.mrf.mxu0
    %v2399 = vadd.f32 %v555, %v2398
    %v2400 = vpop.f32.mrf.mxu0
    %v2401 = vadd.f32 %v551, %v2400
    %v2402 = vpop.f32.mrf.mxu0
    %v2403 = vadd.f32 %v555, %v2402
    %2404 = vdwg.mxu0
    %2405 = vmatprep.subr.bf16.mxu0 %v1423
    %2406 = vmatpush1.bf16.msra.mxu0 %v1422
    %2407 = vmatprep.subr.bf16.mxu0 %v1419
    %2408 = vmatpush1.bf16.msra.mxu0 %v1418
    %2409 = vmatprep.subr.bf16.mxu0 %v1415
    %2410 = vmatpush1.bf16.msra.mxu0 %v1414
    %2411 = vmatprep.subr.bf16.mxu0 %v1411
    %2412 = vmatpush1.bf16.msra.mxu0 %v1410
    %2413 = vmatprep.subr.bf16.mxu0 %v1407
    %2414 = vmatpush1.bf16.msra.mxu0 %v1406
    %2415 = vmatprep.subr.bf16.mxu0 %v1403
    %2416 = vmatpush1.bf16.msra.mxu0 %v1402
    %2417 = vmatprep.subr.bf16.mxu0 %v1399
    %2418 = vmatpush1.bf16.msra.mxu0 %v1398
    %2419 = vmatprep.subr.bf16.mxu0 %v1395
    %2420 = vmatpush1.bf16.msra.mxu0 %v1394
    %2421 = vmatprep.subr.bf16.mxu0 %v1455
    %2422 = vmatpush2.bf16.msra.mxu0 %v1454
    %2423 = vmatprep.subr.bf16.mxu0 %v1451
    %2424 = vmatpush2.bf16.msra.mxu0 %v1450
    %2425 = vmatprep.subr.bf16.mxu0 %v1447
    %2426 = vmatpush2.bf16.msra.mxu0 %v1446
    %2427 = vmatprep.subr.bf16.mxu0 %v1443
    %2428 = vmatpush2.bf16.msra.mxu0 %v1442
    %2429 = vmatprep.subr.bf16.mxu0 %v1439
    %2430 = vmatpush2.bf16.msra.mxu0 %v1438
    %2431 = vmatprep.subr.bf16.mxu0 %v1435
    %2432 = vmatpush2.bf16.msra.mxu0 %v1434
    %2433 = vmatprep.subr.bf16.mxu0 %v1431
    %2434 = vmatpush2.bf16.msra.mxu0 %v1430
    %2435 = vmatprep.subr.bf16.mxu0 %v1427
    %2436 = vmatpush2.bf16.msra.mxu0 %v1426
    %2437 = vmatprep.mubr.bf16.mxu0 %v221
    %2438 = vmatmul.mubr.bf16.gmra.mxu0 %v220
    %v2439 = vpop.f32.mrf.mxu0
    %v2440 = vadd.f32 %v2327, %v2439
    %v2441 = vpop.f32.mrf.mxu0
    %v2442 = vadd.f32 %v2329, %v2441
    %v2443 = vpop.f32.mrf.mxu0
    %v2444 = vadd.f32 %v2331, %v2443
    %v2445 = vpop.f32.mrf.mxu0
    %v2446 = vadd.f32 %v2333, %v2445
    %2447 = vmatprep.mubr.bf16.mxu0 %v229
    %2448 = vmatmul.mubr.bf16.gmra.mxu0 %v228
    %v2449 = vpop.f32.mrf.mxu0
    %v2450 = vadd.f32 %v2337, %v2449
    %v2451 = vpop.f32.mrf.mxu0
    %v2452 = vadd.f32 %v2339, %v2451
    %v2453 = vpop.f32.mrf.mxu0
    %v2454 = vadd.f32 %v2341, %v2453
    %v2455 = vpop.f32.mrf.mxu0
    %v2456 = vadd.f32 %v2343, %v2455
    %2457 = vmatprep.mubr.bf16.mxu0 %v237
    %2458 = vmatmul.mubr.bf16.gmra.mxu0 %v236
    %v2459 = vpop.f32.mrf.mxu0
    %v2460 = vadd.f32 %v2347, %v2459
    %v2461 = vpop.f32.mrf.mxu0
    %v2462 = vadd.f32 %v2349, %v2461
    %v2463 = vpop.f32.mrf.mxu0
    %v2464 = vadd.f32 %v2351, %v2463
    %v2465 = vpop.f32.mrf.mxu0
    %v2466 = vadd.f32 %v2353, %v2465
    %2467 = vmatprep.mubr.bf16.mxu0 %v245
    %2468 = vmatmul.mubr.bf16.gmra.mxu0 %v244
    %v2469 = vpop.f32.mrf.mxu0
    %v2470 = vadd.f32 %v2357, %v2469
    %v2471 = vpop.f32.mrf.mxu0
    %v2472 = vadd.f32 %v2359, %v2471
    %v2473 = vpop.f32.mrf.mxu0
    %v2474 = vadd.f32 %v2361, %v2473
    %v2475 = vpop.f32.mrf.mxu0
    %v2476 = vadd.f32 %v2363, %v2475
    %2477 = vmatprep.mubr.bf16.mxu0 %v253
    %2478 = vmatmul.mubr.bf16.gmra.mxu0 %v252
    %v2479 = vpop.f32.mrf.mxu0
    %v2480 = vadd.f32 %v2367, %v2479
    %v2481 = vpop.f32.mrf.mxu0
    %v2482 = vadd.f32 %v2369, %v2481
    %v2483 = vpop.f32.mrf.mxu0
    %v2484 = vadd.f32 %v2371, %v2483
    %v2485 = vpop.f32.mrf.mxu0
    %v2486 = vadd.f32 %v2373, %v2485
    %2487 = vmatprep.mubr.bf16.mxu0 %v261
    %2488 = vmatmul.mubr.bf16.gmra.mxu0 %v260
    %v2489 = vpop.f32.mrf.mxu0
    %v2490 = vadd.f32 %v2377, %v2489
    %v2491 = vpop.f32.mrf.mxu0
    %v2492 = vadd.f32 %v2379, %v2491
    %v2493 = vpop.f32.mrf.mxu0
    %v2494 = vadd.f32 %v2381, %v2493
    %v2495 = vpop.f32.mrf.mxu0
    %v2496 = vadd.f32 %v2383, %v2495
    %2497 = vmatprep.mubr.bf16.mxu0 %v269
    %2498 = vmatmul.mubr.bf16.gmra.mxu0 %v268
    %v2499 = vpop.f32.mrf.mxu0
    %v2500 = vadd.f32 %v2387, %v2499
    %v2501 = vpop.f32.mrf.mxu0
    %v2502 = vadd.f32 %v2389, %v2501
    %v2503 = vpop.f32.mrf.mxu0
    %v2504 = vadd.f32 %v2391, %v2503
    %v2505 = vpop.f32.mrf.mxu0
    %v2506 = vadd.f32 %v2393, %v2505
    %2507 = vmatprep.mubr.bf16.mxu0 %v277
    %2508 = vmatmul.mubr.bf16.gmra.mxu0 %v276
    %v2509 = vpop.f32.mrf.mxu0
    %v2510 = vadd.f32 %v2397, %v2509
    %v2511 = vpop.f32.mrf.mxu0
    %v2512 = vadd.f32 %v2399, %v2511
    %v2513 = vpop.f32.mrf.mxu0
    %v2514 = vadd.f32 %v2401, %v2513
    %v2515 = vpop.f32.mrf.mxu0
    %v2516 = vadd.f32 %v2403, %v2515
    %2517 = vdwg.mxu0
    %2518 = vmatprep.subr.bf16.mxu0 %v1487
    %2519 = vmatpush1.bf16.msra.mxu0 %v1486
    %2520 = vmatprep.subr.bf16.mxu0 %v1483
    %2521 = vmatpush1.bf16.msra.mxu0 %v1482
    %2522 = vmatprep.subr.bf16.mxu0 %v1479
    %2523 = vmatpush1.bf16.msra.mxu0 %v1478
    %2524 = vmatprep.subr.bf16.mxu0 %v1475
    %2525 = vmatpush1.bf16.msra.mxu0 %v1474
    %2526 = vmatprep.subr.bf16.mxu0 %v1471
    %2527 = vmatpush1.bf16.msra.mxu0 %v1470
    %2528 = vmatprep.subr.bf16.mxu0 %v1467
    %2529 = vmatpush1.bf16.msra.mxu0 %v1466
    %2530 = vmatprep.subr.bf16.mxu0 %v1463
    %2531 = vmatpush1.bf16.msra.mxu0 %v1462
    %2532 = vmatprep.subr.bf16.mxu0 %v1459
    %2533 = vmatpush1.bf16.msra.mxu0 %v1458
    %2534 = vmatprep.subr.bf16.mxu0 %v1519
    %2535 = vmatpush2.bf16.msra.mxu0 %v1518
    %2536 = vmatprep.subr.bf16.mxu0 %v1515
    %2537 = vmatpush2.bf16.msra.mxu0 %v1514
    %2538 = vmatprep.subr.bf16.mxu0 %v1511
    %2539 = vmatpush2.bf16.msra.mxu0 %v1510
    %2540 = vmatprep.subr.bf16.mxu0 %v1507
    %2541 = vmatpush2.bf16.msra.mxu0 %v1506
    %2542 = vmatprep.subr.bf16.mxu0 %v1503
    %2543 = vmatpush2.bf16.msra.mxu0 %v1502
    %2544 = vmatprep.subr.bf16.mxu0 %v1499
    %2545 = vmatpush2.bf16.msra.mxu0 %v1498
    %2546 = vmatprep.subr.bf16.mxu0 %v1495
    %2547 = vmatpush2.bf16.msra.mxu0 %v1494
    %2548 = vmatprep.subr.bf16.mxu0 %v1491
    %2549 = vmatpush2.bf16.msra.mxu0 %v1490
    %2550 = vmatprep.mubr.bf16.mxu0 %v223
    %2551 = vmatmul.mubr.bf16.gmra.mxu0 %v222
    %v2552 = vpop.f32.mrf.mxu0
    %v2553 = vadd.f32 %v2440, %v2552
    %v2554 = vpop.f32.mrf.mxu0
    %v2555 = vadd.f32 %v2442, %v2554
    %v2556 = vpop.f32.mrf.mxu0
    %v2557 = vadd.f32 %v2444, %v2556
    %v2558 = vpop.f32.mrf.mxu0
    %v2559 = vadd.f32 %v2446, %v2558
    %2560 = vmatprep.mubr.bf16.mxu0 %v231
    %2561 = vmatmul.mubr.bf16.gmra.mxu0 %v230
    %v2562 = vpop.f32.mrf.mxu0
    %v2563 = vadd.f32 %v2450, %v2562
    %v2564 = vpop.f32.mrf.mxu0
    %v2565 = vadd.f32 %v2452, %v2564
    %v2566 = vpop.f32.mrf.mxu0
    %v2567 = vadd.f32 %v2454, %v2566
    %v2568 = vpop.f32.mrf.mxu0
    %v2569 = vadd.f32 %v2456, %v2568
    %2570 = vmatprep.mubr.bf16.mxu0 %v239
    %2571 = vmatmul.mubr.bf16.gmra.mxu0 %v238
    %v2572 = vpop.f32.mrf.mxu0
    %v2573 = vadd.f32 %v2460, %v2572
    %v2574 = vpop.f32.mrf.mxu0
    %v2575 = vadd.f32 %v2462, %v2574
    %v2576 = vpop.f32.mrf.mxu0
    %v2577 = vadd.f32 %v2464, %v2576
    %v2578 = vpop.f32.mrf.mxu0
    %v2579 = vadd.f32 %v2466, %v2578
    %2580 = vmatprep.mubr.bf16.mxu0 %v247
    %2581 = vmatmul.mubr.bf16.gmra.mxu0 %v246
    %v2582 = vpop.f32.mrf.mxu0
    %v2583 = vadd.f32 %v2470, %v2582
    %v2584 = vpop.f32.mrf.mxu0
    %v2585 = vadd.f32 %v2472, %v2584
    %v2586 = vpop.f32.mrf.mxu0
    %v2587 = vadd.f32 %v2474, %v2586
    %v2588 = vpop.f32.mrf.mxu0
    %v2589 = vadd.f32 %v2476, %v2588
    %2590 = vmatprep.mubr.bf16.mxu0 %v255
    %2591 = vmatmul.mubr.bf16.gmra.mxu0 %v254
    %v2592 = vpop.f32.mrf.mxu0
    %v2593 = vadd.f32 %v2480, %v2592
    %v2594 = vpop.f32.mrf.mxu0
    %v2595 = vadd.f32 %v2482, %v2594
    %v2596 = vpop.f32.mrf.mxu0
    %v2597 = vadd.f32 %v2484, %v2596
    %v2598 = vpop.f32.mrf.mxu0
    %v2599 = vadd.f32 %v2486, %v2598
    %2600 = vmatprep.mubr.bf16.mxu0 %v263
    %2601 = vmatmul.mubr.bf16.gmra.mxu0 %v262
    %v2602 = vpop.f32.mrf.mxu0
    %v2603 = vadd.f32 %v2490, %v2602
    %v2604 = vpop.f32.mrf.mxu0
    %v2605 = vadd.f32 %v2492, %v2604
    %v2606 = vpop.f32.mrf.mxu0
    %v2607 = vadd.f32 %v2494, %v2606
    %v2608 = vpop.f32.mrf.mxu0
    %v2609 = vadd.f32 %v2496, %v2608
    %2610 = vmatprep.mubr.bf16.mxu0 %v271
    %2611 = vmatmul.mubr.bf16.gmra.mxu0 %v270
    %v2612 = vpop.f32.mrf.mxu0
    %v2613 = vadd.f32 %v2500, %v2612
    %v2614 = vpop.f32.mrf.mxu0
    %v2615 = vadd.f32 %v2502, %v2614
    %v2616 = vpop.f32.mrf.mxu0
    %v2617 = vadd.f32 %v2504, %v2616
    %v2618 = vpop.f32.mrf.mxu0
    %v2619 = vadd.f32 %v2506, %v2618
    %2620 = vmatprep.mubr.bf16.mxu0 %v279
    %2621 = vmatmul.mubr.bf16.gmra.mxu0 %v278
    %v2622 = vpop.f32.mrf.mxu0
    %v2623 = vadd.f32 %v2510, %v2622
    %v2624 = vpop.f32.mrf.mxu0
    %v2625 = vadd.f32 %v2512, %v2624
    %v2626 = vpop.f32.mrf.mxu0
    %v2627 = vadd.f32 %v2514, %v2626
    %v2628 = vpop.f32.mrf.mxu0
    %v2629 = vadd.f32 %v2516, %v2628
    %2630 = vdwg.mxu0
    %2631 = vmatprep.subr.bf16.mxu0 %v1551
    %2632 = vmatpush1.bf16.msra.mxu0 %v1550
    %2633 = vmatprep.subr.bf16.mxu0 %v1547
    %2634 = vmatpush1.bf16.msra.mxu0 %v1546
    %2635 = vmatprep.subr.bf16.mxu0 %v1543
    %2636 = vmatpush1.bf16.msra.mxu0 %v1542
    %2637 = vmatprep.subr.bf16.mxu0 %v1539
    %2638 = vmatpush1.bf16.msra.mxu0 %v1538
    %2639 = vmatprep.subr.bf16.mxu0 %v1535
    %2640 = vmatpush1.bf16.msra.mxu0 %v1534
    %2641 = vmatprep.subr.bf16.mxu0 %v1531
    %2642 = vmatpush1.bf16.msra.mxu0 %v1530
    %2643 = vmatprep.subr.bf16.mxu0 %v1527
    %2644 = vmatpush1.bf16.msra.mxu0 %v1526
    %2645 = vmatprep.subr.bf16.mxu0 %v1523
    %2646 = vmatpush1.bf16.msra.mxu0 %v1522
    %2647 = vmatprep.subr.bf16.mxu0 %v1583
    %2648 = vmatpush2.bf16.msra.mxu0 %v1582
    %2649 = vmatprep.subr.bf16.mxu0 %v1579
    %2650 = vmatpush2.bf16.msra.mxu0 %v1578
    %2651 = vmatprep.subr.bf16.mxu0 %v1575
    %2652 = vmatpush2.bf16.msra.mxu0 %v1574
    %2653 = vmatprep.subr.bf16.mxu0 %v1571
    %2654 = vmatpush2.bf16.msra.mxu0 %v1570
    %2655 = vmatprep.subr.bf16.mxu0 %v1567
    %2656 = vmatpush2.bf16.msra.mxu0 %v1566
    %2657 = vmatprep.subr.bf16.mxu0 %v1563
    %2658 = vmatpush2.bf16.msra.mxu0 %v1562
    %2659 = vmatprep.subr.bf16.mxu0 %v1559
    %2660 = vmatpush2.bf16.msra.mxu0 %v1558
    %2661 = vmatprep.subr.bf16.mxu0 %v1555
    %2662 = vmatpush2.bf16.msra.mxu0 %v1554
    %2663 = vmatprep.mubr.bf16.mxu0 %v225
    %2664 = vmatmul.mubr.bf16.gmra.mxu0 %v224
    %v2665 = vpop.f32.mrf.mxu0
    %v2666 = vadd.f32 %v2553, %v2665
    %v2667 = vpop.f32.mrf.mxu0
    %v2668 = vadd.f32 %v2555, %v2667
    %v2669 = vpop.f32.mrf.mxu0
    %v2670 = vadd.f32 %v2557, %v2669
    %v2671 = vpop.f32.mrf.mxu0
    %v2672 = vadd.f32 %v2559, %v2671
    %2673 = vmatprep.mubr.bf16.mxu0 %v233
    %2674 = vmatmul.mubr.bf16.gmra.mxu0 %v232
    %v2675 = vpop.f32.mrf.mxu0
    %v2676 = vadd.f32 %v2563, %v2675
    %v2677 = vpop.f32.mrf.mxu0
    %v2678 = vadd.f32 %v2565, %v2677
    %v2679 = vpop.f32.mrf.mxu0
    %v2680 = vadd.f32 %v2567, %v2679
    %v2681 = vpop.f32.mrf.mxu0
    %v2682 = vadd.f32 %v2569, %v2681
    %2683 = vmatprep.mubr.bf16.mxu0 %v241
    %2684 = vmatmul.mubr.bf16.gmra.mxu0 %v240
    %v2685 = vpop.f32.mrf.mxu0
    %v2686 = vadd.f32 %v2573, %v2685
    %v2687 = vpop.f32.mrf.mxu0
    %v2688 = vadd.f32 %v2575, %v2687
    %v2689 = vpop.f32.mrf.mxu0
    %v2690 = vadd.f32 %v2577, %v2689
    %v2691 = vpop.f32.mrf.mxu0
    %v2692 = vadd.f32 %v2579, %v2691
    %2693 = vmatprep.mubr.bf16.mxu0 %v249
    %2694 = vmatmul.mubr.bf16.gmra.mxu0 %v248
    %v2695 = vpop.f32.mrf.mxu0
    %v2696 = vadd.f32 %v2583, %v2695
    %v2697 = vpop.f32.mrf.mxu0
    %v2698 = vadd.f32 %v2585, %v2697
    %v2699 = vpop.f32.mrf.mxu0
    %v2700 = vadd.f32 %v2587, %v2699
    %v2701 = vpop.f32.mrf.mxu0
    %v2702 = vadd.f32 %v2589, %v2701
    %2703 = vmatprep.mubr.bf16.mxu0 %v257
    %2704 = vmatmul.mubr.bf16.gmra.mxu0 %v256
    %v2705 = vpop.f32.mrf.mxu0
    %v2706 = vadd.f32 %v2593, %v2705
    %v2707 = vpop.f32.mrf.mxu0
    %v2708 = vadd.f32 %v2595, %v2707
    %v2709 = vpop.f32.mrf.mxu0
    %v2710 = vadd.f32 %v2597, %v2709
    %v2711 = vpop.f32.mrf.mxu0
    %v2712 = vadd.f32 %v2599, %v2711
    %2713 = vmatprep.mubr.bf16.mxu0 %v265
    %2714 = vmatmul.mubr.bf16.gmra.mxu0 %v264
    %v2715 = vpop.f32.mrf.mxu0
    %v2716 = vadd.f32 %v2603, %v2715
    %v2717 = vpop.f32.mrf.mxu0
    %v2718 = vadd.f32 %v2605, %v2717
    %v2719 = vpop.f32.mrf.mxu0
    %v2720 = vadd.f32 %v2607, %v2719
    %v2721 = vpop.f32.mrf.mxu0
    %v2722 = vadd.f32 %v2609, %v2721
    %2723 = vmatprep.mubr.bf16.mxu0 %v273
    %2724 = vmatmul.mubr.bf16.gmra.mxu0 %v272
    %v2725 = vpop.f32.mrf.mxu0
    %v2726 = vadd.f32 %v2613, %v2725
    %v2727 = vpop.f32.mrf.mxu0
    %v2728 = vadd.f32 %v2615, %v2727
    %v2729 = vpop.f32.mrf.mxu0
    %v2730 = vadd.f32 %v2617, %v2729
    %v2731 = vpop.f32.mrf.mxu0
    %v2732 = vadd.f32 %v2619, %v2731
    %2733 = vmatprep.mubr.bf16.mxu0 %v281
    %2734 = vmatmul.mubr.bf16.gmra.mxu0 %v280
    %v2735 = vpop.f32.mrf.mxu0
    %v2736 = vadd.f32 %v2623, %v2735
    %v2737 = vpop.f32.mrf.mxu0
    %v2738 = vadd.f32 %v2625, %v2737
    %v2739 = vpop.f32.mrf.mxu0
    %v2740 = vadd.f32 %v2627, %v2739
    %v2741 = vpop.f32.mrf.mxu0
    %v2742 = vadd.f32 %v2629, %v2741
    %2743 = vdwg.mxu0
    %v2744 = vmax.f32 %v2214, 0.0
    %v2745 = vmax.f32 %v2216, 0.0
    %v2746 = vmax.f32 %v2666, 0.0
    %v2747 = vmax.f32 %v2668, 0.0
    %v2748 = vmax.f32 %v2218, 0.0
    %v2749 = vmax.f32 %v2220, 0.0
    %v2750 = vmax.f32 %v2670, 0.0
    %v2751 = vmax.f32 %v2672, 0.0
    %v2752 = vmax.f32 %v2224, 0.0
    %v2753 = vmax.f32 %v2226, 0.0
    %v2754 = vmax.f32 %v2676, 0.0
    %v2755 = vmax.f32 %v2678, 0.0
    %v2756 = vmax.f32 %v2228, 0.0
    %v2757 = vmax.f32 %v2230, 0.0
    %v2758 = vmax.f32 %v2680, 0.0
    %v2759 = vmax.f32 %v2682, 0.0
    %v2760 = vmax.f32 %v2234, 0.0
    %v2761 = vmax.f32 %v2236, 0.0
    %v2762 = vmax.f32 %v2686, 0.0
    %v2763 = vmax.f32 %v2688, 0.0
    %v2764 = vmax.f32 %v2238, 0.0
    %v2765 = vmax.f32 %v2240, 0.0
    %v2766 = vmax.f32 %v2690, 0.0
    %v2767 = vmax.f32 %v2692, 0.0
    %v2768 = vmax.f32 %v2244, 0.0
    %v2769 = vmax.f32 %v2246, 0.0
    %v2770 = vmax.f32 %v2696, 0.0
    %v2771 = vmax.f32 %v2698, 0.0
    %v2772 = vmax.f32 %v2248, 0.0
    %v2773 = vmax.f32 %v2250, 0.0
    %v2774 = vmax.f32 %v2700, 0.0
    %v2775 = vmax.f32 %v2702, 0.0
    %v2776 = vmax.f32 %v2254, 0.0
    %v2777 = vmax.f32 %v2256, 0.0
    %v2778 = vmax.f32 %v2706, 0.0
    %v2779 = vmax.f32 %v2708, 0.0
    %v2780 = vmax.f32 %v2258, 0.0
    %v2781 = vmax.f32 %v2260, 0.0
    %v2782 = vmax.f32 %v2710, 0.0
    %v2783 = vmax.f32 %v2712, 0.0
    %v2784 = vmax.f32 %v2264, 0.0
    %v2785 = vmax.f32 %v2266, 0.0
    %v2786 = vmax.f32 %v2716, 0.0
    %v2787 = vmax.f32 %v2718, 0.0
    %v2788 = vmax.f32 %v2268, 0.0
    %v2789 = vmax.f32 %v2270, 0.0
    %v2790 = vmax.f32 %v2720, 0.0
    %v2791 = vmax.f32 %v2722, 0.0
    %v2792 = vmax.f32 %v2274, 0.0
    %v2793 = vmax.f32 %v2276, 0.0
    %v2794 = vmax.f32 %v2726, 0.0
    %v2795 = vmax.f32 %v2728, 0.0
    %v2796 = vmax.f32 %v2278, 0.0
    %v2797 = vmax.f32 %v2280, 0.0
    %v2798 = vmax.f32 %v2730, 0.0
    %v2799 = vmax.f32 %v2732, 0.0
    %v2800 = vmax.f32 %v2284, 0.0
    %v2801 = vmax.f32 %v2286, 0.0
    %v2802 = vmax.f32 %v2736, 0.0
    %v2803 = vmax.f32 %v2738, 0.0
    %v2804 = vmax.f32 %v2288, 0.0
    %v2805 = vmax.f32 %v2290, 0.0
    %v2806 = vmax.f32 %v2740, 0.0
    %v2807 = vmax.f32 %v2742, 0.0
    %v2808 = vpack.c.bf16 %v2748, %v2744
    %v2809 = vpack.c.bf16 %v2749, %v2745
    %v2810 = vpack.c.bf16 %v2750, %v2746
    %v2811 = vpack.c.bf16 %v2751, %v2747
    %v2812 = vpack.c.bf16 %v2756, %v2752
    %v2813 = vpack.c.bf16 %v2757, %v2753
    %v2814 = vpack.c.bf16 %v2758, %v2754
    %v2815 = vpack.c.bf16 %v2759, %v2755
    %v2816 = vpack.c.bf16 %v2764, %v2760
    %v2817 = vpack.c.bf16 %v2765, %v2761
    %v2818 = vpack.c.bf16 %v2766, %v2762
    %v2819 = vpack.c.bf16 %v2767, %v2763
    %v2820 = vpack.c.bf16 %v2772, %v2768
    %v2821 = vpack.c.bf16 %v2773, %v2769
    %v2822 = vpack.c.bf16 %v2774, %v2770
    %v2823 = vpack.c.bf16 %v2775, %v2771
    %v2824 = vpack.c.bf16 %v2780, %v2776
    %v2825 = vpack.c.bf16 %v2781, %v2777
    %v2826 = vpack.c.bf16 %v2782, %v2778
    %v2827 = vpack.c.bf16 %v2783, %v2779
    %v2828 = vpack.c.bf16 %v2788, %v2784
    %v2829 = vpack.c.bf16 %v2789, %v2785
    %v2830 = vpack.c.bf16 %v2790, %v2786
    %v2831 = vpack.c.bf16 %v2791, %v2787
    %v2832 = vpack.c.bf16 %v2796, %v2792
    %v2833 = vpack.c.bf16 %v2797, %v2793
    %v2834 = vpack.c.bf16 %v2798, %v2794
    %v2835 = vpack.c.bf16 %v2799, %v2795
    %v2836 = vpack.c.bf16 %v2804, %v2800
    %v2837 = vpack.c.bf16 %v2805, %v2801
    %v2838 = vpack.c.bf16 %v2806, %v2802
    %v2839 = vpack.c.bf16 %v2807, %v2803
    %v2840 = vld [vmem:[#allocation7] sm:$0xff]
    %v2841 = vld [vmem:[#allocation7 + $0x8] sm:$0xff]
    %v2842 = vld [vmem:[#allocation7 + $0x10] sm:$0xff]
    %v2843 = vld [vmem:[#allocation7 + $0x18] sm:$0xff]
    %v2844 = vld [vmem:[#allocation7 + $0x20] sm:$0xff]
    %v2845 = vld [vmem:[#allocation7 + $0x28] sm:$0xff]
    %v2846 = vld [vmem:[#allocation7 + $0x30] sm:$0xff]
    %v2847 = vld [vmem:[#allocation7 + $0x38] sm:$0xff]
    %v2848 = vld [vmem:[#allocation7 + $0x40] sm:$0xff]
    %v2849 = vld [vmem:[#allocation7 + $0x48] sm:$0xff]
    %v2850 = vld [vmem:[#allocation7 + $0x50] sm:$0xff]
    %v2851 = vld [vmem:[#allocation7 + $0x58] sm:$0xff]
    %v2852 = vld [vmem:[#allocation7 + $0x60] sm:$0xff]
    %v2853 = vld [vmem:[#allocation7 + $0x68] sm:$0xff]
    %v2854 = vld [vmem:[#allocation7 + $0x70] sm:$0xff]
    %v2855 = vld [vmem:[#allocation7 + $0x78] sm:$0xff]
    %v2856 = vld [vmem:[#allocation7 + $0x80] sm:$0xff]
    %v2857 = vld [vmem:[#allocation7 + $0x88] sm:$0xff]
    %v2858 = vld [vmem:[#allocation7 + $0x90] sm:$0xff]
    %v2859 = vld [vmem:[#allocation7 + $0x98] sm:$0xff]
    %v2860 = vld [vmem:[#allocation7 + $0xa0] sm:$0xff]
    %v2861 = vld [vmem:[#allocation7 + $0xa8] sm:$0xff]
    %v2862 = vld [vmem:[#allocation7 + $0xb0] sm:$0xff]
    %v2863 = vld [vmem:[#allocation7 + $0xb8] sm:$0xff]
    %v2864 = vld [vmem:[#allocation7 + $0xc0] sm:$0xff]
    %v2865 = vld [vmem:[#allocation7 + $0xc8] sm:$0xff]
    %v2866 = vld [vmem:[#allocation7 + $0xd0] sm:$0xff]
    %v2867 = vld [vmem:[#allocation7 + $0xd8] sm:$0xff]
    %v2868 = vld [vmem:[#allocation7 + $0xe0] sm:$0xff]
    %v2869 = vld [vmem:[#allocation7 + $0xe8] sm:$0xff]
    %v2870 = vld [vmem:[#allocation7 + $0xf0] sm:$0xff]
    %v2871 = vld [vmem:[#allocation7 + $0xf8] sm:$0xff]
    %v2872 = vld [vmem:[#allocation7 + $0x100] sm:$0xff]
    %v2873 = vld [vmem:[#allocation7 + $0x108] sm:$0xff]
    %v2874 = vld [vmem:[#allocation7 + $0x110] sm:$0xff]
    %v2875 = vld [vmem:[#allocation7 + $0x118] sm:$0xff]
    %v2876 = vld [vmem:[#allocation7 + $0x120] sm:$0xff]
    %v2877 = vld [vmem:[#allocation7 + $0x128] sm:$0xff]
    %v2878 = vld [vmem:[#allocation7 + $0x130] sm:$0xff]
    %v2879 = vld [vmem:[#allocation7 + $0x138] sm:$0xff]
    %v2880 = vld [vmem:[#allocation7 + $0x140] sm:$0xff]
    %v2881 = vld [vmem:[#allocation7 + $0x148] sm:$0xff]
    %v2882 = vld [vmem:[#allocation7 + $0x150] sm:$0xff]
    %v2883 = vld [vmem:[#allocation7 + $0x158] sm:$0xff]
    %v2884 = vld [vmem:[#allocation7 + $0x160] sm:$0xff]
    %v2885 = vld [vmem:[#allocation7 + $0x168] sm:$0xff]
    %v2886 = vld [vmem:[#allocation7 + $0x170] sm:$0xff]
    %v2887 = vld [vmem:[#allocation7 + $0x178] sm:$0xff]
    %v2888 = vld [vmem:[#allocation7 + $0x180] sm:$0xff]
    %v2889 = vld [vmem:[#allocation7 + $0x188] sm:$0xff]
    %v2890 = vld [vmem:[#allocation7 + $0x190] sm:$0xff]
    %v2891 = vld [vmem:[#allocation7 + $0x198] sm:$0xff]
    %v2892 = vld [vmem:[#allocation7 + $0x1a0] sm:$0xff]
    %v2893 = vld [vmem:[#allocation7 + $0x1a8] sm:$0xff]
    %v2894 = vld [vmem:[#allocation7 + $0x1b0] sm:$0xff]
    %v2895 = vld [vmem:[#allocation7 + $0x1b8] sm:$0xff]
    %v2896 = vld [vmem:[#allocation7 + $0x1c0] sm:$0xff]
    %v2897 = vld [vmem:[#allocation7 + $0x1c8] sm:$0xff]
    %v2898 = vld [vmem:[#allocation7 + $0x1d0] sm:$0xff]
    %v2899 = vld [vmem:[#allocation7 + $0x1d8] sm:$0xff]
    %v2900 = vld [vmem:[#allocation7 + $0x1e0] sm:$0xff]
    %v2901 = vld [vmem:[#allocation7 + $0x1e8] sm:$0xff]
    %v2902 = vld [vmem:[#allocation7 + $0x1f0] sm:$0xff]
    %v2903 = vld [vmem:[#allocation7 + $0x1f8] sm:$0xff]
    %v2904 = vld [vmem:[%s4] sm:$0x3]
    %v2906 = vlaneseq
    %v2907 = vshrl.u32 %v2906, 7
    %v2908 = vsub.s32 0, %v2907
    %v2909 = vrot.slane %v2904, %v2908
    %v2910 = vlaneseq
    %v2911 = vshrl.u32 %v2910, 7
    %v2912 = vsub.s32 1, %v2911
    %v2913 = vrot.slane %v2904, %v2912
    %v2980 = vunpack.c.l.b16 %v2840
    %v2981 = vunpack.c.h.b16 %v2840
    %v2982 = vunpack.c.l.b16 %v2841
    %v2983 = vunpack.c.h.b16 %v2841
    %v2984 = vunpack.c.l.b16 %v2842
    %v2985 = vunpack.c.h.b16 %v2842
    %v2986 = vunpack.c.l.b16 %v2843
    %v2987 = vunpack.c.h.b16 %v2843
    %v2988 = vunpack.c.l.b16 %v2844
    %v2989 = vunpack.c.h.b16 %v2844
    %v2990 = vunpack.c.l.b16 %v2845
    %v2991 = vunpack.c.h.b16 %v2845
    %v2992 = vunpack.c.l.b16 %v2846
    %v2993 = vunpack.c.h.b16 %v2846
    %v2994 = vunpack.c.l.b16 %v2847
    %v2995 = vunpack.c.h.b16 %v2847
    %v2996 = vunpack.c.l.b16 %v2848
    %v2997 = vunpack.c.h.b16 %v2848
    %v2998 = vunpack.c.l.b16 %v2849
    %v2999 = vunpack.c.h.b16 %v2849
    %v3000 = vunpack.c.l.b16 %v2850
    %v3001 = vunpack.c.h.b16 %v2850
    %v3002 = vunpack.c.l.b16 %v2851
    %v3003 = vunpack.c.h.b16 %v2851
    %v3004 = vunpack.c.l.b16 %v2852
    %v3005 = vunpack.c.h.b16 %v2852
    %v3006 = vunpack.c.l.b16 %v2853
    %v3007 = vunpack.c.h.b16 %v2853
    %v3008 = vunpack.c.l.b16 %v2854
    %v3009 = vunpack.c.h.b16 %v2854
    %v3010 = vunpack.c.l.b16 %v2855
    %v3011 = vunpack.c.h.b16 %v2855
    %v3012 = vunpack.c.l.b16 %v2856
    %v3013 = vunpack.c.h.b16 %v2856
    %v3014 = vunpack.c.l.b16 %v2857
    %v3015 = vunpack.c.h.b16 %v2857
    %v3016 = vunpack.c.l.b16 %v2858
    %v3017 = vunpack.c.h.b16 %v2858
    %v3018 = vunpack.c.l.b16 %v2859
    %v3019 = vunpack.c.h.b16 %v2859
    %v3020 = vunpack.c.l.b16 %v2860
    %v3021 = vunpack.c.h.b16 %v2860
    %v3022 = vunpack.c.l.b16 %v2861
    %v3023 = vunpack.c.h.b16 %v2861
    %v3024 = vunpack.c.l.b16 %v2862
    %v3025 = vunpack.c.h.b16 %v2862
    %v3026 = vunpack.c.l.b16 %v2863
    %v3027 = vunpack.c.h.b16 %v2863
    %v3028 = vunpack.c.l.b16 %v2864
    %v3029 = vunpack.c.h.b16 %v2864
    %v3030 = vunpack.c.l.b16 %v2865
    %v3031 = vunpack.c.h.b16 %v2865
    %v3032 = vunpack.c.l.b16 %v2866
    %v3033 = vunpack.c.h.b16 %v2866
    %v3034 = vunpack.c.l.b16 %v2867
    %v3035 = vunpack.c.h.b16 %v2867
    %v3036 = vunpack.c.l.b16 %v2868
    %v3037 = vunpack.c.h.b16 %v2868
    %v3038 = vunpack.c.l.b16 %v2869
    %v3039 = vunpack.c.h.b16 %v2869
    %v3040 = vunpack.c.l.b16 %v2870
    %v3041 = vunpack.c.h.b16 %v2870
    %v3042 = vunpack.c.l.b16 %v2871
    %v3043 = vunpack.c.h.b16 %v2871
    %v3044 = vunpack.c.l.b16 %v2872
    %v3045 = vunpack.c.h.b16 %v2872
    %v3046 = vunpack.c.l.b16 %v2873
    %v3047 = vunpack.c.h.b16 %v2873
    %v3048 = vunpack.c.l.b16 %v2874
    %v3049 = vunpack.c.h.b16 %v2874
    %v3050 = vunpack.c.l.b16 %v2875
    %v3051 = vunpack.c.h.b16 %v2875
    %v3052 = vunpack.c.l.b16 %v2876
    %v3053 = vunpack.c.h.b16 %v2876
    %v3054 = vunpack.c.l.b16 %v2877
    %v3055 = vunpack.c.h.b16 %v2877
    %v3056 = vunpack.c.l.b16 %v2878
    %v3057 = vunpack.c.h.b16 %v2878
    %v3058 = vunpack.c.l.b16 %v2879
    %v3059 = vunpack.c.h.b16 %v2879
    %v3060 = vunpack.c.l.b16 %v2880
    %v3061 = vunpack.c.h.b16 %v2880
    %v3062 = vunpack.c.l.b16 %v2881
    %v3063 = vunpack.c.h.b16 %v2881
    %v3064 = vunpack.c.l.b16 %v2882
    %v3065 = vunpack.c.h.b16 %v2882
    %v3066 = vunpack.c.l.b16 %v2883
    %v3067 = vunpack.c.h.b16 %v2883
    %v3068 = vunpack.c.l.b16 %v2884
    %v3069 = vunpack.c.h.b16 %v2884
    %v3070 = vunpack.c.l.b16 %v2885
    %v3071 = vunpack.c.h.b16 %v2885
    %v3072 = vunpack.c.l.b16 %v2886
    %v3073 = vunpack.c.h.b16 %v2886
    %v3074 = vunpack.c.l.b16 %v2887
    %v3075 = vunpack.c.h.b16 %v2887
    %v3076 = vunpack.c.l.b16 %v2888
    %v3077 = vunpack.c.h.b16 %v2888
    %v3078 = vunpack.c.l.b16 %v2889
    %v3079 = vunpack.c.h.b16 %v2889
    %v3080 = vunpack.c.l.b16 %v2890
    %v3081 = vunpack.c.h.b16 %v2890
    %v3082 = vunpack.c.l.b16 %v2891
    %v3083 = vunpack.c.h.b16 %v2891
    %v3084 = vunpack.c.l.b16 %v2892
    %v3085 = vunpack.c.h.b16 %v2892
    %v3086 = vunpack.c.l.b16 %v2893
    %v3087 = vunpack.c.h.b16 %v2893
    %v3088 = vunpack.c.l.b16 %v2894
    %v3089 = vunpack.c.h.b16 %v2894
    %v3090 = vunpack.c.l.b16 %v2895
    %v3091 = vunpack.c.h.b16 %v2895
    %v3092 = vunpack.c.l.b16 %v2896
    %v3093 = vunpack.c.h.b16 %v2896
    %v3094 = vunpack.c.l.b16 %v2897
    %v3095 = vunpack.c.h.b16 %v2897
    %v3096 = vunpack.c.l.b16 %v2898
    %v3097 = vunpack.c.h.b16 %v2898
    %v3098 = vunpack.c.l.b16 %v2899
    %v3099 = vunpack.c.h.b16 %v2899
    %v3100 = vunpack.c.l.b16 %v2900
    %v3101 = vunpack.c.h.b16 %v2900
    %v3102 = vunpack.c.l.b16 %v2901
    %v3103 = vunpack.c.h.b16 %v2901
    %v3104 = vunpack.c.l.b16 %v2902
    %v3105 = vunpack.c.h.b16 %v2902
    %v3106 = vunpack.c.l.b16 %v2903
    %v3107 = vunpack.c.h.b16 %v2903
    %v3108 = vpack.c.b16 %v2982, %v2980
    %v3109 = vpack.c.b16 %v2983, %v2981
    %v3110 = vpack.c.b16 %v2986, %v2984
    %v3111 = vpack.c.b16 %v2987, %v2985
    %v3112 = vpack.c.b16 %v2990, %v2988
    %v3113 = vpack.c.b16 %v2991, %v2989
    %v3114 = vpack.c.b16 %v2994, %v2992
    %v3115 = vpack.c.b16 %v2995, %v2993
    %v3116 = vpack.c.b16 %v2998, %v2996
    %v3117 = vpack.c.b16 %v2999, %v2997
    %v3118 = vpack.c.b16 %v3002, %v3000
    %v3119 = vpack.c.b16 %v3003, %v3001
    %v3120 = vpack.c.b16 %v3006, %v3004
    %v3121 = vpack.c.b16 %v3007, %v3005
    %v3122 = vpack.c.b16 %v3010, %v3008
    %v3123 = vpack.c.b16 %v3011, %v3009
    %v3124 = vpack.c.b16 %v3014, %v3012
    %v3125 = vpack.c.b16 %v3015, %v3013
    %v3126 = vpack.c.b16 %v3018, %v3016
    %v3127 = vpack.c.b16 %v3019, %v3017
    %v3128 = vpack.c.b16 %v3022, %v3020
    %v3129 = vpack.c.b16 %v3023, %v3021
    %v3130 = vpack.c.b16 %v3026, %v3024
    %v3131 = vpack.c.b16 %v3027, %v3025
    %v3132 = vpack.c.b16 %v3030, %v3028
    %v3133 = vpack.c.b16 %v3031, %v3029
    %v3134 = vpack.c.b16 %v3034, %v3032
    %v3135 = vpack.c.b16 %v3035, %v3033
    %v3136 = vpack.c.b16 %v3038, %v3036
    %v3137 = vpack.c.b16 %v3039, %v3037
    %v3138 = vpack.c.b16 %v3042, %v3040
    %v3139 = vpack.c.b16 %v3043, %v3041
    %v3140 = vpack.c.b16 %v3046, %v3044
    %v3141 = vpack.c.b16 %v3047, %v3045
    %v3142 = vpack.c.b16 %v3050, %v3048
    %v3143 = vpack.c.b16 %v3051, %v3049
    %v3144 = vpack.c.b16 %v3054, %v3052
    %v3145 = vpack.c.b16 %v3055, %v3053
    %v3146 = vpack.c.b16 %v3058, %v3056
    %v3147 = vpack.c.b16 %v3059, %v3057
    %v3148 = vpack.c.b16 %v3062, %v3060
    %v3149 = vpack.c.b16 %v3063, %v3061
    %v3150 = vpack.c.b16 %v3066, %v3064
    %v3151 = vpack.c.b16 %v3067, %v3065
    %v3152 = vpack.c.b16 %v3070, %v3068
    %v3153 = vpack.c.b16 %v3071, %v3069
    %v3154 = vpack.c.b16 %v3074, %v3072
    %v3155 = vpack.c.b16 %v3075, %v3073
    %v3156 = vpack.c.b16 %v3078, %v3076
    %v3157 = vpack.c.b16 %v3079, %v3077
    %v3158 = vpack.c.b16 %v3082, %v3080
    %v3159 = vpack.c.b16 %v3083, %v3081
    %v3160 = vpack.c.b16 %v3086, %v3084
    %v3161 = vpack.c.b16 %v3087, %v3085
    %v3162 = vpack.c.b16 %v3090, %v3088
    %v3163 = vpack.c.b16 %v3091, %v3089
    %v3164 = vpack.c.b16 %v3094, %v3092
    %v3165 = vpack.c.b16 %v3095, %v3093
    %v3166 = vpack.c.b16 %v3098, %v3096
    %v3167 = vpack.c.b16 %v3099, %v3097
    %v3168 = vpack.c.b16 %v3102, %v3100
    %v3169 = vpack.c.b16 %v3103, %v3101
    %v3170 = vpack.c.b16 %v3106, %v3104
    %v3171 = vpack.c.b16 %v3107, %v3105
    %3236 = vmatprep.subr.bf16.mxu0 %v3123
    %3237 = vmatpush1.bf16.msra.mxu0 %v3122
    %3238 = vmatprep.subr.bf16.mxu0 %v3121
    %3239 = vmatpush1.bf16.msra.mxu0 %v3120
    %3240 = vmatprep.subr.bf16.mxu0 %v3119
    %3241 = vmatpush1.bf16.msra.mxu0 %v3118
    %3242 = vmatprep.subr.bf16.mxu0 %v3117
    %3243 = vmatpush1.bf16.msra.mxu0 %v3116
    %3244 = vmatprep.subr.bf16.mxu0 %v3115
    %3245 = vmatpush1.bf16.msra.mxu0 %v3114
    %3246 = vmatprep.subr.bf16.mxu0 %v3113
    %3247 = vmatpush1.bf16.msra.mxu0 %v3112
    %3248 = vmatprep.subr.bf16.mxu0 %v3111
    %3249 = vmatpush1.bf16.msra.mxu0 %v3110
    %3250 = vmatprep.subr.bf16.mxu0 %v3109
    %3251 = vmatpush1.bf16.msra.mxu0 %v3108
    %3252 = vmatprep.subr.bf16.mxu0 %v3139
    %3253 = vmatpush2.bf16.msra.mxu0 %v3138
    %3254 = vmatprep.subr.bf16.mxu0 %v3137
    %3255 = vmatpush2.bf16.msra.mxu0 %v3136
    %3256 = vmatprep.subr.bf16.mxu0 %v3135
    %3257 = vmatpush2.bf16.msra.mxu0 %v3134
    %3258 = vmatprep.subr.bf16.mxu0 %v3133
    %3259 = vmatpush2.bf16.msra.mxu0 %v3132
    %3260 = vmatprep.subr.bf16.mxu0 %v3131
    %3261 = vmatpush2.bf16.msra.mxu0 %v3130
    %3262 = vmatprep.subr.bf16.mxu0 %v3129
    %3263 = vmatpush2.bf16.msra.mxu0 %v3128
    %3264 = vmatprep.subr.bf16.mxu0 %v3127
    %3265 = vmatpush2.bf16.msra.mxu0 %v3126
    %3266 = vmatprep.subr.bf16.mxu0 %v3125
    %3267 = vmatpush2.bf16.msra.mxu0 %v3124
    %3268 = vmatprep.mubr.bf16.mxu0 %v2809
    %3269 = vmatmul.mubr.bf16.gmra.mxu0 %v2808
    %v3270 = vpop.f32.mrf.mxu0
    %v3271 = vadd.f32 %v2909, %v3270
    %v3272 = vpop.f32.mrf.mxu0
    %v3273 = vadd.f32 %v2913, %v3272
    %v3274 = vpop.f32.mrf.mxu0
    %v3275 = vadd.f32 %v2909, %v3274
    %v3276 = vpop.f32.mrf.mxu0
    %v3277 = vadd.f32 %v2913, %v3276
    %3278 = vmatprep.mubr.bf16.mxu0 %v2813
    %3279 = vmatmul.mubr.bf16.gmra.mxu0 %v2812
    %v3280 = vpop.f32.mrf.mxu0
    %v3281 = vadd.f32 %v2909, %v3280
    %v3282 = vpop.f32.mrf.mxu0
    %v3283 = vadd.f32 %v2913, %v3282
    %v3284 = vpop.f32.mrf.mxu0
    %v3285 = vadd.f32 %v2909, %v3284
    %v3286 = vpop.f32.mrf.mxu0
    %v3287 = vadd.f32 %v2913, %v3286
    %3288 = vmatprep.mubr.bf16.mxu0 %v2817
    %3289 = vmatmul.mubr.bf16.gmra.mxu0 %v2816
    %v3290 = vpop.f32.mrf.mxu0
    %v3291 = vadd.f32 %v2909, %v3290
    %v3292 = vpop.f32.mrf.mxu0
    %v3293 = vadd.f32 %v2913, %v3292
    %v3294 = vpop.f32.mrf.mxu0
    %v3295 = vadd.f32 %v2909, %v3294
    %v3296 = vpop.f32.mrf.mxu0
    %v3297 = vadd.f32 %v2913, %v3296
    %3298 = vmatprep.mubr.bf16.mxu0 %v2821
    %3299 = vmatmul.mubr.bf16.gmra.mxu0 %v2820
    %v3300 = vpop.f32.mrf.mxu0
    %v3301 = vadd.f32 %v2909, %v3300
    %v3302 = vpop.f32.mrf.mxu0
    %v3303 = vadd.f32 %v2913, %v3302
    %v3304 = vpop.f32.mrf.mxu0
    %v3305 = vadd.f32 %v2909, %v3304
    %v3306 = vpop.f32.mrf.mxu0
    %v3307 = vadd.f32 %v2913, %v3306
    %3308 = vmatprep.mubr.bf16.mxu0 %v2825
    %3309 = vmatmul.mubr.bf16.gmra.mxu0 %v2824
    %v3310 = vpop.f32.mrf.mxu0
    %v3311 = vadd.f32 %v2909, %v3310
    %v3312 = vpop.f32.mrf.mxu0
    %v3313 = vadd.f32 %v2913, %v3312
    %v3314 = vpop.f32.mrf.mxu0
    %v3315 = vadd.f32 %v2909, %v3314
    %v3316 = vpop.f32.mrf.mxu0
    %v3317 = vadd.f32 %v2913, %v3316
    %3318 = vmatprep.mubr.bf16.mxu0 %v2829
    %3319 = vmatmul.mubr.bf16.gmra.mxu0 %v2828
    %v3320 = vpop.f32.mrf.mxu0
    %v3321 = vadd.f32 %v2909, %v3320
    %v3322 = vpop.f32.mrf.mxu0
    %v3323 = vadd.f32 %v2913, %v3322
    %v3324 = vpop.f32.mrf.mxu0
    %v3325 = vadd.f32 %v2909, %v3324
    %v3326 = vpop.f32.mrf.mxu0
    %v3327 = vadd.f32 %v2913, %v3326
    %3328 = vmatprep.mubr.bf16.mxu0 %v2833
    %3329 = vmatmul.mubr.bf16.gmra.mxu0 %v2832
    %v3330 = vpop.f32.mrf.mxu0
    %v3331 = vadd.f32 %v2909, %v3330
    %v3332 = vpop.f32.mrf.mxu0
    %v3333 = vadd.f32 %v2913, %v3332
    %v3334 = vpop.f32.mrf.mxu0
    %v3335 = vadd.f32 %v2909, %v3334
    %v3336 = vpop.f32.mrf.mxu0
    %v3337 = vadd.f32 %v2913, %v3336
    %3338 = vmatprep.mubr.bf16.mxu0 %v2837
    %3339 = vmatmul.mubr.bf16.gmra.mxu0 %v2836
    %v3340 = vpop.f32.mrf.mxu0
    %v3341 = vadd.f32 %v2909, %v3340
    %v3342 = vpop.f32.mrf.mxu0
    %v3343 = vadd.f32 %v2913, %v3342
    %v3344 = vpop.f32.mrf.mxu0
    %v3345 = vadd.f32 %v2909, %v3344
    %v3346 = vpop.f32.mrf.mxu0
    %v3347 = vadd.f32 %v2913, %v3346
    %3348 = vdwg.mxu0
    %3349 = vmatprep.subr.bf16.mxu0 %v3155
    %3350 = vmatpush1.bf16.msra.mxu0 %v3154
    %3351 = vmatprep.subr.bf16.mxu0 %v3153
    %3352 = vmatpush1.bf16.msra.mxu0 %v3152
    %3353 = vmatprep.subr.bf16.mxu0 %v3151
    %3354 = vmatpush1.bf16.msra.mxu0 %v3150
    %3355 = vmatprep.subr.bf16.mxu0 %v3149
    %3356 = vmatpush1.bf16.msra.mxu0 %v3148
    %3357 = vmatprep.subr.bf16.mxu0 %v3147
    %3358 = vmatpush1.bf16.msra.mxu0 %v3146
    %3359 = vmatprep.subr.bf16.mxu0 %v3145
    %3360 = vmatpush1.bf16.msra.mxu0 %v3144
    %3361 = vmatprep.subr.bf16.mxu0 %v3143
    %3362 = vmatpush1.bf16.msra.mxu0 %v3142
    %3363 = vmatprep.subr.bf16.mxu0 %v3141
    %3364 = vmatpush1.bf16.msra.mxu0 %v3140
    %3365 = vmatprep.subr.bf16.mxu0 %v3171
    %3366 = vmatpush2.bf16.msra.mxu0 %v3170
    %3367 = vmatprep.subr.bf16.mxu0 %v3169
    %3368 = vmatpush2.bf16.msra.mxu0 %v3168
    %3369 = vmatprep.subr.bf16.mxu0 %v3167
    %3370 = vmatpush2.bf16.msra.mxu0 %v3166
    %3371 = vmatprep.subr.bf16.mxu0 %v3165
    %3372 = vmatpush2.bf16.msra.mxu0 %v3164
    %3373 = vmatprep.subr.bf16.mxu0 %v3163
    %3374 = vmatpush2.bf16.msra.mxu0 %v3162
    %3375 = vmatprep.subr.bf16.mxu0 %v3161
    %3376 = vmatpush2.bf16.msra.mxu0 %v3160
    %3377 = vmatprep.subr.bf16.mxu0 %v3159
    %3378 = vmatpush2.bf16.msra.mxu0 %v3158
    %3379 = vmatprep.subr.bf16.mxu0 %v3157
    %3380 = vmatpush2.bf16.msra.mxu0 %v3156
    %3381 = vmatprep.mubr.bf16.mxu0 %v2811
    %3382 = vmatmul.mubr.bf16.gmra.mxu0 %v2810
    %v3383 = vpop.f32.mrf.mxu0
    %v3384 = vadd.f32 %v3271, %v3383
    %v3385 = vpop.f32.mrf.mxu0
    %v3386 = vadd.f32 %v3273, %v3385
    %v3387 = vpop.f32.mrf.mxu0
    %v3388 = vadd.f32 %v3275, %v3387
    %v3389 = vpop.f32.mrf.mxu0
    %v3390 = vadd.f32 %v3277, %v3389
    %3391 = vmatprep.mubr.bf16.mxu0 %v2815
    %3392 = vmatmul.mubr.bf16.gmra.mxu0 %v2814
    %v3393 = vpop.f32.mrf.mxu0
    %v3394 = vadd.f32 %v3281, %v3393
    %v3395 = vpop.f32.mrf.mxu0
    %v3396 = vadd.f32 %v3283, %v3395
    %v3397 = vpop.f32.mrf.mxu0
    %v3398 = vadd.f32 %v3285, %v3397
    %v3399 = vpop.f32.mrf.mxu0
    %v3400 = vadd.f32 %v3287, %v3399
    %3401 = vmatprep.mubr.bf16.mxu0 %v2819
    %3402 = vmatmul.mubr.bf16.gmra.mxu0 %v2818
    %v3403 = vpop.f32.mrf.mxu0
    %v3404 = vadd.f32 %v3291, %v3403
    %v3405 = vpop.f32.mrf.mxu0
    %v3406 = vadd.f32 %v3293, %v3405
    %v3407 = vpop.f32.mrf.mxu0
    %v3408 = vadd.f32 %v3295, %v3407
    %v3409 = vpop.f32.mrf.mxu0
    %v3410 = vadd.f32 %v3297, %v3409
    %3411 = vmatprep.mubr.bf16.mxu0 %v2823
    %3412 = vmatmul.mubr.bf16.gmra.mxu0 %v2822
    %v3413 = vpop.f32.mrf.mxu0
    %v3414 = vadd.f32 %v3301, %v3413
    %v3415 = vpop.f32.mrf.mxu0
    %v3416 = vadd.f32 %v3303, %v3415
    %v3417 = vpop.f32.mrf.mxu0
    %v3418 = vadd.f32 %v3305, %v3417
    %v3419 = vpop.f32.mrf.mxu0
    %v3420 = vadd.f32 %v3307, %v3419
    %3421 = vmatprep.mubr.bf16.mxu0 %v2827
    %3422 = vmatmul.mubr.bf16.gmra.mxu0 %v2826
    %v3423 = vpop.f32.mrf.mxu0
    %v3424 = vadd.f32 %v3311, %v3423
    %v3425 = vpop.f32.mrf.mxu0
    %v3426 = vadd.f32 %v3313, %v3425
    %v3427 = vpop.f32.mrf.mxu0
    %v3428 = vadd.f32 %v3315, %v3427
    %v3429 = vpop.f32.mrf.mxu0
    %v3430 = vadd.f32 %v3317, %v3429
    %3431 = vmatprep.mubr.bf16.mxu0 %v2831
    %3432 = vmatmul.mubr.bf16.gmra.mxu0 %v2830
    %v3433 = vpop.f32.mrf.mxu0
    %v3434 = vadd.f32 %v3321, %v3433
    %v3435 = vpop.f32.mrf.mxu0
    %v3436 = vadd.f32 %v3323, %v3435
    %v3437 = vpop.f32.mrf.mxu0
    %v3438 = vadd.f32 %v3325, %v3437
    %v3439 = vpop.f32.mrf.mxu0
    %v3440 = vadd.f32 %v3327, %v3439
    %3441 = vmatprep.mubr.bf16.mxu0 %v2835
    %3442 = vmatmul.mubr.bf16.gmra.mxu0 %v2834
    %v3443 = vpop.f32.mrf.mxu0
    %v3444 = vadd.f32 %v3331, %v3443
    %v3445 = vpop.f32.mrf.mxu0
    %v3446 = vadd.f32 %v3333, %v3445
    %v3447 = vpop.f32.mrf.mxu0
    %v3448 = vadd.f32 %v3335, %v3447
    %v3449 = vpop.f32.mrf.mxu0
    %v3450 = vadd.f32 %v3337, %v3449
    %3451 = vmatprep.mubr.bf16.mxu0 %v2839
    %3452 = vmatmul.mubr.bf16.gmra.mxu0 %v2838
    %v3453 = vpop.f32.mrf.mxu0
    %v3454 = vadd.f32 %v3341, %v3453
    %v3455 = vpop.f32.mrf.mxu0
    %v3456 = vadd.f32 %v3343, %v3455
    %v3457 = vpop.f32.mrf.mxu0
    %v3458 = vadd.f32 %v3345, %v3457
    %v3459 = vpop.f32.mrf.mxu0
    %v3460 = vadd.f32 %v3347, %v3459
    %3461 = vdwg.mxu0
    %v3462 = vmax.f32 %v3384, 0.0
    %v3463 = vmax.f32 %v3386, 0.0
    %v3464 = vmax.f32 %v3388, 0.0
    %v3465 = vmax.f32 %v3390, 0.0
    %v3466 = vmax.f32 %v3394, 0.0
    %v3467 = vmax.f32 %v3396, 0.0
    %v3468 = vmax.f32 %v3398, 0.0
    %v3469 = vmax.f32 %v3400, 0.0
    %v3470 = vmax.f32 %v3404, 0.0
    %v3471 = vmax.f32 %v3406, 0.0
    %v3472 = vmax.f32 %v3408, 0.0
    %v3473 = vmax.f32 %v3410, 0.0
    %v3474 = vmax.f32 %v3414, 0.0
    %v3475 = vmax.f32 %v3416, 0.0
    %v3476 = vmax.f32 %v3418, 0.0
    %v3477 = vmax.f32 %v3420, 0.0
    %v3478 = vmax.f32 %v3424, 0.0
    %v3479 = vmax.f32 %v3426, 0.0
    %v3480 = vmax.f32 %v3428, 0.0
    %v3481 = vmax.f32 %v3430, 0.0
    %v3482 = vmax.f32 %v3434, 0.0
    %v3483 = vmax.f32 %v3436, 0.0
    %v3484 = vmax.f32 %v3438, 0.0
    %v3485 = vmax.f32 %v3440, 0.0
    %v3486 = vmax.f32 %v3444, 0.0
    %v3487 = vmax.f32 %v3446, 0.0
    %v3488 = vmax.f32 %v3448, 0.0
    %v3489 = vmax.f32 %v3450, 0.0
    %v3490 = vmax.f32 %v3454, 0.0
    %v3491 = vmax.f32 %v3456, 0.0
    %v3492 = vmax.f32 %v3458, 0.0
    %v3493 = vmax.f32 %v3460, 0.0
    %v3494 = vpack.c.bf16 %v3464, %v3462
    %v3495 = vpack.c.bf16 %v3465, %v3463
    %v3496 = vpack.c.bf16 %v3468, %v3466
    %v3497 = vpack.c.bf16 %v3469, %v3467
    %v3498 = vpack.c.bf16 %v3472, %v3470
    %v3499 = vpack.c.bf16 %v3473, %v3471
    %v3500 = vpack.c.bf16 %v3476, %v3474
    %v3501 = vpack.c.bf16 %v3477, %v3475
    %v3502 = vpack.c.bf16 %v3480, %v3478
    %v3503 = vpack.c.bf16 %v3481, %v3479
    %v3504 = vpack.c.bf16 %v3484, %v3482
    %v3505 = vpack.c.bf16 %v3485, %v3483
    %v3506 = vpack.c.bf16 %v3488, %v3486
    %v3507 = vpack.c.bf16 %v3489, %v3487
    %v3508 = vpack.c.bf16 %v3492, %v3490
    %v3509 = vpack.c.bf16 %v3493, %v3491
    %v3510 = vld [vmem:[#allocation8] sm:$0xf]
    %v3511 = vld [vmem:[#allocation8 + $0x4] sm:$0xf]
    %v3512 = vld [vmem:[#allocation8 + $0x8] sm:$0xf]
    %v3513 = vld [vmem:[#allocation8 + $0xc] sm:$0xf]
    %v3514 = vld [vmem:[#allocation8 + $0x10] sm:$0xf]
    %v3515 = vld [vmem:[#allocation8 + $0x14] sm:$0xf]
    %v3516 = vld [vmem:[#allocation8 + $0x18] sm:$0xf]
    %v3517 = vld [vmem:[#allocation8 + $0x1c] sm:$0xf]
    %v3518 = vld [vmem:[#allocation8 + $0x20] sm:$0xf]
    %v3519 = vld [vmem:[#allocation8 + $0x24] sm:$0xf]
    %v3520 = vld [vmem:[#allocation8 + $0x28] sm:$0xf]
    %v3521 = vld [vmem:[#allocation8 + $0x2c] sm:$0xf]
    %v3522 = vld [vmem:[#allocation8 + $0x30] sm:$0xf]
    %v3523 = vld [vmem:[#allocation8 + $0x34] sm:$0xf]
    %v3524 = vld [vmem:[#allocation8 + $0x38] sm:$0xf]
    %v3525 = vld [vmem:[#allocation8 + $0x3c] sm:$0xf]
    %v3526 = vld [vmem:[#allocation8 + $0x40] sm:$0xf]
    %v3527 = vld [vmem:[#allocation8 + $0x44] sm:$0xf]
    %v3528 = vld [vmem:[#allocation8 + $0x48] sm:$0xf]
    %v3529 = vld [vmem:[#allocation8 + $0x4c] sm:$0xf]
    %v3530 = vld [vmem:[#allocation8 + $0x50] sm:$0xf]
    %v3531 = vld [vmem:[#allocation8 + $0x54] sm:$0xf]
    %v3532 = vld [vmem:[#allocation8 + $0x58] sm:$0xf]
    %v3533 = vld [vmem:[#allocation8 + $0x5c] sm:$0xf]
    %v3534 = vld [vmem:[#allocation8 + $0x60] sm:$0xf]
    %v3535 = vld [vmem:[#allocation8 + $0x64] sm:$0xf]
    %v3536 = vld [vmem:[#allocation8 + $0x68] sm:$0xf]
    %v3537 = vld [vmem:[#allocation8 + $0x6c] sm:$0xf]
    %v3538 = vld [vmem:[#allocation8 + $0x70] sm:$0xf]
    %v3539 = vld [vmem:[#allocation8 + $0x74] sm:$0xf]
    %v3540 = vld [vmem:[#allocation8 + $0x78] sm:$0xf]
    %v3541 = vld [vmem:[#allocation8 + $0x7c] sm:$0xf]
    %v3542 = vld [vmem:[%s6] sm:$0x1]
    %v3544 = vlaneseq
    %v3545 = vshrl.u32 %v3544, 7
    %v3546 = vsub.s32 0, %v3545
    %v3547 = vrot.slane %v3542, %v3546
    %v3581 = vunpack.c.l.b16 %v3510
    %v3582 = vunpack.c.l.b16 %v3511
    %v3583 = vunpack.c.l.b16 %v3512
    %v3584 = vunpack.c.l.b16 %v3513
    %v3585 = vunpack.c.l.b16 %v3514
    %v3586 = vunpack.c.l.b16 %v3515
    %v3587 = vunpack.c.l.b16 %v3516
    %v3588 = vunpack.c.l.b16 %v3517
    %v3589 = vunpack.c.l.b16 %v3518
    %v3590 = vunpack.c.l.b16 %v3519
    %v3591 = vunpack.c.l.b16 %v3520
    %v3592 = vunpack.c.l.b16 %v3521
    %v3593 = vunpack.c.l.b16 %v3522
    %v3594 = vunpack.c.l.b16 %v3523
    %v3595 = vunpack.c.l.b16 %v3524
    %v3596 = vunpack.c.l.b16 %v3525
    %v3597 = vunpack.c.l.b16 %v3526
    %v3598 = vunpack.c.l.b16 %v3527
    %v3599 = vunpack.c.l.b16 %v3528
    %v3600 = vunpack.c.l.b16 %v3529
    %v3601 = vunpack.c.l.b16 %v3530
    %v3602 = vunpack.c.l.b16 %v3531
    %v3603 = vunpack.c.l.b16 %v3532
    %v3604 = vunpack.c.l.b16 %v3533
    %v3605 = vunpack.c.l.b16 %v3534
    %v3606 = vunpack.c.l.b16 %v3535
    %v3607 = vunpack.c.l.b16 %v3536
    %v3608 = vunpack.c.l.b16 %v3537
    %v3609 = vunpack.c.l.b16 %v3538
    %v3610 = vunpack.c.l.b16 %v3539
    %v3611 = vunpack.c.l.b16 %v3540
    %v3612 = vunpack.c.l.b16 %v3541
    %v3613 = vpack.c.b16 %v3582, %v3581
    %v3614 = vpack.c.b16 %v3584, %v3583
    %v3615 = vpack.c.b16 %v3586, %v3585
    %v3616 = vpack.c.b16 %v3588, %v3587
    %v3617 = vpack.c.b16 %v3590, %v3589
    %v3618 = vpack.c.b16 %v3592, %v3591
    %v3619 = vpack.c.b16 %v3594, %v3593
    %v3620 = vpack.c.b16 %v3596, %v3595
    %v3621 = vpack.c.b16 %v3598, %v3597
    %v3622 = vpack.c.b16 %v3600, %v3599
    %v3623 = vpack.c.b16 %v3602, %v3601
    %v3624 = vpack.c.b16 %v3604, %v3603
    %v3625 = vpack.c.b16 %v3606, %v3605
    %v3626 = vpack.c.b16 %v3608, %v3607
    %v3627 = vpack.c.b16 %v3610, %v3609
    %v3628 = vpack.c.b16 %v3612, %v3611
    %3645 = vmatprep.subr.bf16.mxu0 0
    %3646 = vmatpush1.bf16.msra.mxu0 %v3620
    %3647 = vmatprep.subr.bf16.mxu0 0
    %3648 = vmatpush1.bf16.msra.mxu0 %v3619
    %3649 = vmatprep.subr.bf16.mxu0 0
    %3650 = vmatpush1.bf16.msra.mxu0 %v3618
    %3651 = vmatprep.subr.bf16.mxu0 0
    %3652 = vmatpush1.bf16.msra.mxu0 %v3617
    %3653 = vmatprep.subr.bf16.mxu0 0
    %3654 = vmatpush1.bf16.msra.mxu0 %v3616
    %3655 = vmatprep.subr.bf16.mxu0 0
    %3656 = vmatpush1.bf16.msra.mxu0 %v3615
    %3657 = vmatprep.subr.bf16.mxu0 0
    %3658 = vmatpush1.bf16.msra.mxu0 %v3614
    %3659 = vmatprep.subr.bf16.mxu0 0
    %3660 = vmatpush1.bf16.msra.mxu0 %v3613
    %3661 = vmatprep.subr.bf16.mxu0 0
    %3662 = vmatpush2.bf16.msra.mxu0 %v3628
    %3663 = vmatprep.subr.bf16.mxu0 0
    %3664 = vmatpush2.bf16.msra.mxu0 %v3627
    %3665 = vmatprep.subr.bf16.mxu0 0
    %3666 = vmatpush2.bf16.msra.mxu0 %v3626
    %3667 = vmatprep.subr.bf16.mxu0 0
    %3668 = vmatpush2.bf16.msra.mxu0 %v3625
    %3669 = vmatprep.subr.bf16.mxu0 0
    %3670 = vmatpush2.bf16.msra.mxu0 %v3624
    %3671 = vmatprep.subr.bf16.mxu0 0
    %3672 = vmatpush2.bf16.msra.mxu0 %v3623
    %3673 = vmatprep.subr.bf16.mxu0 0
    %3674 = vmatpush2.bf16.msra.mxu0 %v3622
    %3675 = vmatprep.subr.bf16.mxu0 0
    %3676 = vmatpush2.bf16.msra.mxu0 %v3621
    %3677 = vmatprep.mubr.bf16.mxu0 %v3495
    %3678 = vmatmul.mubr.bf16.gmra.mxu0 %v3494
    %v3679 = vpop.f32.mrf.mxu0
    %v3680 = vadd.f32 %v3547, %v3679
    %v3681 = vpop.f32.mrf.mxu0
    %v3682 = vpop.f32.mrf.mxu0
    %v3683 = vadd.f32 %v3547, %v3682
    %v3684 = vpop.f32.mrf.mxu0
    %3685 = vmatprep.mubr.bf16.mxu0 %v3497
    %3686 = vmatmul.mubr.bf16.gmra.mxu0 %v3496
    %v3687 = vpop.f32.mrf.mxu0
    %v3688 = vadd.f32 %v3547, %v3687
    %v3689 = vpop.f32.mrf.mxu0
    %v3690 = vpop.f32.mrf.mxu0
    %v3691 = vadd.f32 %v3547, %v3690
    %v3692 = vpop.f32.mrf.mxu0
    %3693 = vmatprep.mubr.bf16.mxu0 %v3499
    %3694 = vmatmul.mubr.bf16.gmra.mxu0 %v3498
    %v3695 = vpop.f32.mrf.mxu0
    %v3696 = vadd.f32 %v3547, %v3695
    %v3697 = vpop.f32.mrf.mxu0
    %v3698 = vpop.f32.mrf.mxu0
    %v3699 = vadd.f32 %v3547, %v3698
    %v3700 = vpop.f32.mrf.mxu0
    %3701 = vmatprep.mubr.bf16.mxu0 %v3501
    %3702 = vmatmul.mubr.bf16.gmra.mxu0 %v3500
    %v3703 = vpop.f32.mrf.mxu0
    %v3704 = vadd.f32 %v3547, %v3703
    %v3705 = vpop.f32.mrf.mxu0
    %v3706 = vpop.f32.mrf.mxu0
    %v3707 = vadd.f32 %v3547, %v3706
    %v3708 = vpop.f32.mrf.mxu0
    %3709 = vmatprep.mubr.bf16.mxu0 %v3503
    %3710 = vmatmul.mubr.bf16.gmra.mxu0 %v3502
    %v3711 = vpop.f32.mrf.mxu0
    %v3712 = vadd.f32 %v3547, %v3711
    %v3713 = vpop.f32.mrf.mxu0
    %v3714 = vpop.f32.mrf.mxu0
    %v3715 = vadd.f32 %v3547, %v3714
    %v3716 = vpop.f32.mrf.mxu0
    %3717 = vmatprep.mubr.bf16.mxu0 %v3505
    %3718 = vmatmul.mubr.bf16.gmra.mxu0 %v3504
    %v3719 = vpop.f32.mrf.mxu0
    %v3720 = vadd.f32 %v3547, %v3719
    %v3721 = vpop.f32.mrf.mxu0
    %v3722 = vpop.f32.mrf.mxu0
    %v3723 = vadd.f32 %v3547, %v3722
    %v3724 = vpop.f32.mrf.mxu0
    %3725 = vmatprep.mubr.bf16.mxu0 %v3507
    %3726 = vmatmul.mubr.bf16.gmra.mxu0 %v3506
    %v3727 = vpop.f32.mrf.mxu0
    %v3728 = vadd.f32 %v3547, %v3727
    %v3729 = vpop.f32.mrf.mxu0
    %v3730 = vpop.f32.mrf.mxu0
    %v3731 = vadd.f32 %v3547, %v3730
    %v3732 = vpop.f32.mrf.mxu0
    %3733 = vmatprep.mubr.bf16.mxu0 %v3509
    %3734 = vmatmul.mubr.bf16.gmra.mxu0 %v3508
    %v3735 = vpop.f32.mrf.mxu0
    %v3736 = vadd.f32 %v3547, %v3735
    %v3737 = vpop.f32.mrf.mxu0
    %v3738 = vpop.f32.mrf.mxu0
    %v3739 = vadd.f32 %v3547, %v3738
    %v3740 = vpop.f32.mrf.mxu0
    %3741 = vdwg.mxu0
    %v3742 = vmax.f32 %v3680, 0.0
    %v3743 = vmax.f32 %v3683, 0.0
    %v3744 = vmax.f32 %v3688, 0.0
    %v3745 = vmax.f32 %v3691, 0.0
    %v3746 = vmax.f32 %v3696, 0.0
    %v3747 = vmax.f32 %v3699, 0.0
    %v3748 = vmax.f32 %v3704, 0.0
    %v3749 = vmax.f32 %v3707, 0.0
    %v3750 = vmax.f32 %v3712, 0.0
    %v3751 = vmax.f32 %v3715, 0.0
    %v3752 = vmax.f32 %v3720, 0.0
    %v3753 = vmax.f32 %v3723, 0.0
    %v3754 = vmax.f32 %v3728, 0.0
    %v3755 = vmax.f32 %v3731, 0.0
    %v3756 = vmax.f32 %v3736, 0.0
    %v3757 = vmax.f32 %v3739, 0.0
    %v3758 = vld [vmem:[%s7] sm:$0x1]
    %v3760 = vlaneseq
    %v3761 = vshrl.u32 %v3760, 7
    %v3762 = vsub.s32 0, %v3761
    %v3763 = vrot.slane %v3758, %v3762
    %v3765 = vmul.f32 %v3742, %v3763
    %v3766 = vmul.f32 %v3743, %v3763
    %v3767 = vmul.f32 %v3744, %v3763
    %v3768 = vmul.f32 %v3745, %v3763
    %v3769 = vmul.f32 %v3746, %v3763
    %v3770 = vmul.f32 %v3747, %v3763
    %v3771 = vmul.f32 %v3748, %v3763
    %v3772 = vmul.f32 %v3749, %v3763
    %v3773 = vmul.f32 %v3750, %v3763
    %v3774 = vmul.f32 %v3751, %v3763
    %v3775 = vmul.f32 %v3752, %v3763
    %v3776 = vmul.f32 %v3753, %v3763
    %v3777 = vmul.f32 %v3754, %v3763
    %v3778 = vmul.f32 %v3755, %v3763
    %v3779 = vmul.f32 %v3756, %v3763
    %v3780 = vmul.f32 %v3757, %v3763
    %3781 = vadd.xlane.f32.xlu0 %v3765
    %v3782 = vpop.xlane.xlu0 %3781
    %3783 = vadd.xlane.f32.xlu0 %v3766
    %v3784 = vpop.xlane.xlu0 %3783
    %3785 = vadd.xlane.f32.xlu0 %v3767
    %v3786 = vpop.xlane.xlu0 %3785
    %3787 = vadd.xlane.f32.xlu0 %v3768
    %v3788 = vpop.xlane.xlu0 %3787
    %3789 = vadd.xlane.f32.xlu0 %v3769
    %v3790 = vpop.xlane.xlu0 %3789
    %3791 = vadd.xlane.f32.xlu0 %v3770
    %v3792 = vpop.xlane.xlu0 %3791
    %3793 = vadd.xlane.f32.xlu0 %v3771
    %v3794 = vpop.xlane.xlu0 %3793
    %3795 = vadd.xlane.f32.xlu0 %v3772
    %v3796 = vpop.xlane.xlu0 %3795
    %3797 = vadd.xlane.f32.xlu0 %v3773
    %v3798 = vpop.xlane.xlu0 %3797
    %3799 = vadd.xlane.f32.xlu0 %v3774
    %v3800 = vpop.xlane.xlu0 %3799
    %3801 = vadd.xlane.f32.xlu0 %v3775
    %v3802 = vpop.xlane.xlu0 %3801
    %3803 = vadd.xlane.f32.xlu0 %v3776
    %v3804 = vpop.xlane.xlu0 %3803
    %3805 = vadd.xlane.f32.xlu0 %v3777
    %v3806 = vpop.xlane.xlu0 %3805
    %3807 = vadd.xlane.f32.xlu0 %v3778
    %v3808 = vpop.xlane.xlu0 %3807
    %3809 = vadd.xlane.f32.xlu0 %v3779
    %v3810 = vpop.xlane.xlu0 %3809
    %3811 = vadd.xlane.f32.xlu0 %v3780
    %v3812 = vpop.xlane.xlu0 %3811
    %v3813 = vld [vmem:[#allocation2] sm:$0x1]
    %v3815 = vlaneseq
    %v3816 = vshrl.u32 %v3815, 7
    %v3817 = vsub.s32 0, %v3816
    %v3818 = vrot.slane %v3813, %v3817
    %v3820 = vadd.f32 %v3782, %v3818
    %v3821 = vadd.f32 %v3784, %v3818
    %v3822 = vadd.f32 %v3786, %v3818
    %v3823 = vadd.f32 %v3788, %v3818
    %v3824 = vadd.f32 %v3790, %v3818
    %v3825 = vadd.f32 %v3792, %v3818
    %v3826 = vadd.f32 %v3794, %v3818
    %v3827 = vadd.f32 %v3796, %v3818
    %v3828 = vadd.f32 %v3798, %v3818
    %v3829 = vadd.f32 %v3800, %v3818
    %v3830 = vadd.f32 %v3802, %v3818
    %v3831 = vadd.f32 %v3804, %v3818
    %v3832 = vadd.f32 %v3806, %v3818
    %v3833 = vadd.f32 %v3808, %v3818
    %v3834 = vadd.f32 %v3810, %v3818
    %v3835 = vadd.f32 %v3812, %v3818
    %v3836 = vxor.u32 %v3820, 2147483648
    %v3837 = vxor.u32 %v3821, 2147483648
    %v3838 = vxor.u32 %v3822, 2147483648
    %v3839 = vxor.u32 %v3823, 2147483648
    %v3840 = vxor.u32 %v3824, 2147483648
    %v3841 = vxor.u32 %v3825, 2147483648
    %v3842 = vxor.u32 %v3826, 2147483648
    %v3843 = vxor.u32 %v3827, 2147483648
    %v3844 = vxor.u32 %v3828, 2147483648
    %v3845 = vxor.u32 %v3829, 2147483648
    %v3846 = vxor.u32 %v3830, 2147483648
    %v3847 = vxor.u32 %v3831, 2147483648
    %v3848 = vxor.u32 %v3832, 2147483648
    %v3849 = vxor.u32 %v3833, 2147483648
    %v3850 = vxor.u32 %v3834, 2147483648
    %v3851 = vxor.u32 %v3835, 2147483648
    %v3852 = vmul.f32 %v3836, 1.442695
    %v3853 = vpow.pop %v3852
    %v3854 = vmul.f32 %v3837, 1.442695
    %v3855 = vpow.pop %v3854
    %v3856 = vmul.f32 %v3838, 1.442695
    %v3857 = vpow.pop %v3856
    %v3858 = vmul.f32 %v3839, 1.442695
    %v3859 = vpow.pop %v3858
    %v3860 = vmul.f32 %v3840, 1.442695
    %v3861 = vpow.pop %v3860
    %v3862 = vmul.f32 %v3841, 1.442695
    %v3863 = vpow.pop %v3862
    %v3864 = vmul.f32 %v3842, 1.442695
    %v3865 = vpow.pop %v3864
    %v3866 = vmul.f32 %v3843, 1.442695
    %v3867 = vpow.pop %v3866
    %v3868 = vmul.f32 %v3844, 1.442695
    %v3869 = vpow.pop %v3868
    %v3870 = vmul.f32 %v3845, 1.442695
    %v3871 = vpow.pop %v3870
    %v3872 = vmul.f32 %v3846, 1.442695
    %v3873 = vpow.pop %v3872
    %v3874 = vmul.f32 %v3847, 1.442695
    %v3875 = vpow.pop %v3874
    %v3876 = vmul.f32 %v3848, 1.442695
    %v3877 = vpow.pop %v3876
    %v3878 = vmul.f32 %v3849, 1.442695
    %v3879 = vpow.pop %v3878
    %v3880 = vmul.f32 %v3850, 1.442695
    %v3881 = vpow.pop %v3880
    %v3882 = vmul.f32 %v3851, 1.442695
    %v3883 = vpow.pop %v3882
    %v3884 = vadd.f32 %v3853, 1.0
    %v3885 = vadd.f32 %v3855, 1.0
    %v3886 = vadd.f32 %v3857, 1.0
    %v3887 = vadd.f32 %v3859, 1.0
    %v3888 = vadd.f32 %v3861, 1.0
    %v3889 = vadd.f32 %v3863, 1.0
    %v3890 = vadd.f32 %v3865, 1.0
    %v3891 = vadd.f32 %v3867, 1.0
    %v3892 = vadd.f32 %v3869, 1.0
    %v3893 = vadd.f32 %v3871, 1.0
    %v3894 = vadd.f32 %v3873, 1.0
    %v3895 = vadd.f32 %v3875, 1.0
    %v3896 = vadd.f32 %v3877, 1.0
    %v3897 = vadd.f32 %v3879, 1.0
    %v3898 = vadd.f32 %v3881, 1.0
    %v3899 = vadd.f32 %v3883, 1.0
    %v3900 = vrcp.pop %v3884
    %v3901 = vmul.f32 1.0, %v3900
    %v3902 = vrcp.pop %v3885
    %v3903 = vmul.f32 1.0, %v3902
    %v3904 = vrcp.pop %v3886
    %v3905 = vmul.f32 1.0, %v3904
    %v3906 = vrcp.pop %v3887
    %v3907 = vmul.f32 1.0, %v3906
    %v3908 = vrcp.pop %v3888
    %v3909 = vmul.f32 1.0, %v3908
    %v3910 = vrcp.pop %v3889
    %v3911 = vmul.f32 1.0, %v3910
    %v3912 = vrcp.pop %v3890
    %v3913 = vmul.f32 1.0, %v3912
    %v3914 = vrcp.pop %v3891
    %v3915 = vmul.f32 1.0, %v3914
    %v3916 = vrcp.pop %v3892
    %v3917 = vmul.f32 1.0, %v3916
    %v3918 = vrcp.pop %v3893
    %v3919 = vmul.f32 1.0, %v3918
    %v3920 = vrcp.pop %v3894
    %v3921 = vmul.f32 1.0, %v3920
    %v3922 = vrcp.pop %v3895
    %v3923 = vmul.f32 1.0, %v3922
    %v3924 = vrcp.pop %v3896
    %v3925 = vmul.f32 1.0, %v3924
    %v3926 = vrcp.pop %v3897
    %v3927 = vmul.f32 1.0, %v3926
    %v3928 = vrcp.pop %v3898
    %v3929 = vmul.f32 1.0, %v3928
    %v3930 = vrcp.pop %v3899
    %v3931 = vmul.f32 1.0, %v3930
    %vm3932 = vcmask 7168
    %3933 = vst.msk [vmem:[%s9] sm:$0xff] %vm3932, %v3901
    %3934 = vst.msk [vmem:[%s9 + $0x8] sm:$0xff] %vm3932, %v3903
    %3935 = vst.msk [vmem:[%s9 + $0x10] sm:$0xff] %vm3932, %v3905
    %3936 = vst.msk [vmem:[%s9 + $0x18] sm:$0xff] %vm3932, %v3907
    %3937 = vst.msk [vmem:[%s9 + $0x20] sm:$0xff] %vm3932, %v3909
    %3938 = vst.msk [vmem:[%s9 + $0x28] sm:$0xff] %vm3932, %v3911
    %3939 = vst.msk [vmem:[%s9 + $0x30] sm:$0xff] %vm3932, %v3913
    %3940 = vst.msk [vmem:[%s9 + $0x38] sm:$0xff] %vm3932, %v3915
    %3941 = vst.msk [vmem:[%s9 + $0x40] sm:$0xff] %vm3932, %v3917
    %3942 = vst.msk [vmem:[%s9 + $0x48] sm:$0xff] %vm3932, %v3919
    %3943 = vst.msk [vmem:[%s9 + $0x50] sm:$0xff] %vm3932, %v3921
    %3944 = vst.msk [vmem:[%s9 + $0x58] sm:$0xff] %vm3932, %v3923
    %3945 = vst.msk [vmem:[%s9 + $0x60] sm:$0xff] %vm3932, %v3925
    %3946 = vst.msk [vmem:[%s9 + $0x68] sm:$0xff] %vm3932, %v3927
    %3947 = vst.msk [vmem:[%s9 + $0x70] sm:$0xff] %vm3932, %v3929
    %3948 = vst.msk [vmem:[%s9 + $0x78] sm:$0xff] %vm3932, %v3931
    // Predicated region
    $region54: #{tpu_custom_call.1} parent=1 // pred_check
      _
    $region55: #{tpu_custom_call.1} parent=1 // pred_check_branch
      %3950 = sbr.rel (0) target = $region57
    $region56: #{tpu_custom_call.1} parent=1 // pred_region
      _
    $region57: #{tpu_custom_call.1} parent=1 // pred_fallthru
      _
    // Predicated region
    $region58: #{tpu_custom_call.1} parent=1 // pred_check
      _
    $region59: #{tpu_custom_call.1} parent=1 // pred_check_branch
      %3952 = sbr.rel (0) target = $region61
    $region60: #{tpu_custom_call.1} parent=1 // pred_region
      _
    $region61: #{tpu_custom_call.1} parent=1 // pred_fallthru
      _
    %3953 = vsyncpa [#allocation4], 1
    %3954 = vsyncpa [#allocation6], 1
    %3955 = vsyncpa [#allocation9], 1

</llo_original>
